<compile_context>
chip_gen: v6e
topology: v6e:2x2x1
jax: 0.10.0
libtpu: 0.0.40
codegen_flags: <defaults>
</compile_context>

<pallas_src>
import math

import jax
import jax.numpy as jnp
from jax.experimental import pallas as pl
from jax.experimental.pallas import tpu as pltpu

INPUT_SIZE = 3
HIDDEN = 64
NUM_LAYERS = 3
SEQ = 8
BATCH = 2


def rnn_kernel(x_ref, wih0_ref, wih12_ref, whh_ref, b_ref, wout_ref, bout_ref,
               out_ref):
    """Shapes (all float32):
      x_ref:     (T, B, INPUT_SIZE)  time-major raw input (unpadded)
      wih0_ref:  (INPUT_SIZE, H)     layer-0 input weight, (in, out)
      wih12_ref: (L-1, H, H)         layer-1/2 input weights, (in, out)
      whh_ref:   (L, H, H)           recurrent weights, (in, out)
      b_ref:     (L, 1, H)           combined biases (b_ih + b_hh)
      wout_ref:  (1, H)              final linear weight row
      bout_ref:  (1, 1)              final linear bias
      out_ref:   (B, 1)
    """
    T, B, _ = x_ref.shape
    H = whh_ref.shape[-1]

    # Layer-0 input projection for all timesteps: 3 VPU broadcast-FMAs
    # (pure VPU, off the MXU entirely, computed once before the recurrence).
    x = x_ref[...]                                  # (T, B, 3)
    w0 = wih0_ref[...]                              # (3, H)
    xproj = (x[:, :, 0:1] * w0[0:1, :]
             + x[:, :, 1:2] * w0[1:2, :]
             + x[:, :, 2:3] * w0[2:3, :]
             + b_ref[0])                            # (T, B, H)

    h0 = jnp.zeros((B, H), jnp.float32)
    h1 = jnp.zeros((B, H), jnp.float32)
    h2 = jnp.zeros((B, H), jnp.float32)

    # Wavefront-scheduled, fully unrolled recurrence.  Weights are loaded from
    # the refs at each use (not hoisted into values) to keep vreg pressure low.
    for s in range(T + NUM_LAYERS - 1):
        h0_prev, h1_prev, h2_prev = h0, h1, h2

        if s < T:                                   # layer 0, time t = s
            pre0 = xproj[s]
            if s > 0:                               # h0[t=-1] == 0
                pre0 = pre0 + jnp.dot(h0_prev, whh_ref[0],
                                      preferred_element_type=jnp.float32)
            h0 = jnp.maximum(pre0, 0.0)

        if 1 <= s <= T:                             # layer 1, time t = s-1
            pre1 = jnp.dot(h0_prev, wih12_ref[0],
                           preferred_element_type=jnp.float32) + b_ref[1]
            if s > 1:                               # h1[t=-1] == 0
                pre1 = pre1 + jnp.dot(h1_prev, whh_ref[1],
                                      preferred_element_type=jnp.float32)
            h1 = jnp.maximum(pre1, 0.0)

        if 2 <= s <= T + 1:                         # layer 2, time t = s-2
            pre2 = jnp.dot(h1_prev, wih12_ref[1],
                           preferred_element_type=jnp.float32) + b_ref[2]
            if s > 2:                               # h2[t=-1] == 0
                pre2 = pre2 + jnp.dot(h2_prev, whh_ref[2],
                                      preferred_element_type=jnp.float32)
            h2 = jnp.maximum(pre2, 0.0)

    # Final Linear(64 -> 1) on the last-timestep hidden of the top layer.
    out_ref[...] = (jnp.sum(h2 * wout_ref[...], axis=-1, keepdims=True)
                    + bout_ref[...])


def rnn_forward(x, params):
    """x: (B, T, INPUT_SIZE) float32 -> (B, 1) float32."""
    wih0_T, wih12, whh, b, wout, bout = params
    B, T, _ = x.shape
    # Only wrapper transform: go time-major. No padding / reshape / HBM
    # round-trip of a padded buffer.
    x_tm = jnp.transpose(x, (1, 0, 2))              # (T, B, 3)

    return pl.pallas_call(
        rnn_kernel,
        out_shape=jax.ShapeDtypeStruct((B, 1), jnp.float32),
        grid=(1,),
        in_specs=[
            pl.BlockSpec((T, B, INPUT_SIZE), lambda i: (0, 0, 0)),
            pl.BlockSpec((INPUT_SIZE, HIDDEN), lambda i: (0, 0)),
            pl.BlockSpec((NUM_LAYERS - 1, HIDDEN, HIDDEN), lambda i: (0, 0, 0)),
            pl.BlockSpec((NUM_LAYERS, HIDDEN, HIDDEN), lambda i: (0, 0, 0)),
            pl.BlockSpec((NUM_LAYERS, 1, HIDDEN), lambda i: (0, 0, 0)),
            pl.BlockSpec((1, HIDDEN), lambda i: (0, 0)),
            pl.BlockSpec((1, 1), lambda i: (0, 0)),
        ],
        out_specs=pl.BlockSpec((B, 1), lambda i: (0, 0)),
        compiler_params=pltpu.CompilerParams(
            dimension_semantics=("arbitrary",)),
    )(x_tm, wih0_T, wih12, whh, b, wout, bout)


def init_params(key):
    """PyTorch-style U(-1/sqrt(H), 1/sqrt(H)) init, packed for the kernel."""
    kscale = 1.0 / math.sqrt(HIDDEN)
    keys = jax.random.split(key, 4 * NUM_LAYERS + 2)
    idx = 0
    wih_T, whh_T, bias = [], [], []
    for l in range(NUM_LAYERS):
        in_dim = INPUT_SIZE if l == 0 else HIDDEN
        w_ih = jax.random.uniform(keys[idx], (HIDDEN, in_dim), jnp.float32,
                                  -kscale, kscale); idx += 1
        w_hh = jax.random.uniform(keys[idx], (HIDDEN, HIDDEN), jnp.float32,
                                  -kscale, kscale); idx += 1
        b_ih = jax.random.uniform(keys[idx], (HIDDEN,), jnp.float32,
                                  -kscale, kscale); idx += 1
        b_hh = jax.random.uniform(keys[idx], (HIDDEN,), jnp.float32,
                                  -kscale, kscale); idx += 1
        wih_T.append(w_ih.T)                  # (in_dim, H)
        whh_T.append(w_hh.T)                  # (H, H)
        bias.append((b_ih + b_hh)[None, :])   # (1, H) combined
    w_out = jax.random.uniform(keys[idx], (1, HIDDEN), jnp.float32,
                               -kscale, kscale); idx += 1
    b_out = jax.random.uniform(keys[idx], (1,), jnp.float32, -kscale, kscale)

    wih0_T = wih_T[0]                         # (3, H)
    wih12 = jnp.stack(wih_T[1:])              # (L-1, H, H)
    whh = jnp.stack(whh_T)                    # (L, H, H)
    b = jnp.stack(bias)                       # (L, 1, H)
    return (wih0_T, wih12, whh, b, w_out, b_out.reshape(1, 1))


def rnn_ref(x, params):
    """Pure-JAX reference: straightforward layer-by-layer recurrence."""
    wih0_T, wih12, whh, b, wout, bout = params
    B, T, _ = x.shape
    h = [jnp.zeros((B, HIDDEN), jnp.float32) for _ in range(NUM_LAYERS)]
    for t in range(T):
        h[0] = jax.nn.relu(x[:, t, :] @ wih0_T + h[0] @ whh[0] + b[0])
        for l in range(1, NUM_LAYERS):
            h[l] = jax.nn.relu(h[l - 1] @ wih12[l - 1] + h[l] @ whh[l] + b[l])
    return jnp.sum(h[-1] * wout, axis=-1, keepdims=True) + bout


if __name__ == "__main__":
    key = jax.random.PRNGKey(0)
    pkey, xkey = jax.random.split(key)
    params = init_params(pkey)
    x = jax.random.normal(xkey, (BATCH, SEQ, INPUT_SIZE), jnp.float32)

    out = jax.jit(rnn_forward)(x, params)
    jax.block_until_ready(out)

    ref = rnn_ref(x, params)
    assert out.shape == (BATCH, 1), out.shape
    # Default TPU matmul precision (bf16-based) is used in both the kernel and
    # the reference; tolerance sized for that (see review correctness note).
    assert jnp.allclose(out, ref, atol=5e-3, rtol=5e-3), (out, ref)
    print("KERNEL_OK")
</pallas_src>

<mosaic_0001>
module attributes {stable_mosaic.version = 11 : i64} {
  func.func @rnn_kernel(%arg0: i32, %arg1: memref<8x2x3xf32, #tpu.memory_space<vmem>>, %arg2: memref<3x64xf32, #tpu.memory_space<vmem>>, %arg3: memref<2x64x64xf32, #tpu.memory_space<vmem>>, %arg4: memref<3x64x64xf32, #tpu.memory_space<vmem>>, %arg5: memref<3x1x64xf32, #tpu.memory_space<vmem>>, %arg6: memref<1x64xf32, #tpu.memory_space<vmem>>, %arg7: memref<1x1xf32, #tpu.memory_space<vmem>>, %arg8: memref<2x1xf32, #tpu.memory_space<vmem>>) attributes {dimension_semantics = [#tpu.dimension_semantics<arbitrary>], iteration_bounds = array<i64: 1>, scalar_prefetch = 0 : i64, scratch_operands = 0 : i64, tpu.core_type = #tpu.core_type<tc>, window_params = [{pipeline_mode = #tpu.pipeline_mode<synchronous>, transform_indices = @transform_0, window_bounds = array<i64: 8, 2, 3>}, {pipeline_mode = #tpu.pipeline_mode<synchronous>, transform_indices = @transform_1, window_bounds = array<i64: 3, 64>}, {pipeline_mode = #tpu.pipeline_mode<synchronous>, transform_indices = @transform_2, window_bounds = array<i64: 2, 64, 64>}, {pipeline_mode = #tpu.pipeline_mode<synchronous>, transform_indices = @transform_3, window_bounds = array<i64: 3, 64, 64>}, {pipeline_mode = #tpu.pipeline_mode<synchronous>, transform_indices = @transform_4, window_bounds = array<i64: 3, 1, 64>}, {pipeline_mode = #tpu.pipeline_mode<synchronous>, transform_indices = @transform_5, window_bounds = array<i64: 1, 64>}, {pipeline_mode = #tpu.pipeline_mode<synchronous>, transform_indices = @transform_6, window_bounds = array<i64: 1, 1>}, {pipeline_mode = #tpu.pipeline_mode<synchronous>, transform_indices = @transform_7, window_bounds = array<i64: 2, 1>}]} {
    %c0 = arith.constant 0 : index
    %c0_0 = arith.constant 0 : index
    %c0_1 = arith.constant 0 : index
    %0 = vector.load %arg1[%c0, %c0_0, %c0_1] : memref<8x2x3xf32, #tpu.memory_space<vmem>>, vector<8x2x3xf32>
    %c0_2 = arith.constant 0 : index
    %c0_3 = arith.constant 0 : index
    %1 = vector.load %arg2[%c0_2, %c0_3] : memref<3x64xf32, #tpu.memory_space<vmem>>, vector<3x64xf32>
    %2 = vector.extract_strided_slice %0 {offsets = [0, 0, 0], sizes = [8, 2, 1], strides = [1, 1, 1]} : vector<8x2x3xf32> to vector<8x2x1xf32>
    %3 = vector.extract_strided_slice %1 {offsets = [0, 0], sizes = [1, 64], strides = [1, 1]} : vector<3x64xf32> to vector<1x64xf32>
    %4 = vector.shape_cast %3 : vector<1x64xf32> to vector<1x1x64xf32>
    %5 = vector.broadcast %2 : vector<8x2x1xf32> to vector<8x2x64xf32>
    %6 = vector.broadcast %4 : vector<1x1x64xf32> to vector<8x2x64xf32>
    %7 = arith.mulf %5, %6 : vector<8x2x64xf32>
    %8 = vector.extract_strided_slice %0 {offsets = [0, 0, 1], sizes = [8, 2, 1], strides = [1, 1, 1]} : vector<8x2x3xf32> to vector<8x2x1xf32>
    %9 = vector.extract_strided_slice %1 {offsets = [1, 0], sizes = [1, 64], strides = [1, 1]} : vector<3x64xf32> to vector<1x64xf32>
    %10 = vector.shape_cast %9 : vector<1x64xf32> to vector<1x1x64xf32>
    %11 = vector.broadcast %8 : vector<8x2x1xf32> to vector<8x2x64xf32>
    %12 = vector.broadcast %10 : vector<1x1x64xf32> to vector<8x2x64xf32>
    %13 = arith.mulf %11, %12 : vector<8x2x64xf32>
    %14 = arith.addf %7, %13 : vector<8x2x64xf32>
    %15 = vector.extract_strided_slice %0 {offsets = [0, 0, 2], sizes = [8, 2, 1], strides = [1, 1, 1]} : vector<8x2x3xf32> to vector<8x2x1xf32>
    %16 = vector.extract_strided_slice %1 {offsets = [2, 0], sizes = [1, 64], strides = [1, 1]} : vector<3x64xf32> to vector<1x64xf32>
    %17 = vector.shape_cast %16 : vector<1x64xf32> to vector<1x1x64xf32>
    %18 = vector.broadcast %15 : vector<8x2x1xf32> to vector<8x2x64xf32>
    %19 = vector.broadcast %17 : vector<1x1x64xf32> to vector<8x2x64xf32>
    %20 = arith.mulf %18, %19 : vector<8x2x64xf32>
    %21 = arith.addf %14, %20 : vector<8x2x64xf32>
    %c0_4 = arith.constant 0 : index
    %c0_5 = arith.constant 0 : index
    %c0_6 = arith.constant 0 : index
    %22 = vector.load %arg5[%c0_4, %c0_5, %c0_6] : memref<3x1x64xf32, #tpu.memory_space<vmem>>, vector<1x1x64xf32>
    %23 = vector.shape_cast %22 : vector<1x1x64xf32> to vector<1x64xf32>
    %24 = vector.shape_cast %23 : vector<1x64xf32> to vector<1x1x64xf32>
    %25 = vector.broadcast %24 : vector<1x1x64xf32> to vector<8x2x64xf32>
    %26 = arith.addf %21, %25 : vector<8x2x64xf32>
    %27 = vector.extract_strided_slice %26 {offsets = [0, 0, 0], sizes = [1, 2, 64], strides = [1, 1, 1]} : vector<8x2x64xf32> to vector<1x2x64xf32>
    %28 = vector.shape_cast %27 : vector<1x2x64xf32> to vector<2x64xf32>
    %cst = arith.constant 0.000000e+00 : f32
    %29 = vector.broadcast %cst : f32 to vector<2x64xf32>
    %30 = arith.maximumf %28, %29 : vector<2x64xf32>
    %31 = vector.extract_strided_slice %26 {offsets = [1, 0, 0], sizes = [1, 2, 64], strides = [1, 1, 1]} : vector<8x2x64xf32> to vector<1x2x64xf32>
    %32 = vector.shape_cast %31 : vector<1x2x64xf32> to vector<2x64xf32>
    %c0_7 = arith.constant 0 : index
    %c0_8 = arith.constant 0 : index
    %c0_9 = arith.constant 0 : index
    %33 = vector.load %arg4[%c0_7, %c0_8, %c0_9] : memref<3x64x64xf32, #tpu.memory_space<vmem>>, vector<1x64x64xf32>
    %34 = vector.shape_cast %33 : vector<1x64x64xf32> to vector<64x64xf32>
    %cst_10 = arith.constant dense<0.000000e+00> : vector<2x64xf32>
    %35 = tpu.matmul %30, %34, %cst_10 {dimension_numbers = #tpu.dot_dimension_numbers<[1], [0], [0], [1], [0, 0, 1, 1], [], []>} : vector<2x64xf32>, vector<64x64xf32>, vector<2x64xf32> -> vector<2x64xf32>
    %36 = arith.addf %32, %35 : vector<2x64xf32>
    %cst_11 = arith.constant 0.000000e+00 : f32
    %37 = vector.broadcast %cst_11 : f32 to vector<2x64xf32>
    %38 = arith.maximumf %36, %37 : vector<2x64xf32>
    %c0_12 = arith.constant 0 : index
    %c0_13 = arith.constant 0 : index
    %c0_14 = arith.constant 0 : index
    %39 = vector.load %arg3[%c0_12, %c0_13, %c0_14] : memref<2x64x64xf32, #tpu.memory_space<vmem>>, vector<1x64x64xf32>
    %40 = vector.shape_cast %39 : vector<1x64x64xf32> to vector<64x64xf32>
    %cst_15 = arith.constant dense<0.000000e+00> : vector<2x64xf32>
    %41 = tpu.matmul %30, %40, %cst_15 {dimension_numbers = #tpu.dot_dimension_numbers<[1], [0], [0], [1], [0, 0, 1, 1], [], []>} : vector<2x64xf32>, vector<64x64xf32>, vector<2x64xf32> -> vector<2x64xf32>
    %c1 = arith.constant 1 : index
    %c0_16 = arith.constant 0 : index
    %c0_17 = arith.constant 0 : index
    %42 = vector.load %arg5[%c1, %c0_16, %c0_17] : memref<3x1x64xf32, #tpu.memory_space<vmem>>, vector<1x1x64xf32>
    %43 = vector.shape_cast %42 : vector<1x1x64xf32> to vector<1x64xf32>
    %44 = vector.broadcast %43 : vector<1x64xf32> to vector<2x64xf32>
    %45 = arith.addf %41, %44 : vector<2x64xf32>
    %cst_18 = arith.constant 0.000000e+00 : f32
    %46 = vector.broadcast %cst_18 : f32 to vector<2x64xf32>
    %47 = arith.maximumf %45, %46 : vector<2x64xf32>
    %48 = vector.extract_strided_slice %26 {offsets = [2, 0, 0], sizes = [1, 2, 64], strides = [1, 1, 1]} : vector<8x2x64xf32> to vector<1x2x64xf32>
    %49 = vector.shape_cast %48 : vector<1x2x64xf32> to vector<2x64xf32>
    %c0_19 = arith.constant 0 : index
    %c0_20 = arith.constant 0 : index
    %c0_21 = arith.constant 0 : index
    %50 = vector.load %arg4[%c0_19, %c0_20, %c0_21] : memref<3x64x64xf32, #tpu.memory_space<vmem>>, vector<1x64x64xf32>
    %51 = vector.shape_cast %50 : vector<1x64x64xf32> to vector<64x64xf32>
    %cst_22 = arith.constant dense<0.000000e+00> : vector<2x64xf32>
    %52 = tpu.matmul %38, %51, %cst_22 {dimension_numbers = #tpu.dot_dimension_numbers<[1], [0], [0], [1], [0, 0, 1, 1], [], []>} : vector<2x64xf32>, vector<64x64xf32>, vector<2x64xf32> -> vector<2x64xf32>
    %53 = arith.addf %49, %52 : vector<2x64xf32>
    %cst_23 = arith.constant 0.000000e+00 : f32
    %54 = vector.broadcast %cst_23 : f32 to vector<2x64xf32>
    %55 = arith.maximumf %53, %54 : vector<2x64xf32>
    %c0_24 = arith.constant 0 : index
    %c0_25 = arith.constant 0 : index
    %c0_26 = arith.constant 0 : index
    %56 = vector.load %arg3[%c0_24, %c0_25, %c0_26] : memref<2x64x64xf32, #tpu.memory_space<vmem>>, vector<1x64x64xf32>
    %57 = vector.shape_cast %56 : vector<1x64x64xf32> to vector<64x64xf32>
    %cst_27 = arith.constant dense<0.000000e+00> : vector<2x64xf32>
    %58 = tpu.matmul %38, %57, %cst_27 {dimension_numbers = #tpu.dot_dimension_numbers<[1], [0], [0], [1], [0, 0, 1, 1], [], []>} : vector<2x64xf32>, vector<64x64xf32>, vector<2x64xf32> -> vector<2x64xf32>
    %c1_28 = arith.constant 1 : index
    %c0_29 = arith.constant 0 : index
    %c0_30 = arith.constant 0 : index
    %59 = vector.load %arg5[%c1_28, %c0_29, %c0_30] : memref<3x1x64xf32, #tpu.memory_space<vmem>>, vector<1x1x64xf32>
    %60 = vector.shape_cast %59 : vector<1x1x64xf32> to vector<1x64xf32>
    %61 = vector.broadcast %60 : vector<1x64xf32> to vector<2x64xf32>
    %62 = arith.addf %58, %61 : vector<2x64xf32>
    %c1_31 = arith.constant 1 : index
    %c0_32 = arith.constant 0 : index
    %c0_33 = arith.constant 0 : index
    %63 = vector.load %arg4[%c1_31, %c0_32, %c0_33] : memref<3x64x64xf32, #tpu.memory_space<vmem>>, vector<1x64x64xf32>
    %64 = vector.shape_cast %63 : vector<1x64x64xf32> to vector<64x64xf32>
    %cst_34 = arith.constant dense<0.000000e+00> : vector<2x64xf32>
    %65 = tpu.matmul %47, %64, %cst_34 {dimension_numbers = #tpu.dot_dimension_numbers<[1], [0], [0], [1], [0, 0, 1, 1], [], []>} : vector<2x64xf32>, vector<64x64xf32>, vector<2x64xf32> -> vector<2x64xf32>
    %66 = arith.addf %62, %65 : vector<2x64xf32>
    %cst_35 = arith.constant 0.000000e+00 : f32
    %67 = vector.broadcast %cst_35 : f32 to vector<2x64xf32>
    %68 = arith.maximumf %66, %67 : vector<2x64xf32>
    %c1_36 = arith.constant 1 : index
    %c0_37 = arith.constant 0 : index
    %c0_38 = arith.constant 0 : index
    %69 = vector.load %arg3[%c1_36, %c0_37, %c0_38] : memref<2x64x64xf32, #tpu.memory_space<vmem>>, vector<1x64x64xf32>
    %70 = vector.shape_cast %69 : vector<1x64x64xf32> to vector<64x64xf32>
    %cst_39 = arith.constant dense<0.000000e+00> : vector<2x64xf32>
    %71 = tpu.matmul %47, %70, %cst_39 {dimension_numbers = #tpu.dot_dimension_numbers<[1], [0], [0], [1], [0, 0, 1, 1], [], []>} : vector<2x64xf32>, vector<64x64xf32>, vector<2x64xf32> -> vector<2x64xf32>
    %c2 = arith.constant 2 : index
    %c0_40 = arith.constant 0 : index
    %c0_41 = arith.constant 0 : index
    %72 = vector.load %arg5[%c2, %c0_40, %c0_41] : memref<3x1x64xf32, #tpu.memory_space<vmem>>, vector<1x1x64xf32>
    %73 = vector.shape_cast %72 : vector<1x1x64xf32> to vector<1x64xf32>
    %74 = vector.broadcast %73 : vector<1x64xf32> to vector<2x64xf32>
    %75 = arith.addf %71, %74 : vector<2x64xf32>
    %cst_42 = arith.constant 0.000000e+00 : f32
    %76 = vector.broadcast %cst_42 : f32 to vector<2x64xf32>
    %77 = arith.maximumf %75, %76 : vector<2x64xf32>
    %78 = vector.extract_strided_slice %26 {offsets = [3, 0, 0], sizes = [1, 2, 64], strides = [1, 1, 1]} : vector<8x2x64xf32> to vector<1x2x64xf32>
    %79 = vector.shape_cast %78 : vector<1x2x64xf32> to vector<2x64xf32>
    %c0_43 = arith.constant 0 : index
    %c0_44 = arith.constant 0 : index
    %c0_45 = arith.constant 0 : index
    %80 = vector.load %arg4[%c0_43, %c0_44, %c0_45] : memref<3x64x64xf32, #tpu.memory_space<vmem>>, vector<1x64x64xf32>
    %81 = vector.shape_cast %80 : vector<1x64x64xf32> to vector<64x64xf32>
    %cst_46 = arith.constant dense<0.000000e+00> : vector<2x64xf32>
    %82 = tpu.matmul %55, %81, %cst_46 {dimension_numbers = #tpu.dot_dimension_numbers<[1], [0], [0], [1], [0, 0, 1, 1], [], []>} : vector<2x64xf32>, vector<64x64xf32>, vector<2x64xf32> -> vector<2x64xf32>
    %83 = arith.addf %79, %82 : vector<2x64xf32>
    %cst_47 = arith.constant 0.000000e+00 : f32
    %84 = vector.broadcast %cst_47 : f32 to vector<2x64xf32>
    %85 = arith.maximumf %83, %84 : vector<2x64xf32>
    %c0_48 = arith.constant 0 : index
    %c0_49 = arith.constant 0 : index
    %c0_50 = arith.constant 0 : index
    %86 = vector.load %arg3[%c0_48, %c0_49, %c0_50] : memref<2x64x64xf32, #tpu.memory_space<vmem>>, vector<1x64x64xf32>
    %87 = vector.shape_cast %86 : vector<1x64x64xf32> to vector<64x64xf32>
    %cst_51 = arith.constant dense<0.000000e+00> : vector<2x64xf32>
    %88 = tpu.matmul %55, %87, %cst_51 {dimension_numbers = #tpu.dot_dimension_numbers<[1], [0], [0], [1], [0, 0, 1, 1], [], []>} : vector<2x64xf32>, vector<64x64xf32>, vector<2x64xf32> -> vector<2x64xf32>
    %c1_52 = arith.constant 1 : index
    %c0_53 = arith.constant 0 : index
    %c0_54 = arith.constant 0 : index
    %89 = vector.load %arg5[%c1_52, %c0_53, %c0_54] : memref<3x1x64xf32, #tpu.memory_space<vmem>>, vector<1x1x64xf32>
    %90 = vector.shape_cast %89 : vector<1x1x64xf32> to vector<1x64xf32>
    %91 = vector.broadcast %90 : vector<1x64xf32> to vector<2x64xf32>
    %92 = arith.addf %88, %91 : vector<2x64xf32>
    %c1_55 = arith.constant 1 : index
    %c0_56 = arith.constant 0 : index
    %c0_57 = arith.constant 0 : index
    %93 = vector.load %arg4[%c1_55, %c0_56, %c0_57] : memref<3x64x64xf32, #tpu.memory_space<vmem>>, vector<1x64x64xf32>
    %94 = vector.shape_cast %93 : vector<1x64x64xf32> to vector<64x64xf32>
    %cst_58 = arith.constant dense<0.000000e+00> : vector<2x64xf32>
    %95 = tpu.matmul %68, %94, %cst_58 {dimension_numbers = #tpu.dot_dimension_numbers<[1], [0], [0], [1], [0, 0, 1, 1], [], []>} : vector<2x64xf32>, vector<64x64xf32>, vector<2x64xf32> -> vector<2x64xf32>
    %96 = arith.addf %92, %95 : vector<2x64xf32>
    %cst_59 = arith.constant 0.000000e+00 : f32
    %97 = vector.broadcast %cst_59 : f32 to vector<2x64xf32>
    %98 = arith.maximumf %96, %97 : vector<2x64xf32>
    %c1_60 = arith.constant 1 : index
    %c0_61 = arith.constant 0 : index
    %c0_62 = arith.constant 0 : index
    %99 = vector.load %arg3[%c1_60, %c0_61, %c0_62] : memref<2x64x64xf32, #tpu.memory_space<vmem>>, vector<1x64x64xf32>
    %100 = vector.shape_cast %99 : vector<1x64x64xf32> to vector<64x64xf32>
    %cst_63 = arith.constant dense<0.000000e+00> : vector<2x64xf32>
    %101 = tpu.matmul %68, %100, %cst_63 {dimension_numbers = #tpu.dot_dimension_numbers<[1], [0], [0], [1], [0, 0, 1, 1], [], []>} : vector<2x64xf32>, vector<64x64xf32>, vector<2x64xf32> -> vector<2x64xf32>
    %c2_64 = arith.constant 2 : index
    %c0_65 = arith.constant 0 : index
    %c0_66 = arith.constant 0 : index
    %102 = vector.load %arg5[%c2_64, %c0_65, %c0_66] : memref<3x1x64xf32, #tpu.memory_space<vmem>>, vector<1x1x64xf32>
    %103 = vector.shape_cast %102 : vector<1x1x64xf32> to vector<1x64xf32>
    %104 = vector.broadcast %103 : vector<1x64xf32> to vector<2x64xf32>
    %105 = arith.addf %101, %104 : vector<2x64xf32>
    %c2_67 = arith.constant 2 : index
    %c0_68 = arith.constant 0 : index
    %c0_69 = arith.constant 0 : index
    %106 = vector.load %arg4[%c2_67, %c0_68, %c0_69] : memref<3x64x64xf32, #tpu.memory_space<vmem>>, vector<1x64x64xf32>
    %107 = vector.shape_cast %106 : vector<1x64x64xf32> to vector<64x64xf32>
    %cst_70 = arith.constant dense<0.000000e+00> : vector<2x64xf32>
    %108 = tpu.matmul %77, %107, %cst_70 {dimension_numbers = #tpu.dot_dimension_numbers<[1], [0], [0], [1], [0, 0, 1, 1], [], []>} : vector<2x64xf32>, vector<64x64xf32>, vector<2x64xf32> -> vector<2x64xf32>
    %109 = arith.addf %105, %108 : vector<2x64xf32>
    %cst_71 = arith.constant 0.000000e+00 : f32
    %110 = vector.broadcast %cst_71 : f32 to vector<2x64xf32>
    %111 = arith.maximumf %109, %110 : vector<2x64xf32>
    %112 = vector.extract_strided_slice %26 {offsets = [4, 0, 0], sizes = [1, 2, 64], strides = [1, 1, 1]} : vector<8x2x64xf32> to vector<1x2x64xf32>
    %113 = vector.shape_cast %112 : vector<1x2x64xf32> to vector<2x64xf32>
    %c0_72 = arith.constant 0 : index
    %c0_73 = arith.constant 0 : index
    %c0_74 = arith.constant 0 : index
    %114 = vector.load %arg4[%c0_72, %c0_73, %c0_74] : memref<3x64x64xf32, #tpu.memory_space<vmem>>, vector<1x64x64xf32>
    %115 = vector.shape_cast %114 : vector<1x64x64xf32> to vector<64x64xf32>
    %cst_75 = arith.constant dense<0.000000e+00> : vector<2x64xf32>
    %116 = tpu.matmul %85, %115, %cst_75 {dimension_numbers = #tpu.dot_dimension_numbers<[1], [0], [0], [1], [0, 0, 1, 1], [], []>} : vector<2x64xf32>, vector<64x64xf32>, vector<2x64xf32> -> vector<2x64xf32>
    %117 = arith.addf %113, %116 : vector<2x64xf32>
    %cst_76 = arith.constant 0.000000e+00 : f32
    %118 = vector.broadcast %cst_76 : f32 to vector<2x64xf32>
    %119 = arith.maximumf %117, %118 : vector<2x64xf32>
    %c0_77 = arith.constant 0 : index
    %c0_78 = arith.constant 0 : index
    %c0_79 = arith.constant 0 : index
    %120 = vector.load %arg3[%c0_77, %c0_78, %c0_79] : memref<2x64x64xf32, #tpu.memory_space<vmem>>, vector<1x64x64xf32>
    %121 = vector.shape_cast %120 : vector<1x64x64xf32> to vector<64x64xf32>
    %cst_80 = arith.constant dense<0.000000e+00> : vector<2x64xf32>
    %122 = tpu.matmul %85, %121, %cst_80 {dimension_numbers = #tpu.dot_dimension_numbers<[1], [0], [0], [1], [0, 0, 1, 1], [], []>} : vector<2x64xf32>, vector<64x64xf32>, vector<2x64xf32> -> vector<2x64xf32>
    %c1_81 = arith.constant 1 : index
    %c0_82 = arith.constant 0 : index
    %c0_83 = arith.constant 0 : index
    %123 = vector.load %arg5[%c1_81, %c0_82, %c0_83] : memref<3x1x64xf32, #tpu.memory_space<vmem>>, vector<1x1x64xf32>
    %124 = vector.shape_cast %123 : vector<1x1x64xf32> to vector<1x64xf32>
    %125 = vector.broadcast %124 : vector<1x64xf32> to vector<2x64xf32>
    %126 = arith.addf %122, %125 : vector<2x64xf32>
    %c1_84 = arith.constant 1 : index
    %c0_85 = arith.constant 0 : index
    %c0_86 = arith.constant 0 : index
    %127 = vector.load %arg4[%c1_84, %c0_85, %c0_86] : memref<3x64x64xf32, #tpu.memory_space<vmem>>, vector<1x64x64xf32>
    %128 = vector.shape_cast %127 : vector<1x64x64xf32> to vector<64x64xf32>
    %cst_87 = arith.constant dense<0.000000e+00> : vector<2x64xf32>
    %129 = tpu.matmul %98, %128, %cst_87 {dimension_numbers = #tpu.dot_dimension_numbers<[1], [0], [0], [1], [0, 0, 1, 1], [], []>} : vector<2x64xf32>, vector<64x64xf32>, vector<2x64xf32> -> vector<2x64xf32>
    %130 = arith.addf %126, %129 : vector<2x64xf32>
    %cst_88 = arith.constant 0.000000e+00 : f32
    %131 = vector.broadcast %cst_88 : f32 to vector<2x64xf32>
    %132 = arith.maximumf %130, %131 : vector<2x64xf32>
    %c1_89 = arith.constant 1 : index
    %c0_90 = arith.constant 0 : index
    %c0_91 = arith.constant 0 : index
    %133 = vector.load %arg3[%c1_89, %c0_90, %c0_91] : memref<2x64x64xf32, #tpu.memory_space<vmem>>, vector<1x64x64xf32>
    %134 = vector.shape_cast %133 : vector<1x64x64xf32> to vector<64x64xf32>
    %cst_92 = arith.constant dense<0.000000e+00> : vector<2x64xf32>
    %135 = tpu.matmul %98, %134, %cst_92 {dimension_numbers = #tpu.dot_dimension_numbers<[1], [0], [0], [1], [0, 0, 1, 1], [], []>} : vector<2x64xf32>, vector<64x64xf32>, vector<2x64xf32> -> vector<2x64xf32>
    %c2_93 = arith.constant 2 : index
    %c0_94 = arith.constant 0 : index
    %c0_95 = arith.constant 0 : index
    %136 = vector.load %arg5[%c2_93, %c0_94, %c0_95] : memref<3x1x64xf32, #tpu.memory_space<vmem>>, vector<1x1x64xf32>
    %137 = vector.shape_cast %136 : vector<1x1x64xf32> to vector<1x64xf32>
    %138 = vector.broadcast %137 : vector<1x64xf32> to vector<2x64xf32>
    %139 = arith.addf %135, %138 : vector<2x64xf32>
    %c2_96 = arith.constant 2 : index
    %c0_97 = arith.constant 0 : index
    %c0_98 = arith.constant 0 : index
    %140 = vector.load %arg4[%c2_96, %c0_97, %c0_98] : memref<3x64x64xf32, #tpu.memory_space<vmem>>, vector<1x64x64xf32>
    %141 = vector.shape_cast %140 : vector<1x64x64xf32> to vector<64x64xf32>
    %cst_99 = arith.constant dense<0.000000e+00> : vector<2x64xf32>
    %142 = tpu.matmul %111, %141, %cst_99 {dimension_numbers = #tpu.dot_dimension_numbers<[1], [0], [0], [1], [0, 0, 1, 1], [], []>} : vector<2x64xf32>, vector<64x64xf32>, vector<2x64xf32> -> vector<2x64xf32>
    %143 = arith.addf %139, %142 : vector<2x64xf32>
    %cst_100 = arith.constant 0.000000e+00 : f32
    %144 = vector.broadcast %cst_100 : f32 to vector<2x64xf32>
    %145 = arith.maximumf %143, %144 : vector<2x64xf32>
    %146 = vector.extract_strided_slice %26 {offsets = [5, 0, 0], sizes = [1, 2, 64], strides = [1, 1, 1]} : vector<8x2x64xf32> to vector<1x2x64xf32>
    %147 = vector.shape_cast %146 : vector<1x2x64xf32> to vector<2x64xf32>
    %c0_101 = arith.constant 0 : index
    %c0_102 = arith.constant 0 : index
    %c0_103 = arith.constant 0 : index
    %148 = vector.load %arg4[%c0_101, %c0_102, %c0_103] : memref<3x64x64xf32, #tpu.memory_space<vmem>>, vector<1x64x64xf32>
    %149 = vector.shape_cast %148 : vector<1x64x64xf32> to vector<64x64xf32>
    %cst_104 = arith.constant dense<0.000000e+00> : vector<2x64xf32>
    %150 = tpu.matmul %119, %149, %cst_104 {dimension_numbers = #tpu.dot_dimension_numbers<[1], [0], [0], [1], [0, 0, 1, 1], [], []>} : vector<2x64xf32>, vector<64x64xf32>, vector<2x64xf32> -> vector<2x64xf32>
    %151 = arith.addf %147, %150 : vector<2x64xf32>
    %cst_105 = arith.constant 0.000000e+00 : f32
    %152 = vector.broadcast %cst_105 : f32 to vector<2x64xf32>
    %153 = arith.maximumf %151, %152 : vector<2x64xf32>
    %c0_106 = arith.constant 0 : index
    %c0_107 = arith.constant 0 : index
    %c0_108 = arith.constant 0 : index
    %154 = vector.load %arg3[%c0_106, %c0_107, %c0_108] : memref<2x64x64xf32, #tpu.memory_space<vmem>>, vector<1x64x64xf32>
    %155 = vector.shape_cast %154 : vector<1x64x64xf32> to vector<64x64xf32>
    %cst_109 = arith.constant dense<0.000000e+00> : vector<2x64xf32>
    %156 = tpu.matmul %119, %155, %cst_109 {dimension_numbers = #tpu.dot_dimension_numbers<[1], [0], [0], [1], [0, 0, 1, 1], [], []>} : vector<2x64xf32>, vector<64x64xf32>, vector<2x64xf32> -> vector<2x64xf32>
    %c1_110 = arith.constant 1 : index
    %c0_111 = arith.constant 0 : index
    %c0_112 = arith.constant 0 : index
    %157 = vector.load %arg5[%c1_110, %c0_111, %c0_112] : memref<3x1x64xf32, #tpu.memory_space<vmem>>, vector<1x1x64xf32>
    %158 = vector.shape_cast %157 : vector<1x1x64xf32> to vector<1x64xf32>
    %159 = vector.broadcast %158 : vector<1x64xf32> to vector<2x64xf32>
    %160 = arith.addf %156, %159 : vector<2x64xf32>
    %c1_113 = arith.constant 1 : index
    %c0_114 = arith.constant 0 : index
    %c0_115 = arith.constant 0 : index
    %161 = vector.load %arg4[%c1_113, %c0_114, %c0_115] : memref<3x64x64xf32, #tpu.memory_space<vmem>>, vector<1x64x64xf32>
    %162 = vector.shape_cast %161 : vector<1x64x64xf32> to vector<64x64xf32>
    %cst_116 = arith.constant dense<0.000000e+00> : vector<2x64xf32>
    %163 = tpu.matmul %132, %162, %cst_116 {dimension_numbers = #tpu.dot_dimension_numbers<[1], [0], [0], [1], [0, 0, 1, 1], [], []>} : vector<2x64xf32>, vector<64x64xf32>, vector<2x64xf32> -> vector<2x64xf32>
    %164 = arith.addf %160, %163 : vector<2x64xf32>
    %cst_117 = arith.constant 0.000000e+00 : f32
    %165 = vector.broadcast %cst_117 : f32 to vector<2x64xf32>
    %166 = arith.maximumf %164, %165 : vector<2x64xf32>
    %c1_118 = arith.constant 1 : index
    %c0_119 = arith.constant 0 : index
    %c0_120 = arith.constant 0 : index
    %167 = vector.load %arg3[%c1_118, %c0_119, %c0_120] : memref<2x64x64xf32, #tpu.memory_space<vmem>>, vector<1x64x64xf32>
    %168 = vector.shape_cast %167 : vector<1x64x64xf32> to vector<64x64xf32>
    %cst_121 = arith.constant dense<0.000000e+00> : vector<2x64xf32>
    %169 = tpu.matmul %132, %168, %cst_121 {dimension_numbers = #tpu.dot_dimension_numbers<[1], [0], [0], [1], [0, 0, 1, 1], [], []>} : vector<2x64xf32>, vector<64x64xf32>, vector<2x64xf32> -> vector<2x64xf32>
    %c2_122 = arith.constant 2 : index
    %c0_123 = arith.constant 0 : index
    %c0_124 = arith.constant 0 : index
    %170 = vector.load %arg5[%c2_122, %c0_123, %c0_124] : memref<3x1x64xf32, #tpu.memory_space<vmem>>, vector<1x1x64xf32>
    %171 = vector.shape_cast %170 : vector<1x1x64xf32> to vector<1x64xf32>
    %172 = vector.broadcast %171 : vector<1x64xf32> to vector<2x64xf32>
    %173 = arith.addf %169, %172 : vector<2x64xf32>
    %c2_125 = arith.constant 2 : index
    %c0_126 = arith.constant 0 : index
    %c0_127 = arith.constant 0 : index
    %174 = vector.load %arg4[%c2_125, %c0_126, %c0_127] : memref<3x64x64xf32, #tpu.memory_space<vmem>>, vector<1x64x64xf32>
    %175 = vector.shape_cast %174 : vector<1x64x64xf32> to vector<64x64xf32>
    %cst_128 = arith.constant dense<0.000000e+00> : vector<2x64xf32>
    %176 = tpu.matmul %145, %175, %cst_128 {dimension_numbers = #tpu.dot_dimension_numbers<[1], [0], [0], [1], [0, 0, 1, 1], [], []>} : vector<2x64xf32>, vector<64x64xf32>, vector<2x64xf32> -> vector<2x64xf32>
    %177 = arith.addf %173, %176 : vector<2x64xf32>
    %cst_129 = arith.constant 0.000000e+00 : f32
    %178 = vector.broadcast %cst_129 : f32 to vector<2x64xf32>
    %179 = arith.maximumf %177, %178 : vector<2x64xf32>
    %180 = vector.extract_strided_slice %26 {offsets = [6, 0, 0], sizes = [1, 2, 64], strides = [1, 1, 1]} : vector<8x2x64xf32> to vector<1x2x64xf32>
    %181 = vector.shape_cast %180 : vector<1x2x64xf32> to vector<2x64xf32>
    %c0_130 = arith.constant 0 : index
    %c0_131 = arith.constant 0 : index
    %c0_132 = arith.constant 0 : index
    %182 = vector.load %arg4[%c0_130, %c0_131, %c0_132] : memref<3x64x64xf32, #tpu.memory_space<vmem>>, vector<1x64x64xf32>
    %183 = vector.shape_cast %182 : vector<1x64x64xf32> to vector<64x64xf32>
    %cst_133 = arith.constant dense<0.000000e+00> : vector<2x64xf32>
    %184 = tpu.matmul %153, %183, %cst_133 {dimension_numbers = #tpu.dot_dimension_numbers<[1], [0], [0], [1], [0, 0, 1, 1], [], []>} : vector<2x64xf32>, vector<64x64xf32>, vector<2x64xf32> -> vector<2x64xf32>
    %185 = arith.addf %181, %184 : vector<2x64xf32>
    %cst_134 = arith.constant 0.000000e+00 : f32
    %186 = vector.broadcast %cst_134 : f32 to vector<2x64xf32>
    %187 = arith.maximumf %185, %186 : vector<2x64xf32>
    %c0_135 = arith.constant 0 : index
    %c0_136 = arith.constant 0 : index
    %c0_137 = arith.constant 0 : index
    %188 = vector.load %arg3[%c0_135, %c0_136, %c0_137] : memref<2x64x64xf32, #tpu.memory_space<vmem>>, vector<1x64x64xf32>
    %189 = vector.shape_cast %188 : vector<1x64x64xf32> to vector<64x64xf32>
    %cst_138 = arith.constant dense<0.000000e+00> : vector<2x64xf32>
    %190 = tpu.matmul %153, %189, %cst_138 {dimension_numbers = #tpu.dot_dimension_numbers<[1], [0], [0], [1], [0, 0, 1, 1], [], []>} : vector<2x64xf32>, vector<64x64xf32>, vector<2x64xf32> -> vector<2x64xf32>
    %c1_139 = arith.constant 1 : index
    %c0_140 = arith.constant 0 : index
    %c0_141 = arith.constant 0 : index
    %191 = vector.load %arg5[%c1_139, %c0_140, %c0_141] : memref<3x1x64xf32, #tpu.memory_space<vmem>>, vector<1x1x64xf32>
    %192 = vector.shape_cast %191 : vector<1x1x64xf32> to vector<1x64xf32>
    %193 = vector.broadcast %192 : vector<1x64xf32> to vector<2x64xf32>
    %194 = arith.addf %190, %193 : vector<2x64xf32>
    %c1_142 = arith.constant 1 : index
    %c0_143 = arith.constant 0 : index
    %c0_144 = arith.constant 0 : index
    %195 = vector.load %arg4[%c1_142, %c0_143, %c0_144] : memref<3x64x64xf32, #tpu.memory_space<vmem>>, vector<1x64x64xf32>
    %196 = vector.shape_cast %195 : vector<1x64x64xf32> to vector<64x64xf32>
    %cst_145 = arith.constant dense<0.000000e+00> : vector<2x64xf32>
    %197 = tpu.matmul %166, %196, %cst_145 {dimension_numbers = #tpu.dot_dimension_numbers<[1], [0], [0], [1], [0, 0, 1, 1], [], []>} : vector<2x64xf32>, vector<64x64xf32>, vector<2x64xf32> -> vector<2x64xf32>
    %198 = arith.addf %194, %197 : vector<2x64xf32>
    %cst_146 = arith.constant 0.000000e+00 : f32
    %199 = vector.broadcast %cst_146 : f32 to vector<2x64xf32>
    %200 = arith.maximumf %198, %199 : vector<2x64xf32>
    %c1_147 = arith.constant 1 : index
    %c0_148 = arith.constant 0 : index
    %c0_149 = arith.constant 0 : index
    %201 = vector.load %arg3[%c1_147, %c0_148, %c0_149] : memref<2x64x64xf32, #tpu.memory_space<vmem>>, vector<1x64x64xf32>
    %202 = vector.shape_cast %201 : vector<1x64x64xf32> to vector<64x64xf32>
    %cst_150 = arith.constant dense<0.000000e+00> : vector<2x64xf32>
    %203 = tpu.matmul %166, %202, %cst_150 {dimension_numbers = #tpu.dot_dimension_numbers<[1], [0], [0], [1], [0, 0, 1, 1], [], []>} : vector<2x64xf32>, vector<64x64xf32>, vector<2x64xf32> -> vector<2x64xf32>
    %c2_151 = arith.constant 2 : index
    %c0_152 = arith.constant 0 : index
    %c0_153 = arith.constant 0 : index
    %204 = vector.load %arg5[%c2_151, %c0_152, %c0_153] : memref<3x1x64xf32, #tpu.memory_space<vmem>>, vector<1x1x64xf32>
    %205 = vector.shape_cast %204 : vector<1x1x64xf32> to vector<1x64xf32>
    %206 = vector.broadcast %205 : vector<1x64xf32> to vector<2x64xf32>
    %207 = arith.addf %203, %206 : vector<2x64xf32>
    %c2_154 = arith.constant 2 : index
    %c0_155 = arith.constant 0 : index
    %c0_156 = arith.constant 0 : index
    %208 = vector.load %arg4[%c2_154, %c0_155, %c0_156] : memref<3x64x64xf32, #tpu.memory_space<vmem>>, vector<1x64x64xf32>
    %209 = vector.shape_cast %208 : vector<1x64x64xf32> to vector<64x64xf32>
    %cst_157 = arith.constant dense<0.000000e+00> : vector<2x64xf32>
    %210 = tpu.matmul %179, %209, %cst_157 {dimension_numbers = #tpu.dot_dimension_numbers<[1], [0], [0], [1], [0, 0, 1, 1], [], []>} : vector<2x64xf32>, vector<64x64xf32>, vector<2x64xf32> -> vector<2x64xf32>
    %211 = arith.addf %207, %210 : vector<2x64xf32>
    %cst_158 = arith.constant 0.000000e+00 : f32
    %212 = vector.broadcast %cst_158 : f32 to vector<2x64xf32>
    %213 = arith.maximumf %211, %212 : vector<2x64xf32>
    %214 = vector.extract_strided_slice %26 {offsets = [7, 0, 0], sizes = [1, 2, 64], strides = [1, 1, 1]} : vector<8x2x64xf32> to vector<1x2x64xf32>
    %215 = vector.shape_cast %214 : vector<1x2x64xf32> to vector<2x64xf32>
    %c0_159 = arith.constant 0 : index
    %c0_160 = arith.constant 0 : index
    %c0_161 = arith.constant 0 : index
    %216 = vector.load %arg4[%c0_159, %c0_160, %c0_161] : memref<3x64x64xf32, #tpu.memory_space<vmem>>, vector<1x64x64xf32>
    %217 = vector.shape_cast %216 : vector<1x64x64xf32> to vector<64x64xf32>
    %cst_162 = arith.constant dense<0.000000e+00> : vector<2x64xf32>
    %218 = tpu.matmul %187, %217, %cst_162 {dimension_numbers = #tpu.dot_dimension_numbers<[1], [0], [0], [1], [0, 0, 1, 1], [], []>} : vector<2x64xf32>, vector<64x64xf32>, vector<2x64xf32> -> vector<2x64xf32>
    %219 = arith.addf %215, %218 : vector<2x64xf32>
    %cst_163 = arith.constant 0.000000e+00 : f32
    %220 = vector.broadcast %cst_163 : f32 to vector<2x64xf32>
    %221 = arith.maximumf %219, %220 : vector<2x64xf32>
    %c0_164 = arith.constant 0 : index
    %c0_165 = arith.constant 0 : index
    %c0_166 = arith.constant 0 : index
    %222 = vector.load %arg3[%c0_164, %c0_165, %c0_166] : memref<2x64x64xf32, #tpu.memory_space<vmem>>, vector<1x64x64xf32>
    %223 = vector.shape_cast %222 : vector<1x64x64xf32> to vector<64x64xf32>
    %cst_167 = arith.constant dense<0.000000e+00> : vector<2x64xf32>
    %224 = tpu.matmul %187, %223, %cst_167 {dimension_numbers = #tpu.dot_dimension_numbers<[1], [0], [0], [1], [0, 0, 1, 1], [], []>} : vector<2x64xf32>, vector<64x64xf32>, vector<2x64xf32> -> vector<2x64xf32>
    %c1_168 = arith.constant 1 : index
    %c0_169 = arith.constant 0 : index
    %c0_170 = arith.constant 0 : index
    %225 = vector.load %arg5[%c1_168, %c0_169, %c0_170] : memref<3x1x64xf32, #tpu.memory_space<vmem>>, vector<1x1x64xf32>
    %226 = vector.shape_cast %225 : vector<1x1x64xf32> to vector<1x64xf32>
    %227 = vector.broadcast %226 : vector<1x64xf32> to vector<2x64xf32>
    %228 = arith.addf %224, %227 : vector<2x64xf32>
    %c1_171 = arith.constant 1 : index
    %c0_172 = arith.constant 0 : index
    %c0_173 = arith.constant 0 : index
    %229 = vector.load %arg4[%c1_171, %c0_172, %c0_173] : memref<3x64x64xf32, #tpu.memory_space<vmem>>, vector<1x64x64xf32>
    %230 = vector.shape_cast %229 : vector<1x64x64xf32> to vector<64x64xf32>
    %cst_174 = arith.constant dense<0.000000e+00> : vector<2x64xf32>
    %231 = tpu.matmul %200, %230, %cst_174 {dimension_numbers = #tpu.dot_dimension_numbers<[1], [0], [0], [1], [0, 0, 1, 1], [], []>} : vector<2x64xf32>, vector<64x64xf32>, vector<2x64xf32> -> vector<2x64xf32>
    %232 = arith.addf %228, %231 : vector<2x64xf32>
    %cst_175 = arith.constant 0.000000e+00 : f32
    %233 = vector.broadcast %cst_175 : f32 to vector<2x64xf32>
    %234 = arith.maximumf %232, %233 : vector<2x64xf32>
    %c1_176 = arith.constant 1 : index
    %c0_177 = arith.constant 0 : index
    %c0_178 = arith.constant 0 : index
    %235 = vector.load %arg3[%c1_176, %c0_177, %c0_178] : memref<2x64x64xf32, #tpu.memory_space<vmem>>, vector<1x64x64xf32>
    %236 = vector.shape_cast %235 : vector<1x64x64xf32> to vector<64x64xf32>
    %cst_179 = arith.constant dense<0.000000e+00> : vector<2x64xf32>
    %237 = tpu.matmul %200, %236, %cst_179 {dimension_numbers = #tpu.dot_dimension_numbers<[1], [0], [0], [1], [0, 0, 1, 1], [], []>} : vector<2x64xf32>, vector<64x64xf32>, vector<2x64xf32> -> vector<2x64xf32>
    %c2_180 = arith.constant 2 : index
    %c0_181 = arith.constant 0 : index
    %c0_182 = arith.constant 0 : index
    %238 = vector.load %arg5[%c2_180, %c0_181, %c0_182] : memref<3x1x64xf32, #tpu.memory_space<vmem>>, vector<1x1x64xf32>
    %239 = vector.shape_cast %238 : vector<1x1x64xf32> to vector<1x64xf32>
    %240 = vector.broadcast %239 : vector<1x64xf32> to vector<2x64xf32>
    %241 = arith.addf %237, %240 : vector<2x64xf32>
    %c2_183 = arith.constant 2 : index
    %c0_184 = arith.constant 0 : index
    %c0_185 = arith.constant 0 : index
    %242 = vector.load %arg4[%c2_183, %c0_184, %c0_185] : memref<3x64x64xf32, #tpu.memory_space<vmem>>, vector<1x64x64xf32>
    %243 = vector.shape_cast %242 : vector<1x64x64xf32> to vector<64x64xf32>
    %cst_186 = arith.constant dense<0.000000e+00> : vector<2x64xf32>
    %244 = tpu.matmul %213, %243, %cst_186 {dimension_numbers = #tpu.dot_dimension_numbers<[1], [0], [0], [1], [0, 0, 1, 1], [], []>} : vector<2x64xf32>, vector<64x64xf32>, vector<2x64xf32> -> vector<2x64xf32>
    %245 = arith.addf %241, %244 : vector<2x64xf32>
    %cst_187 = arith.constant 0.000000e+00 : f32
    %246 = vector.broadcast %cst_187 : f32 to vector<2x64xf32>
    %247 = arith.maximumf %245, %246 : vector<2x64xf32>
    %c0_188 = arith.constant 0 : index
    %c0_189 = arith.constant 0 : index
    %c0_190 = arith.constant 0 : index
    %248 = vector.load %arg3[%c0_188, %c0_189, %c0_190] : memref<2x64x64xf32, #tpu.memory_space<vmem>>, vector<1x64x64xf32>
    %249 = vector.shape_cast %248 : vector<1x64x64xf32> to vector<64x64xf32>
    %cst_191 = arith.constant dense<0.000000e+00> : vector<2x64xf32>
    %250 = tpu.matmul %221, %249, %cst_191 {dimension_numbers = #tpu.dot_dimension_numbers<[1], [0], [0], [1], [0, 0, 1, 1], [], []>} : vector<2x64xf32>, vector<64x64xf32>, vector<2x64xf32> -> vector<2x64xf32>
    %c1_192 = arith.constant 1 : index
    %c0_193 = arith.constant 0 : index
    %c0_194 = arith.constant 0 : index
    %251 = vector.load %arg5[%c1_192, %c0_193, %c0_194] : memref<3x1x64xf32, #tpu.memory_space<vmem>>, vector<1x1x64xf32>
    %252 = vector.shape_cast %251 : vector<1x1x64xf32> to vector<1x64xf32>
    %253 = vector.broadcast %252 : vector<1x64xf32> to vector<2x64xf32>
    %254 = arith.addf %250, %253 : vector<2x64xf32>
    %c1_195 = arith.constant 1 : index
    %c0_196 = arith.constant 0 : index
    %c0_197 = arith.constant 0 : index
    %255 = vector.load %arg4[%c1_195, %c0_196, %c0_197] : memref<3x64x64xf32, #tpu.memory_space<vmem>>, vector<1x64x64xf32>
    %256 = vector.shape_cast %255 : vector<1x64x64xf32> to vector<64x64xf32>
    %cst_198 = arith.constant dense<0.000000e+00> : vector<2x64xf32>
    %257 = tpu.matmul %234, %256, %cst_198 {dimension_numbers = #tpu.dot_dimension_numbers<[1], [0], [0], [1], [0, 0, 1, 1], [], []>} : vector<2x64xf32>, vector<64x64xf32>, vector<2x64xf32> -> vector<2x64xf32>
    %258 = arith.addf %254, %257 : vector<2x64xf32>
    %cst_199 = arith.constant 0.000000e+00 : f32
    %259 = vector.broadcast %cst_199 : f32 to vector<2x64xf32>
    %260 = arith.maximumf %258, %259 : vector<2x64xf32>
    %c1_200 = arith.constant 1 : index
    %c0_201 = arith.constant 0 : index
    %c0_202 = arith.constant 0 : index
    %261 = vector.load %arg3[%c1_200, %c0_201, %c0_202] : memref<2x64x64xf32, #tpu.memory_space<vmem>>, vector<1x64x64xf32>
    %262 = vector.shape_cast %261 : vector<1x64x64xf32> to vector<64x64xf32>
    %cst_203 = arith.constant dense<0.000000e+00> : vector<2x64xf32>
    %263 = tpu.matmul %234, %262, %cst_203 {dimension_numbers = #tpu.dot_dimension_numbers<[1], [0], [0], [1], [0, 0, 1, 1], [], []>} : vector<2x64xf32>, vector<64x64xf32>, vector<2x64xf32> -> vector<2x64xf32>
    %c2_204 = arith.constant 2 : index
    %c0_205 = arith.constant 0 : index
    %c0_206 = arith.constant 0 : index
    %264 = vector.load %arg5[%c2_204, %c0_205, %c0_206] : memref<3x1x64xf32, #tpu.memory_space<vmem>>, vector<1x1x64xf32>
    %265 = vector.shape_cast %264 : vector<1x1x64xf32> to vector<1x64xf32>
    %266 = vector.broadcast %265 : vector<1x64xf32> to vector<2x64xf32>
    %267 = arith.addf %263, %266 : vector<2x64xf32>
    %c2_207 = arith.constant 2 : index
    %c0_208 = arith.constant 0 : index
    %c0_209 = arith.constant 0 : index
    %268 = vector.load %arg4[%c2_207, %c0_208, %c0_209] : memref<3x64x64xf32, #tpu.memory_space<vmem>>, vector<1x64x64xf32>
    %269 = vector.shape_cast %268 : vector<1x64x64xf32> to vector<64x64xf32>
    %cst_210 = arith.constant dense<0.000000e+00> : vector<2x64xf32>
    %270 = tpu.matmul %247, %269, %cst_210 {dimension_numbers = #tpu.dot_dimension_numbers<[1], [0], [0], [1], [0, 0, 1, 1], [], []>} : vector<2x64xf32>, vector<64x64xf32>, vector<2x64xf32> -> vector<2x64xf32>
    %271 = arith.addf %267, %270 : vector<2x64xf32>
    %cst_211 = arith.constant 0.000000e+00 : f32
    %272 = vector.broadcast %cst_211 : f32 to vector<2x64xf32>
    %273 = arith.maximumf %271, %272 : vector<2x64xf32>
    %c1_212 = arith.constant 1 : index
    %c0_213 = arith.constant 0 : index
    %c0_214 = arith.constant 0 : index
    %274 = vector.load %arg3[%c1_212, %c0_213, %c0_214] : memref<2x64x64xf32, #tpu.memory_space<vmem>>, vector<1x64x64xf32>
    %275 = vector.shape_cast %274 : vector<1x64x64xf32> to vector<64x64xf32>
    %cst_215 = arith.constant dense<0.000000e+00> : vector<2x64xf32>
    %276 = tpu.matmul %260, %275, %cst_215 {dimension_numbers = #tpu.dot_dimension_numbers<[1], [0], [0], [1], [0, 0, 1, 1], [], []>} : vector<2x64xf32>, vector<64x64xf32>, vector<2x64xf32> -> vector<2x64xf32>
    %c2_216 = arith.constant 2 : index
    %c0_217 = arith.constant 0 : index
    %c0_218 = arith.constant 0 : index
    %277 = vector.load %arg5[%c2_216, %c0_217, %c0_218] : memref<3x1x64xf32, #tpu.memory_space<vmem>>, vector<1x1x64xf32>
    %278 = vector.shape_cast %277 : vector<1x1x64xf32> to vector<1x64xf32>
    %279 = vector.broadcast %278 : vector<1x64xf32> to vector<2x64xf32>
    %280 = arith.addf %276, %279 : vector<2x64xf32>
    %c2_219 = arith.constant 2 : index
    %c0_220 = arith.constant 0 : index
    %c0_221 = arith.constant 0 : index
    %281 = vector.load %arg4[%c2_219, %c0_220, %c0_221] : memref<3x64x64xf32, #tpu.memory_space<vmem>>, vector<1x64x64xf32>
    %282 = vector.shape_cast %281 : vector<1x64x64xf32> to vector<64x64xf32>
    %cst_222 = arith.constant dense<0.000000e+00> : vector<2x64xf32>
    %283 = tpu.matmul %273, %282, %cst_222 {dimension_numbers = #tpu.dot_dimension_numbers<[1], [0], [0], [1], [0, 0, 1, 1], [], []>} : vector<2x64xf32>, vector<64x64xf32>, vector<2x64xf32> -> vector<2x64xf32>
    %284 = arith.addf %280, %283 : vector<2x64xf32>
    %cst_223 = arith.constant 0.000000e+00 : f32
    %285 = vector.broadcast %cst_223 : f32 to vector<2x64xf32>
    %286 = arith.maximumf %284, %285 : vector<2x64xf32>
    %c0_224 = arith.constant 0 : index
    %c0_225 = arith.constant 0 : index
    %287 = vector.load %arg6[%c0_224, %c0_225] : memref<1x64xf32, #tpu.memory_space<vmem>>, vector<1x64xf32>
    %288 = vector.broadcast %287 : vector<1x64xf32> to vector<2x64xf32>
    %289 = arith.mulf %286, %288 : vector<2x64xf32>
    %cst_226 = arith.constant dense<0.000000e+00> : vector<2xf32>
    %290 = vector.multi_reduction <add>, %289, %cst_226 [1] : vector<2x64xf32> to vector<2xf32>
    %291 = vector.shape_cast %290 : vector<2xf32> to vector<2x1xf32>
    %c0_227 = arith.constant 0 : index
    %c0_228 = arith.constant 0 : index
    %292 = vector.load %arg7[%c0_227, %c0_228] : memref<1x1xf32, #tpu.memory_space<vmem>>, vector<1x1xf32>
    %293 = vector.broadcast %292 : vector<1x1xf32> to vector<2x1xf32>
    %294 = arith.addf %291, %293 : vector<2x1xf32>
    %c0_229 = arith.constant 0 : index
    %c0_230 = arith.constant 0 : index
    %295 = vector.load %arg8[%c0_229, %c0_230] : memref<2x1xf32, #tpu.memory_space<vmem>>, vector<2x1xf32>
    tpu.vector_store %arg8[%c0_229, %c0_230], %294 {strides = array<i32>} : memref<2x1xf32, #tpu.memory_space<vmem>>, vector<2x1xf32>,
    return
  }
  func.func @transform_0(%arg0: i32) -> (i32, i32, i32) {
    %c0_i32 = arith.constant 0 : i32
    %c0_i32_0 = arith.constant 0 : i32
    %c0_i32_1 = arith.constant 0 : i32
    %c0_i32_2 = arith.constant 0 : i32
    return %c0_i32, %c0_i32_0, %c0_i32_1 : i32, i32, i32
  }
  func.func @transform_1(%arg0: i32) -> (i32, i32) {
    %c0_i32 = arith.constant 0 : i32
    %c0_i32_0 = arith.constant 0 : i32
    %c0_i32_1 = arith.constant 0 : i32
    return %c0_i32, %c0_i32_0 : i32, i32
  }
  func.func @transform_2(%arg0: i32) -> (i32, i32, i32) {
    %c0_i32 = arith.constant 0 : i32
    %c0_i32_0 = arith.constant 0 : i32
    %c0_i32_1 = arith.constant 0 : i32
    %c0_i32_2 = arith.constant 0 : i32
    return %c0_i32, %c0_i32_0, %c0_i32_1 : i32, i32, i32
  }
  func.func @transform_3(%arg0: i32) -> (i32, i32, i32) {
    %c0_i32 = arith.constant 0 : i32
    %c0_i32_0 = arith.constant 0 : i32
    %c0_i32_1 = arith.constant 0 : i32
    %c0_i32_2 = arith.constant 0 : i32
    return %c0_i32, %c0_i32_0, %c0_i32_1 : i32, i32, i32
  }
  func.func @transform_4(%arg0: i32) -> (i32, i32, i32) {
    %c0_i32 = arith.constant 0 : i32
    %c0_i32_0 = arith.constant 0 : i32
    %c0_i32_1 = arith.constant 0 : i32
    %c0_i32_2 = arith.constant 0 : i32
    return %c0_i32, %c0_i32_0, %c0_i32_1 : i32, i32, i32
  }
  func.func @transform_5(%arg0: i32) -> (i32, i32) {
    %c0_i32 = arith.constant 0 : i32
    %c0_i32_0 = arith.constant 0 : i32
    %c0_i32_1 = arith.constant 0 : i32
    return %c0_i32, %c0_i32_0 : i32, i32
  }
  func.func @transform_6(%arg0: i32) -> (i32, i32) {
    %c0_i32 = arith.constant 0 : i32
    %c0_i32_0 = arith.constant 0 : i32
    %c0_i32_1 = arith.constant 0 : i32
    return %c0_i32, %c0_i32_0 : i32, i32
  }
  func.func @transform_7(%arg0: i32) -> (i32, i32) {
    %c0_i32 = arith.constant 0 : i32
    %c0_i32_0 = arith.constant 0 : i32
    %c0_i32_1 = arith.constant 0 : i32
    return %c0_i32, %c0_i32_0 : i32, i32
  }
}

</mosaic_0001>

<llo_original>
// kernel: rnn_forward.1
$region0: #{rnn_forward.1}
  #allocation0 [shape = 'u32[]', space=smem, size = 0x4, offset = 0x4, fixed_abs, tag = 'smem constant byte address 0x4 - core index']
  #allocation1 [shape = 'u32[144,128]{1,0:T(1,128)}', space=vmem, size = 0x12000, scoped, tag = 'internal scratch']
  #allocation2 [shape = 'f32[1,1]{1,0:T(1,128)S(1)}', space=vmem, size = 0x200, scoped, tag = 'scoped memory for rnn_forward.1']
  %s0 = inlined_call_operand.vmem [shape: f32[8,2,3], index: 0, kind: input, shape index: {}]
  %s1 = inlined_call_operand.vmem [shape: f32[3,64], index: 1, kind: input, shape index: {}]
  %s2 = inlined_call_operand.hbm [shape: f32[2,64,64], index: 2, kind: input, shape index: {}]
  %s3 = inlined_call_operand.hbm [shape: f32[3,64,64], index: 3, kind: input, shape index: {}]
  %s4 = inlined_call_operand.vmem [shape: f32[3,1,64], index: 4, kind: input, shape index: {}]
  %s5 = inlined_call_operand.vmem [shape: f32[1,64], index: 5, kind: input, shape index: {}]
  %s6 = inlined_call_operand.<no memory space> [shape: f32[1,1], index: 6, kind: input, shape index: {}]
  %s7 = inlined_call_operand.vmem [shape: f32[2,1], index: 7, kind: output, shape index: {}]
  %s8 = sld [smem:[#allocation0]]
  $region46: #{rnn_forward.1} parent=0
    _
  %s10 = ssub.s32 1, %s8
  %s11 = scalar_select 0, %s10, %s8
  %v12 = vstv %s6
  %13 = vst [vmem:[#allocation2] sm:$0x1] %v12
  $region1: #{rnn_forward.1} parent=0
    #allocation3 [shape = 'u8[65536]{0}', space=vmem, size = 0x10000, scoped, tag = 'input window, operand 2, single buffered']
    #allocation4 [shape = 's32[1]{0}', space=sflag, size = 0x4, scoped, tag = 'scoped memory for rnn_forward.1']
    #allocation5 [shape = 'u8[98304]{0}', space=vmem, size = 0x18000, scoped, tag = 'input window, operand 3, single buffered']
    #allocation6 [shape = 's32[1]{0}', space=sflag, size = 0x4, scoped, tag = 'scoped memory for rnn_forward.1']
    %14 = vsyncpa [#allocation4], 0
    %15 = vsyncpa [#allocation6], 0
    // Predicated region
    $region2: #{rnn_forward.1} parent=1 // pred_check
      _
    $region3: #{rnn_forward.1} parent=1 // pred_check_branch
      %17 = sbr.rel (0) target = $region5
    $region4: #{rnn_forward.1} parent=1 // pred_region
      _
    $region5: #{rnn_forward.1} parent=1 // pred_fallthru
      _
    // Predicated region
    $region6: #{rnn_forward.1} parent=1 // pred_check
      _
    $region7: #{rnn_forward.1} parent=1 // pred_check_branch
      %19 = sbr.rel (0) target = $region9
    $region8: #{rnn_forward.1} parent=1 // pred_region
      _
    $region9: #{rnn_forward.1} parent=1 // pred_fallthru
      _
    // Predicated region
    $region10: #{rnn_forward.1} parent=1 // pred_check
      _
    $region11: #{rnn_forward.1} parent=1 // pred_check_branch
      %21 = sbr.rel (0) target = $region13
    $region12: #{rnn_forward.1} parent=1 // pred_region
      %s23 = ssub.s32 2048, 2048
      %24 = vsyncadd [#allocation4], %s23
      %s25 = sshll.u32 [#allocation3], 4
      %s26 = int_to_ptr.vmem [resolvable:$true] %s25
      %31 = dma.hbm_to_vmem [thread:$0]  %s2, 2048, %s26, [#allocation4], 128, 128, 8
    $region13: #{rnn_forward.1} parent=1 // pred_fallthru
      _
    // Predicated region
    $region14: #{rnn_forward.1} parent=1 // pred_check
      _
    $region15: #{rnn_forward.1} parent=1 // pred_check_branch
      %33 = sbr.rel (0) target = $region17
    $region16: #{rnn_forward.1} parent=1 // pred_region
      %s35 = ssub.s32 3072, 3072
      %36 = vsyncadd [#allocation6], %s35
      %s37 = sshll.u32 [#allocation5], 4
      %s38 = int_to_ptr.vmem [resolvable:$true] %s37
      %43 = dma.hbm_to_vmem [thread:$0]  %s3, 3072, %s38, [#allocation6], 128, 128, 8
    $region17: #{rnn_forward.1} parent=1 // pred_fallthru
      _
    // Predicated region
    $region18: #{rnn_forward.1} parent=1 // pred_check
      _
    $region19: #{rnn_forward.1} parent=1 // pred_check_branch
      %45 = sbr.rel (0) target = $region21
    $region20: #{rnn_forward.1} parent=1 // pred_region
      _
    $region21: #{rnn_forward.1} parent=1 // pred_fallthru
      _
    // Predicated region
    $region22: #{rnn_forward.1} parent=1 // pred_check
      _
    $region23: #{rnn_forward.1} parent=1 // pred_check_branch
      %47 = sbr.rel (0) target = $region25
    $region24: #{rnn_forward.1} parent=1 // pred_region
      _
    $region25: #{rnn_forward.1} parent=1 // pred_fallthru
      _
    // Predicated region
    $region26: #{rnn_forward.1} parent=1 // pred_check
      _
    $region27: #{rnn_forward.1} parent=1 // pred_check_branch
      %49 = sbr.rel (0) target = $region29
    $region28: #{rnn_forward.1} parent=1 // pred_region
      _
    $region29: #{rnn_forward.1} parent=1 // pred_fallthru
      _
    // Predicated region
    $region30: #{rnn_forward.1} parent=1 // pred_check
      _
    $region31: #{rnn_forward.1} parent=1 // pred_check_branch
      %51 = sbr.rel (0) target = $region33
    $region32: #{rnn_forward.1} parent=1 // pred_region
      %52 = dma.done [#allocation4], 2048
    $region33: #{rnn_forward.1} parent=1 // pred_fallthru
      _
    // Predicated region
    $region34: #{rnn_forward.1} parent=1 // pred_check
      _
    $region35: #{rnn_forward.1} parent=1 // pred_check_branch
      %54 = sbr.rel (0) target = $region37
    $region36: #{rnn_forward.1} parent=1 // pred_region
      %55 = dma.done [#allocation6], 3072
    $region37: #{rnn_forward.1} parent=1 // pred_fallthru
      _
    %v56 = vld [vmem:[%s0] sm:$0x3]
    %v57 = vld [vmem:[%s0 + $0x2] sm:$0x3]
    %v58 = vld [vmem:[%s0 + $0x4] sm:$0x3]
    %v59 = vld [vmem:[%s0 + $0x6] sm:$0x3]
    %v60 = vld [vmem:[%s0 + $0x8] sm:$0x3]
    %v61 = vld [vmem:[%s0 + $0xa] sm:$0x3]
    %v62 = vld [vmem:[%s0 + $0xc] sm:$0x3]
    %v63 = vld [vmem:[%s0 + $0xe] sm:$0x3]
    %v64 = vld [vmem:[%s1] sm:$0x7]
    %66 = vset.pattern.permute.xlu0 0
    %67 = vperm.xlu0 %66, %v56
    %v68 = vpop.permute.xlu0 %67
    %71 = vset.pattern.permute.xlu0 0
    %72 = vperm.xlu0 %71, %v57
    %v73 = vpop.permute.xlu0 %72
    %76 = vset.pattern.permute.xlu0 0
    %77 = vperm.xlu0 %76, %v58
    %v78 = vpop.permute.xlu0 %77
    %81 = vset.pattern.permute.xlu0 0
    %82 = vperm.xlu0 %81, %v59
    %v83 = vpop.permute.xlu0 %82
    %86 = vset.pattern.permute.xlu0 0
    %87 = vperm.xlu0 %86, %v60
    %v88 = vpop.permute.xlu0 %87
    %91 = vset.pattern.permute.xlu0 0
    %92 = vperm.xlu0 %91, %v61
    %v93 = vpop.permute.xlu0 %92
    %96 = vset.pattern.permute.xlu0 0
    %97 = vperm.xlu0 %96, %v62
    %v98 = vpop.permute.xlu0 %97
    %101 = vset.pattern.permute.xlu0 0
    %102 = vperm.xlu0 %101, %v63
    %v103 = vpop.permute.xlu0 %102
    %v105 = vlaneseq
    %v106 = vshrl.u32 %v105, 7
    %v107 = vsub.s32 0, %v106
    %v108 = vrot.slane %v64, %v107
    %v109 = vmul.f32 %v68, %v108
    %v110 = vmul.f32 %v73, %v108
    %v111 = vmul.f32 %v78, %v108
    %v112 = vmul.f32 %v83, %v108
    %v113 = vmul.f32 %v88, %v108
    %v114 = vmul.f32 %v93, %v108
    %v115 = vmul.f32 %v98, %v108
    %v116 = vmul.f32 %v103, %v108
    %117 = vset.pattern.permute.xlu0 1
    %118 = vperm.xlu0 %117, %v56
    %v119 = vpop.permute.xlu0 %118
    %121 = vset.pattern.permute.xlu0 1
    %122 = vperm.xlu0 %121, %v57
    %v123 = vpop.permute.xlu0 %122
    %125 = vset.pattern.permute.xlu0 1
    %126 = vperm.xlu0 %125, %v58
    %v127 = vpop.permute.xlu0 %126
    %129 = vset.pattern.permute.xlu0 1
    %130 = vperm.xlu0 %129, %v59
    %v131 = vpop.permute.xlu0 %130
    %133 = vset.pattern.permute.xlu0 1
    %134 = vperm.xlu0 %133, %v60
    %v135 = vpop.permute.xlu0 %134
    %137 = vset.pattern.permute.xlu0 1
    %138 = vperm.xlu0 %137, %v61
    %v139 = vpop.permute.xlu0 %138
    %141 = vset.pattern.permute.xlu0 1
    %142 = vperm.xlu0 %141, %v62
    %v143 = vpop.permute.xlu0 %142
    %145 = vset.pattern.permute.xlu0 1
    %146 = vperm.xlu0 %145, %v63
    %v147 = vpop.permute.xlu0 %146
    %v149 = vlaneseq
    %v150 = vshrl.u32 %v149, 7
    %v151 = vsub.s32 1, %v150
    %v152 = vrot.slane %v64, %v151
    %v153 = vmul.f32 %v119, %v152
    %v154 = vmul.f32 %v123, %v152
    %v155 = vmul.f32 %v127, %v152
    %v156 = vmul.f32 %v131, %v152
    %v157 = vmul.f32 %v135, %v152
    %v158 = vmul.f32 %v139, %v152
    %v159 = vmul.f32 %v143, %v152
    %v160 = vmul.f32 %v147, %v152
    %v161 = vadd.f32 %v109, %v153
    %v162 = vadd.f32 %v110, %v154
    %v163 = vadd.f32 %v111, %v155
    %v164 = vadd.f32 %v112, %v156
    %v165 = vadd.f32 %v113, %v157
    %v166 = vadd.f32 %v114, %v158
    %v167 = vadd.f32 %v115, %v159
    %v168 = vadd.f32 %v116, %v160
    %169 = vset.pattern.permute.xlu0 2
    %170 = vperm.xlu0 %169, %v56
    %v171 = vpop.permute.xlu0 %170
    %173 = vset.pattern.permute.xlu0 2
    %174 = vperm.xlu0 %173, %v57
    %v175 = vpop.permute.xlu0 %174
    %177 = vset.pattern.permute.xlu0 2
    %178 = vperm.xlu0 %177, %v58
    %v179 = vpop.permute.xlu0 %178
    %181 = vset.pattern.permute.xlu0 2
    %182 = vperm.xlu0 %181, %v59
    %v183 = vpop.permute.xlu0 %182
    %185 = vset.pattern.permute.xlu0 2
    %186 = vperm.xlu0 %185, %v60
    %v187 = vpop.permute.xlu0 %186
    %189 = vset.pattern.permute.xlu0 2
    %190 = vperm.xlu0 %189, %v61
    %v191 = vpop.permute.xlu0 %190
    %193 = vset.pattern.permute.xlu0 2
    %194 = vperm.xlu0 %193, %v62
    %v195 = vpop.permute.xlu0 %194
    %197 = vset.pattern.permute.xlu0 2
    %198 = vperm.xlu0 %197, %v63
    %v199 = vpop.permute.xlu0 %198
    %v201 = vlaneseq
    %v202 = vshrl.u32 %v201, 7
    %v203 = vsub.s32 2, %v202
    %v204 = vrot.slane %v64, %v203
    %v205 = vmul.f32 %v171, %v204
    %v206 = vmul.f32 %v175, %v204
    %v207 = vmul.f32 %v179, %v204
    %v208 = vmul.f32 %v183, %v204
    %v209 = vmul.f32 %v187, %v204
    %v210 = vmul.f32 %v191, %v204
    %v211 = vmul.f32 %v195, %v204
    %v212 = vmul.f32 %v199, %v204
    %v213 = vadd.f32 %v161, %v205
    %v214 = vadd.f32 %v162, %v206
    %v215 = vadd.f32 %v163, %v207
    %v216 = vadd.f32 %v164, %v208
    %v217 = vadd.f32 %v165, %v209
    %v218 = vadd.f32 %v166, %v210
    %v219 = vadd.f32 %v167, %v211
    %v220 = vadd.f32 %v168, %v212
    %v221 = vld [vmem:[%s4] sm:$0x1]
    %v223 = vlaneseq
    %v224 = vshrl.u32 %v223, 7
    %v225 = vsub.s32 0, %v224
    %v226 = vrot.slane %v221, %v225
    %v228 = vadd.f32 %v213, %v226
    %v229 = vadd.f32 %v214, %v226
    %v230 = vadd.f32 %v215, %v226
    %v231 = vadd.f32 %v216, %v226
    %v232 = vadd.f32 %v217, %v226
    %v233 = vadd.f32 %v218, %v226
    %v234 = vadd.f32 %v219, %v226
    %v235 = vadd.f32 %v220, %v226
    %v236 = vmax.f32 %v228, 0.0
    %v237 = vld [vmem:[#allocation5] sm:$0xff]
    %v238 = vld [vmem:[#allocation5 + $0x8] sm:$0xff]
    %v239 = vld [vmem:[#allocation5 + $0x10] sm:$0xff]
    %v240 = vld [vmem:[#allocation5 + $0x18] sm:$0xff]
    %v241 = vld [vmem:[#allocation5 + $0x20] sm:$0xff]
    %v242 = vld [vmem:[#allocation5 + $0x28] sm:$0xff]
    %v243 = vld [vmem:[#allocation5 + $0x30] sm:$0xff]
    %v244 = vld [vmem:[#allocation5 + $0x38] sm:$0xff]
    %vm245 = vcmask 523264
    %v247 = vsel %vm245, %v236, 0
    %249 = vmatprep.subr.mxu0 0.0
    %250 = vmatpush1.msra.mxu0 0.0
    %251 = vmatprep.subr.mxu0 0.0
    %252 = vmatpush1.msra.mxu0 0.0
    %253 = vmatprep.subr.mxu0 0.0
    %254 = vmatpush1.msra.mxu0 0.0
    %255 = vmatprep.subr.mxu0 0.0
    %256 = vmatpush1.msra.mxu0 0.0
    %257 = vmatprep.subr.mxu0 0.0
    %258 = vmatpush1.msra.mxu0 0.0
    %259 = vmatprep.subr.mxu0 0.0
    %260 = vmatpush1.msra.mxu0 0.0
    %261 = vmatprep.subr.mxu0 0.0
    %262 = vmatpush1.msra.mxu0 0.0
    %263 = vmatprep.subr.mxu0 0.0
    %264 = vmatpush1.msra.mxu0 0.0
    %265 = vmatprep.subr.mxu0 0.0
    %266 = vmatpush1.msra.mxu0 %v244
    %267 = vmatprep.subr.mxu0 0.0
    %268 = vmatpush1.msra.mxu0 %v243
    %269 = vmatprep.subr.mxu0 0.0
    %270 = vmatpush1.msra.mxu0 %v242
    %271 = vmatprep.subr.mxu0 0.0
    %272 = vmatpush1.msra.mxu0 %v241
    %273 = vmatprep.subr.mxu0 0.0
    %274 = vmatpush1.msra.mxu0 %v240
    %275 = vmatprep.subr.mxu0 0.0
    %276 = vmatpush1.msra.mxu0 %v239
    %277 = vmatprep.subr.mxu0 0.0
    %278 = vmatpush1.msra.mxu0 %v238
    %279 = vmatprep.subr.mxu0 0.0
    %280 = vmatpush1.msra.mxu0 %v237
    %281 = vmatprep.subr.mxu0 0.0
    %282 = vmatpush2.msra.mxu0 0.0
    %283 = vmatprep.subr.mxu0 0.0
    %284 = vmatpush2.msra.mxu0 0.0
    %285 = vmatprep.subr.mxu0 0.0
    %286 = vmatpush2.msra.mxu0 0.0
    %287 = vmatprep.subr.mxu0 0.0
    %288 = vmatpush2.msra.mxu0 0.0
    %289 = vmatprep.subr.mxu0 0.0
    %290 = vmatpush2.msra.mxu0 0.0
    %291 = vmatprep.subr.mxu0 0.0
    %292 = vmatpush2.msra.mxu0 0.0
    %293 = vmatprep.subr.mxu0 0.0
    %294 = vmatpush2.msra.mxu0 0.0
    %295 = vmatprep.subr.mxu0 0.0
    %296 = vmatpush2.msra.mxu0 0.0
    %297 = vmatprep.subr.mxu0 0.0
    %298 = vmatpush2.msra.mxu0 0.0
    %299 = vmatprep.subr.mxu0 0.0
    %300 = vmatpush2.msra.mxu0 0.0
    %301 = vmatprep.subr.mxu0 0.0
    %302 = vmatpush2.msra.mxu0 0.0
    %303 = vmatprep.subr.mxu0 0.0
    %304 = vmatpush2.msra.mxu0 0.0
    %305 = vmatprep.subr.mxu0 0.0
    %306 = vmatpush2.msra.mxu0 0.0
    %307 = vmatprep.subr.mxu0 0.0
    %308 = vmatpush2.msra.mxu0 0.0
    %309 = vmatprep.subr.mxu0 0.0
    %310 = vmatpush2.msra.mxu0 0.0
    %311 = vmatprep.subr.mxu0 0.0
    %312 = vmatpush2.msra.mxu0 0.0
    %313 = vmatprep.mubr.f32.mxu0 0.0
    %314 = vmatmul.mubr.f32.gmra.mxu0 %v247
    %v315 = vpop.f32.mrf.mxu0
    %v316 = vadd.f32 0.0, %v315
    %v317 = vpop.f32.mrf.mxu0
    %318 = vdwg.mxu0
    %v319 = vadd.f32 %v229, %v316
    %v320 = vmax.f32 %v319, 0.0
    %v321 = vld [vmem:[#allocation3] sm:$0xff]
    %v322 = vld [vmem:[#allocation3 + $0x8] sm:$0xff]
    %v323 = vld [vmem:[#allocation3 + $0x10] sm:$0xff]
    %v324 = vld [vmem:[#allocation3 + $0x18] sm:$0xff]
    %v325 = vld [vmem:[#allocation3 + $0x20] sm:$0xff]
    %v326 = vld [vmem:[#allocation3 + $0x28] sm:$0xff]
    %v327 = vld [vmem:[#allocation3 + $0x30] sm:$0xff]
    %v328 = vld [vmem:[#allocation3 + $0x38] sm:$0xff]
    %s329 = scalar_lea.vmem %s4, 1
    %v330 = vld [vmem:[%s329] sm:$0x1]
    %v332 = vlaneseq
    %v333 = vshrl.u32 %v332, 7
    %v334 = vsub.s32 0, %v333
    %v335 = vrot.slane %v330, %v334
    %337 = vmatprep.subr.mxu0 0.0
    %338 = vmatpush1.msra.mxu0 0.0
    %339 = vmatprep.subr.mxu0 0.0
    %340 = vmatpush1.msra.mxu0 0.0
    %341 = vmatprep.subr.mxu0 0.0
    %342 = vmatpush1.msra.mxu0 0.0
    %343 = vmatprep.subr.mxu0 0.0
    %344 = vmatpush1.msra.mxu0 0.0
    %345 = vmatprep.subr.mxu0 0.0
    %346 = vmatpush1.msra.mxu0 0.0
    %347 = vmatprep.subr.mxu0 0.0
    %348 = vmatpush1.msra.mxu0 0.0
    %349 = vmatprep.subr.mxu0 0.0
    %350 = vmatpush1.msra.mxu0 0.0
    %351 = vmatprep.subr.mxu0 0.0
    %352 = vmatpush1.msra.mxu0 0.0
    %353 = vmatprep.subr.mxu0 0.0
    %354 = vmatpush1.msra.mxu0 %v328
    %355 = vmatprep.subr.mxu0 0.0
    %356 = vmatpush1.msra.mxu0 %v327
    %357 = vmatprep.subr.mxu0 0.0
    %358 = vmatpush1.msra.mxu0 %v326
    %359 = vmatprep.subr.mxu0 0.0
    %360 = vmatpush1.msra.mxu0 %v325
    %361 = vmatprep.subr.mxu0 0.0
    %362 = vmatpush1.msra.mxu0 %v324
    %363 = vmatprep.subr.mxu0 0.0
    %364 = vmatpush1.msra.mxu0 %v323
    %365 = vmatprep.subr.mxu0 0.0
    %366 = vmatpush1.msra.mxu0 %v322
    %367 = vmatprep.subr.mxu0 0.0
    %368 = vmatpush1.msra.mxu0 %v321
    %369 = vmatprep.subr.mxu0 0.0
    %370 = vmatpush2.msra.mxu0 0.0
    %371 = vmatprep.subr.mxu0 0.0
    %372 = vmatpush2.msra.mxu0 0.0
    %373 = vmatprep.subr.mxu0 0.0
    %374 = vmatpush2.msra.mxu0 0.0
    %375 = vmatprep.subr.mxu0 0.0
    %376 = vmatpush2.msra.mxu0 0.0
    %377 = vmatprep.subr.mxu0 0.0
    %378 = vmatpush2.msra.mxu0 0.0
    %379 = vmatprep.subr.mxu0 0.0
    %380 = vmatpush2.msra.mxu0 0.0
    %381 = vmatprep.subr.mxu0 0.0
    %382 = vmatpush2.msra.mxu0 0.0
    %383 = vmatprep.subr.mxu0 0.0
    %384 = vmatpush2.msra.mxu0 0.0
    %385 = vmatprep.subr.mxu0 0.0
    %386 = vmatpush2.msra.mxu0 0.0
    %387 = vmatprep.subr.mxu0 0.0
    %388 = vmatpush2.msra.mxu0 0.0
    %389 = vmatprep.subr.mxu0 0.0
    %390 = vmatpush2.msra.mxu0 0.0
    %391 = vmatprep.subr.mxu0 0.0
    %392 = vmatpush2.msra.mxu0 0.0
    %393 = vmatprep.subr.mxu0 0.0
    %394 = vmatpush2.msra.mxu0 0.0
    %395 = vmatprep.subr.mxu0 0.0
    %396 = vmatpush2.msra.mxu0 0.0
    %397 = vmatprep.subr.mxu0 0.0
    %398 = vmatpush2.msra.mxu0 0.0
    %399 = vmatprep.subr.mxu0 0.0
    %400 = vmatpush2.msra.mxu0 0.0
    %401 = vmatprep.mubr.f32.mxu0 0.0
    %402 = vmatmul.mubr.f32.gmra.mxu0 %v247
    %v403 = vpop.f32.mrf.mxu0
    %v404 = vadd.f32 %v335, %v403
    %v405 = vpop.f32.mrf.mxu0
    %406 = vdwg.mxu0
    %v407 = vmax.f32 %v404, 0.0
    %v409 = vsel %vm245, %v320, 0
    %411 = vmatprep.subr.mxu0 0.0
    %412 = vmatpush1.msra.mxu0 0.0
    %413 = vmatprep.subr.mxu0 0.0
    %414 = vmatpush1.msra.mxu0 0.0
    %415 = vmatprep.subr.mxu0 0.0
    %416 = vmatpush1.msra.mxu0 0.0
    %417 = vmatprep.subr.mxu0 0.0
    %418 = vmatpush1.msra.mxu0 0.0
    %419 = vmatprep.subr.mxu0 0.0
    %420 = vmatpush1.msra.mxu0 0.0
    %421 = vmatprep.subr.mxu0 0.0
    %422 = vmatpush1.msra.mxu0 0.0
    %423 = vmatprep.subr.mxu0 0.0
    %424 = vmatpush1.msra.mxu0 0.0
    %425 = vmatprep.subr.mxu0 0.0
    %426 = vmatpush1.msra.mxu0 0.0
    %427 = vmatprep.subr.mxu0 0.0
    %428 = vmatpush1.msra.mxu0 %v244
    %429 = vmatprep.subr.mxu0 0.0
    %430 = vmatpush1.msra.mxu0 %v243
    %431 = vmatprep.subr.mxu0 0.0
    %432 = vmatpush1.msra.mxu0 %v242
    %433 = vmatprep.subr.mxu0 0.0
    %434 = vmatpush1.msra.mxu0 %v241
    %435 = vmatprep.subr.mxu0 0.0
    %436 = vmatpush1.msra.mxu0 %v240
    %437 = vmatprep.subr.mxu0 0.0
    %438 = vmatpush1.msra.mxu0 %v239
    %439 = vmatprep.subr.mxu0 0.0
    %440 = vmatpush1.msra.mxu0 %v238
    %441 = vmatprep.subr.mxu0 0.0
    %442 = vmatpush1.msra.mxu0 %v237
    %443 = vmatprep.subr.mxu0 0.0
    %444 = vmatpush2.msra.mxu0 0.0
    %445 = vmatprep.subr.mxu0 0.0
    %446 = vmatpush2.msra.mxu0 0.0
    %447 = vmatprep.subr.mxu0 0.0
    %448 = vmatpush2.msra.mxu0 0.0
    %449 = vmatprep.subr.mxu0 0.0
    %450 = vmatpush2.msra.mxu0 0.0
    %451 = vmatprep.subr.mxu0 0.0
    %452 = vmatpush2.msra.mxu0 0.0
    %453 = vmatprep.subr.mxu0 0.0
    %454 = vmatpush2.msra.mxu0 0.0
    %455 = vmatprep.subr.mxu0 0.0
    %456 = vmatpush2.msra.mxu0 0.0
    %457 = vmatprep.subr.mxu0 0.0
    %458 = vmatpush2.msra.mxu0 0.0
    %459 = vmatprep.subr.mxu0 0.0
    %460 = vmatpush2.msra.mxu0 0.0
    %461 = vmatprep.subr.mxu0 0.0
    %462 = vmatpush2.msra.mxu0 0.0
    %463 = vmatprep.subr.mxu0 0.0
    %464 = vmatpush2.msra.mxu0 0.0
    %465 = vmatprep.subr.mxu0 0.0
    %466 = vmatpush2.msra.mxu0 0.0
    %467 = vmatprep.subr.mxu0 0.0
    %468 = vmatpush2.msra.mxu0 0.0
    %469 = vmatprep.subr.mxu0 0.0
    %470 = vmatpush2.msra.mxu0 0.0
    %471 = vmatprep.subr.mxu0 0.0
    %472 = vmatpush2.msra.mxu0 0.0
    %473 = vmatprep.subr.mxu0 0.0
    %474 = vmatpush2.msra.mxu0 0.0
    %475 = vmatprep.mubr.f32.mxu0 0.0
    %476 = vmatmul.mubr.f32.gmra.mxu0 %v409
    %v477 = vpop.f32.mrf.mxu0
    %v478 = vadd.f32 0.0, %v477
    %v479 = vpop.f32.mrf.mxu0
    %480 = vdwg.mxu0
    %v481 = vadd.f32 %v230, %v478
    %v482 = vmax.f32 %v481, 0.0
    %483 = vmatprep.subr.mxu0 0.0
    %484 = vmatpush1.msra.mxu0 0.0
    %485 = vmatprep.subr.mxu0 0.0
    %486 = vmatpush1.msra.mxu0 0.0
    %487 = vmatprep.subr.mxu0 0.0
    %488 = vmatpush1.msra.mxu0 0.0
    %489 = vmatprep.subr.mxu0 0.0
    %490 = vmatpush1.msra.mxu0 0.0
    %491 = vmatprep.subr.mxu0 0.0
    %492 = vmatpush1.msra.mxu0 0.0
    %493 = vmatprep.subr.mxu0 0.0
    %494 = vmatpush1.msra.mxu0 0.0
    %495 = vmatprep.subr.mxu0 0.0
    %496 = vmatpush1.msra.mxu0 0.0
    %497 = vmatprep.subr.mxu0 0.0
    %498 = vmatpush1.msra.mxu0 0.0
    %499 = vmatprep.subr.mxu0 0.0
    %500 = vmatpush1.msra.mxu0 %v328
    %501 = vmatprep.subr.mxu0 0.0
    %502 = vmatpush1.msra.mxu0 %v327
    %503 = vmatprep.subr.mxu0 0.0
    %504 = vmatpush1.msra.mxu0 %v326
    %505 = vmatprep.subr.mxu0 0.0
    %506 = vmatpush1.msra.mxu0 %v325
    %507 = vmatprep.subr.mxu0 0.0
    %508 = vmatpush1.msra.mxu0 %v324
    %509 = vmatprep.subr.mxu0 0.0
    %510 = vmatpush1.msra.mxu0 %v323
    %511 = vmatprep.subr.mxu0 0.0
    %512 = vmatpush1.msra.mxu0 %v322
    %513 = vmatprep.subr.mxu0 0.0
    %514 = vmatpush1.msra.mxu0 %v321
    %515 = vmatprep.subr.mxu0 0.0
    %516 = vmatpush2.msra.mxu0 0.0
    %517 = vmatprep.subr.mxu0 0.0
    %518 = vmatpush2.msra.mxu0 0.0
    %519 = vmatprep.subr.mxu0 0.0
    %520 = vmatpush2.msra.mxu0 0.0
    %521 = vmatprep.subr.mxu0 0.0
    %522 = vmatpush2.msra.mxu0 0.0
    %523 = vmatprep.subr.mxu0 0.0
    %524 = vmatpush2.msra.mxu0 0.0
    %525 = vmatprep.subr.mxu0 0.0
    %526 = vmatpush2.msra.mxu0 0.0
    %527 = vmatprep.subr.mxu0 0.0
    %528 = vmatpush2.msra.mxu0 0.0
    %529 = vmatprep.subr.mxu0 0.0
    %530 = vmatpush2.msra.mxu0 0.0
    %531 = vmatprep.subr.mxu0 0.0
    %532 = vmatpush2.msra.mxu0 0.0
    %533 = vmatprep.subr.mxu0 0.0
    %534 = vmatpush2.msra.mxu0 0.0
    %535 = vmatprep.subr.mxu0 0.0
    %536 = vmatpush2.msra.mxu0 0.0
    %537 = vmatprep.subr.mxu0 0.0
    %538 = vmatpush2.msra.mxu0 0.0
    %539 = vmatprep.subr.mxu0 0.0
    %540 = vmatpush2.msra.mxu0 0.0
    %541 = vmatprep.subr.mxu0 0.0
    %542 = vmatpush2.msra.mxu0 0.0
    %543 = vmatprep.subr.mxu0 0.0
    %544 = vmatpush2.msra.mxu0 0.0
    %545 = vmatprep.subr.mxu0 0.0
    %546 = vmatpush2.msra.mxu0 0.0
    %547 = vmatprep.mubr.f32.mxu0 0.0
    %548 = vmatmul.mubr.f32.gmra.mxu0 %v409
    %v549 = vpop.f32.mrf.mxu0
    %v550 = vadd.f32 %v335, %v549
    %v551 = vpop.f32.mrf.mxu0
    %552 = vdwg.mxu0
    %s553 = scalar_lea.vmem [#allocation5], 64
    %v554 = vld [vmem:[%s553] sm:$0xff]
    %v555 = vld [vmem:[%s553 + $0x8] sm:$0xff]
    %v556 = vld [vmem:[%s553 + $0x10] sm:$0xff]
    %v557 = vld [vmem:[%s553 + $0x18] sm:$0xff]
    %v558 = vld [vmem:[%s553 + $0x20] sm:$0xff]
    %v559 = vld [vmem:[%s553 + $0x28] sm:$0xff]
    %v560 = vld [vmem:[%s553 + $0x30] sm:$0xff]
    %v561 = vld [vmem:[%s553 + $0x38] sm:$0xff]
    %v563 = vsel %vm245, %v407, 0
    %565 = vmatprep.subr.mxu0 0.0
    %566 = vmatpush1.msra.mxu0 0.0
    %567 = vmatprep.subr.mxu0 0.0
    %568 = vmatpush1.msra.mxu0 0.0
    %569 = vmatprep.subr.mxu0 0.0
    %570 = vmatpush1.msra.mxu0 0.0
    %571 = vmatprep.subr.mxu0 0.0
    %572 = vmatpush1.msra.mxu0 0.0
    %573 = vmatprep.subr.mxu0 0.0
    %574 = vmatpush1.msra.mxu0 0.0
    %575 = vmatprep.subr.mxu0 0.0
    %576 = vmatpush1.msra.mxu0 0.0
    %577 = vmatprep.subr.mxu0 0.0
    %578 = vmatpush1.msra.mxu0 0.0
    %579 = vmatprep.subr.mxu0 0.0
    %580 = vmatpush1.msra.mxu0 0.0
    %581 = vmatprep.subr.mxu0 0.0
    %582 = vmatpush1.msra.mxu0 %v561
    %583 = vmatprep.subr.mxu0 0.0
    %584 = vmatpush1.msra.mxu0 %v560
    %585 = vmatprep.subr.mxu0 0.0
    %586 = vmatpush1.msra.mxu0 %v559
    %587 = vmatprep.subr.mxu0 0.0
    %588 = vmatpush1.msra.mxu0 %v558
    %589 = vmatprep.subr.mxu0 0.0
    %590 = vmatpush1.msra.mxu0 %v557
    %591 = vmatprep.subr.mxu0 0.0
    %592 = vmatpush1.msra.mxu0 %v556
    %593 = vmatprep.subr.mxu0 0.0
    %594 = vmatpush1.msra.mxu0 %v555
    %595 = vmatprep.subr.mxu0 0.0
    %596 = vmatpush1.msra.mxu0 %v554
    %597 = vmatprep.subr.mxu0 0.0
    %598 = vmatpush2.msra.mxu0 0.0
    %599 = vmatprep.subr.mxu0 0.0
    %600 = vmatpush2.msra.mxu0 0.0
    %601 = vmatprep.subr.mxu0 0.0
    %602 = vmatpush2.msra.mxu0 0.0
    %603 = vmatprep.subr.mxu0 0.0
    %604 = vmatpush2.msra.mxu0 0.0
    %605 = vmatprep.subr.mxu0 0.0
    %606 = vmatpush2.msra.mxu0 0.0
    %607 = vmatprep.subr.mxu0 0.0
    %608 = vmatpush2.msra.mxu0 0.0
    %609 = vmatprep.subr.mxu0 0.0
    %610 = vmatpush2.msra.mxu0 0.0
    %611 = vmatprep.subr.mxu0 0.0
    %612 = vmatpush2.msra.mxu0 0.0
    %613 = vmatprep.subr.mxu0 0.0
    %614 = vmatpush2.msra.mxu0 0.0
    %615 = vmatprep.subr.mxu0 0.0
    %616 = vmatpush2.msra.mxu0 0.0
    %617 = vmatprep.subr.mxu0 0.0
    %618 = vmatpush2.msra.mxu0 0.0
    %619 = vmatprep.subr.mxu0 0.0
    %620 = vmatpush2.msra.mxu0 0.0
    %621 = vmatprep.subr.mxu0 0.0
    %622 = vmatpush2.msra.mxu0 0.0
    %623 = vmatprep.subr.mxu0 0.0
    %624 = vmatpush2.msra.mxu0 0.0
    %625 = vmatprep.subr.mxu0 0.0
    %626 = vmatpush2.msra.mxu0 0.0
    %627 = vmatprep.subr.mxu0 0.0
    %628 = vmatpush2.msra.mxu0 0.0
    %629 = vmatprep.mubr.f32.mxu0 0.0
    %630 = vmatmul.mubr.f32.gmra.mxu0 %v563
    %v631 = vpop.f32.mrf.mxu0
    %v632 = vadd.f32 0.0, %v631
    %v633 = vpop.f32.mrf.mxu0
    %634 = vdwg.mxu0
    %v635 = vadd.f32 %v550, %v632
    %v636 = vmax.f32 %v635, 0.0
    %s637 = scalar_lea.vmem [#allocation3], 64
    %v638 = vld [vmem:[%s637] sm:$0xff]
    %v639 = vld [vmem:[%s637 + $0x8] sm:$0xff]
    %v640 = vld [vmem:[%s637 + $0x10] sm:$0xff]
    %v641 = vld [vmem:[%s637 + $0x18] sm:$0xff]
    %v642 = vld [vmem:[%s637 + $0x20] sm:$0xff]
    %v643 = vld [vmem:[%s637 + $0x28] sm:$0xff]
    %v644 = vld [vmem:[%s637 + $0x30] sm:$0xff]
    %v645 = vld [vmem:[%s637 + $0x38] sm:$0xff]
    %s646 = scalar_lea.vmem %s4, 2
    %v647 = vld [vmem:[%s646] sm:$0x1]
    %v649 = vlaneseq
    %v650 = vshrl.u32 %v649, 7
    %v651 = vsub.s32 0, %v650
    %v652 = vrot.slane %v647, %v651
    %654 = vmatprep.subr.mxu0 0.0
    %655 = vmatpush1.msra.mxu0 0.0
    %656 = vmatprep.subr.mxu0 0.0
    %657 = vmatpush1.msra.mxu0 0.0
    %658 = vmatprep.subr.mxu0 0.0
    %659 = vmatpush1.msra.mxu0 0.0
    %660 = vmatprep.subr.mxu0 0.0
    %661 = vmatpush1.msra.mxu0 0.0
    %662 = vmatprep.subr.mxu0 0.0
    %663 = vmatpush1.msra.mxu0 0.0
    %664 = vmatprep.subr.mxu0 0.0
    %665 = vmatpush1.msra.mxu0 0.0
    %666 = vmatprep.subr.mxu0 0.0
    %667 = vmatpush1.msra.mxu0 0.0
    %668 = vmatprep.subr.mxu0 0.0
    %669 = vmatpush1.msra.mxu0 0.0
    %670 = vmatprep.subr.mxu0 0.0
    %671 = vmatpush1.msra.mxu0 %v645
    %672 = vmatprep.subr.mxu0 0.0
    %673 = vmatpush1.msra.mxu0 %v644
    %674 = vmatprep.subr.mxu0 0.0
    %675 = vmatpush1.msra.mxu0 %v643
    %676 = vmatprep.subr.mxu0 0.0
    %677 = vmatpush1.msra.mxu0 %v642
    %678 = vmatprep.subr.mxu0 0.0
    %679 = vmatpush1.msra.mxu0 %v641
    %680 = vmatprep.subr.mxu0 0.0
    %681 = vmatpush1.msra.mxu0 %v640
    %682 = vmatprep.subr.mxu0 0.0
    %683 = vmatpush1.msra.mxu0 %v639
    %684 = vmatprep.subr.mxu0 0.0
    %685 = vmatpush1.msra.mxu0 %v638
    %686 = vmatprep.subr.mxu0 0.0
    %687 = vmatpush2.msra.mxu0 0.0
    %688 = vmatprep.subr.mxu0 0.0
    %689 = vmatpush2.msra.mxu0 0.0
    %690 = vmatprep.subr.mxu0 0.0
    %691 = vmatpush2.msra.mxu0 0.0
    %692 = vmatprep.subr.mxu0 0.0
    %693 = vmatpush2.msra.mxu0 0.0
    %694 = vmatprep.subr.mxu0 0.0
    %695 = vmatpush2.msra.mxu0 0.0
    %696 = vmatprep.subr.mxu0 0.0
    %697 = vmatpush2.msra.mxu0 0.0
    %698 = vmatprep.subr.mxu0 0.0
    %699 = vmatpush2.msra.mxu0 0.0
    %700 = vmatprep.subr.mxu0 0.0
    %701 = vmatpush2.msra.mxu0 0.0
    %702 = vmatprep.subr.mxu0 0.0
    %703 = vmatpush2.msra.mxu0 0.0
    %704 = vmatprep.subr.mxu0 0.0
    %705 = vmatpush2.msra.mxu0 0.0
    %706 = vmatprep.subr.mxu0 0.0
    %707 = vmatpush2.msra.mxu0 0.0
    %708 = vmatprep.subr.mxu0 0.0
    %709 = vmatpush2.msra.mxu0 0.0
    %710 = vmatprep.subr.mxu0 0.0
    %711 = vmatpush2.msra.mxu0 0.0
    %712 = vmatprep.subr.mxu0 0.0
    %713 = vmatpush2.msra.mxu0 0.0
    %714 = vmatprep.subr.mxu0 0.0
    %715 = vmatpush2.msra.mxu0 0.0
    %716 = vmatprep.subr.mxu0 0.0
    %717 = vmatpush2.msra.mxu0 0.0
    %718 = vmatprep.mubr.f32.mxu0 0.0
    %719 = vmatmul.mubr.f32.gmra.mxu0 %v563
    %v720 = vpop.f32.mrf.mxu0
    %v721 = vadd.f32 %v652, %v720
    %v722 = vpop.f32.mrf.mxu0
    %723 = vdwg.mxu0
    %v724 = vmax.f32 %v721, 0.0
    %v726 = vsel %vm245, %v482, 0
    %728 = vmatprep.subr.mxu0 0.0
    %729 = vmatpush1.msra.mxu0 0.0
    %730 = vmatprep.subr.mxu0 0.0
    %731 = vmatpush1.msra.mxu0 0.0
    %732 = vmatprep.subr.mxu0 0.0
    %733 = vmatpush1.msra.mxu0 0.0
    %734 = vmatprep.subr.mxu0 0.0
    %735 = vmatpush1.msra.mxu0 0.0
    %736 = vmatprep.subr.mxu0 0.0
    %737 = vmatpush1.msra.mxu0 0.0
    %738 = vmatprep.subr.mxu0 0.0
    %739 = vmatpush1.msra.mxu0 0.0
    %740 = vmatprep.subr.mxu0 0.0
    %741 = vmatpush1.msra.mxu0 0.0
    %742 = vmatprep.subr.mxu0 0.0
    %743 = vmatpush1.msra.mxu0 0.0
    %744 = vmatprep.subr.mxu0 0.0
    %745 = vmatpush1.msra.mxu0 %v244
    %746 = vmatprep.subr.mxu0 0.0
    %747 = vmatpush1.msra.mxu0 %v243
    %748 = vmatprep.subr.mxu0 0.0
    %749 = vmatpush1.msra.mxu0 %v242
    %750 = vmatprep.subr.mxu0 0.0
    %751 = vmatpush1.msra.mxu0 %v241
    %752 = vmatprep.subr.mxu0 0.0
    %753 = vmatpush1.msra.mxu0 %v240
    %754 = vmatprep.subr.mxu0 0.0
    %755 = vmatpush1.msra.mxu0 %v239
    %756 = vmatprep.subr.mxu0 0.0
    %757 = vmatpush1.msra.mxu0 %v238
    %758 = vmatprep.subr.mxu0 0.0
    %759 = vmatpush1.msra.mxu0 %v237
    %760 = vmatprep.subr.mxu0 0.0
    %761 = vmatpush2.msra.mxu0 0.0
    %762 = vmatprep.subr.mxu0 0.0
    %763 = vmatpush2.msra.mxu0 0.0
    %764 = vmatprep.subr.mxu0 0.0
    %765 = vmatpush2.msra.mxu0 0.0
    %766 = vmatprep.subr.mxu0 0.0
    %767 = vmatpush2.msra.mxu0 0.0
    %768 = vmatprep.subr.mxu0 0.0
    %769 = vmatpush2.msra.mxu0 0.0
    %770 = vmatprep.subr.mxu0 0.0
    %771 = vmatpush2.msra.mxu0 0.0
    %772 = vmatprep.subr.mxu0 0.0
    %773 = vmatpush2.msra.mxu0 0.0
    %774 = vmatprep.subr.mxu0 0.0
    %775 = vmatpush2.msra.mxu0 0.0
    %776 = vmatprep.subr.mxu0 0.0
    %777 = vmatpush2.msra.mxu0 0.0
    %778 = vmatprep.subr.mxu0 0.0
    %779 = vmatpush2.msra.mxu0 0.0
    %780 = vmatprep.subr.mxu0 0.0
    %781 = vmatpush2.msra.mxu0 0.0
    %782 = vmatprep.subr.mxu0 0.0
    %783 = vmatpush2.msra.mxu0 0.0
    %784 = vmatprep.subr.mxu0 0.0
    %785 = vmatpush2.msra.mxu0 0.0
    %786 = vmatprep.subr.mxu0 0.0
    %787 = vmatpush2.msra.mxu0 0.0
    %788 = vmatprep.subr.mxu0 0.0
    %789 = vmatpush2.msra.mxu0 0.0
    %790 = vmatprep.subr.mxu0 0.0
    %791 = vmatpush2.msra.mxu0 0.0
    %792 = vmatprep.mubr.f32.mxu0 0.0
    %793 = vmatmul.mubr.f32.gmra.mxu0 %v726
    %v794 = vpop.f32.mrf.mxu0
    %v795 = vadd.f32 0.0, %v794
    %v796 = vpop.f32.mrf.mxu0
    %797 = vdwg.mxu0
    %v798 = vadd.f32 %v231, %v795
    %v799 = vmax.f32 %v798, 0.0
    %800 = vmatprep.subr.mxu0 0.0
    %801 = vmatpush1.msra.mxu0 0.0
    %802 = vmatprep.subr.mxu0 0.0
    %803 = vmatpush1.msra.mxu0 0.0
    %804 = vmatprep.subr.mxu0 0.0
    %805 = vmatpush1.msra.mxu0 0.0
    %806 = vmatprep.subr.mxu0 0.0
    %807 = vmatpush1.msra.mxu0 0.0
    %808 = vmatprep.subr.mxu0 0.0
    %809 = vmatpush1.msra.mxu0 0.0
    %810 = vmatprep.subr.mxu0 0.0
    %811 = vmatpush1.msra.mxu0 0.0
    %812 = vmatprep.subr.mxu0 0.0
    %813 = vmatpush1.msra.mxu0 0.0
    %814 = vmatprep.subr.mxu0 0.0
    %815 = vmatpush1.msra.mxu0 0.0
    %816 = vmatprep.subr.mxu0 0.0
    %817 = vmatpush1.msra.mxu0 %v328
    %818 = vmatprep.subr.mxu0 0.0
    %819 = vmatpush1.msra.mxu0 %v327
    %820 = vmatprep.subr.mxu0 0.0
    %821 = vmatpush1.msra.mxu0 %v326
    %822 = vmatprep.subr.mxu0 0.0
    %823 = vmatpush1.msra.mxu0 %v325
    %824 = vmatprep.subr.mxu0 0.0
    %825 = vmatpush1.msra.mxu0 %v324
    %826 = vmatprep.subr.mxu0 0.0
    %827 = vmatpush1.msra.mxu0 %v323
    %828 = vmatprep.subr.mxu0 0.0
    %829 = vmatpush1.msra.mxu0 %v322
    %830 = vmatprep.subr.mxu0 0.0
    %831 = vmatpush1.msra.mxu0 %v321
    %832 = vmatprep.subr.mxu0 0.0
    %833 = vmatpush2.msra.mxu0 0.0
    %834 = vmatprep.subr.mxu0 0.0
    %835 = vmatpush2.msra.mxu0 0.0
    %836 = vmatprep.subr.mxu0 0.0
    %837 = vmatpush2.msra.mxu0 0.0
    %838 = vmatprep.subr.mxu0 0.0
    %839 = vmatpush2.msra.mxu0 0.0
    %840 = vmatprep.subr.mxu0 0.0
    %841 = vmatpush2.msra.mxu0 0.0
    %842 = vmatprep.subr.mxu0 0.0
    %843 = vmatpush2.msra.mxu0 0.0
    %844 = vmatprep.subr.mxu0 0.0
    %845 = vmatpush2.msra.mxu0 0.0
    %846 = vmatprep.subr.mxu0 0.0
    %847 = vmatpush2.msra.mxu0 0.0
    %848 = vmatprep.subr.mxu0 0.0
    %849 = vmatpush2.msra.mxu0 0.0
    %850 = vmatprep.subr.mxu0 0.0
    %851 = vmatpush2.msra.mxu0 0.0
    %852 = vmatprep.subr.mxu0 0.0
    %853 = vmatpush2.msra.mxu0 0.0
    %854 = vmatprep.subr.mxu0 0.0
    %855 = vmatpush2.msra.mxu0 0.0
    %856 = vmatprep.subr.mxu0 0.0
    %857 = vmatpush2.msra.mxu0 0.0
    %858 = vmatprep.subr.mxu0 0.0
    %859 = vmatpush2.msra.mxu0 0.0
    %860 = vmatprep.subr.mxu0 0.0
    %861 = vmatpush2.msra.mxu0 0.0
    %862 = vmatprep.subr.mxu0 0.0
    %863 = vmatpush2.msra.mxu0 0.0
    %864 = vmatprep.mubr.f32.mxu0 0.0
    %865 = vmatmul.mubr.f32.gmra.mxu0 %v726
    %v866 = vpop.f32.mrf.mxu0
    %v867 = vadd.f32 %v335, %v866
    %v868 = vpop.f32.mrf.mxu0
    %869 = vdwg.mxu0
    %v871 = vsel %vm245, %v636, 0
    %873 = vmatprep.subr.mxu0 0.0
    %874 = vmatpush1.msra.mxu0 0.0
    %875 = vmatprep.subr.mxu0 0.0
    %876 = vmatpush1.msra.mxu0 0.0
    %877 = vmatprep.subr.mxu0 0.0
    %878 = vmatpush1.msra.mxu0 0.0
    %879 = vmatprep.subr.mxu0 0.0
    %880 = vmatpush1.msra.mxu0 0.0
    %881 = vmatprep.subr.mxu0 0.0
    %882 = vmatpush1.msra.mxu0 0.0
    %883 = vmatprep.subr.mxu0 0.0
    %884 = vmatpush1.msra.mxu0 0.0
    %885 = vmatprep.subr.mxu0 0.0
    %886 = vmatpush1.msra.mxu0 0.0
    %887 = vmatprep.subr.mxu0 0.0
    %888 = vmatpush1.msra.mxu0 0.0
    %889 = vmatprep.subr.mxu0 0.0
    %890 = vmatpush1.msra.mxu0 %v561
    %891 = vmatprep.subr.mxu0 0.0
    %892 = vmatpush1.msra.mxu0 %v560
    %893 = vmatprep.subr.mxu0 0.0
    %894 = vmatpush1.msra.mxu0 %v559
    %895 = vmatprep.subr.mxu0 0.0
    %896 = vmatpush1.msra.mxu0 %v558
    %897 = vmatprep.subr.mxu0 0.0
    %898 = vmatpush1.msra.mxu0 %v557
    %899 = vmatprep.subr.mxu0 0.0
    %900 = vmatpush1.msra.mxu0 %v556
    %901 = vmatprep.subr.mxu0 0.0
    %902 = vmatpush1.msra.mxu0 %v555
    %903 = vmatprep.subr.mxu0 0.0
    %904 = vmatpush1.msra.mxu0 %v554
    %905 = vmatprep.subr.mxu0 0.0
    %906 = vmatpush2.msra.mxu0 0.0
    %907 = vmatprep.subr.mxu0 0.0
    %908 = vmatpush2.msra.mxu0 0.0
    %909 = vmatprep.subr.mxu0 0.0
    %910 = vmatpush2.msra.mxu0 0.0
    %911 = vmatprep.subr.mxu0 0.0
    %912 = vmatpush2.msra.mxu0 0.0
    %913 = vmatprep.subr.mxu0 0.0
    %914 = vmatpush2.msra.mxu0 0.0
    %915 = vmatprep.subr.mxu0 0.0
    %916 = vmatpush2.msra.mxu0 0.0
    %917 = vmatprep.subr.mxu0 0.0
    %918 = vmatpush2.msra.mxu0 0.0
    %919 = vmatprep.subr.mxu0 0.0
    %920 = vmatpush2.msra.mxu0 0.0
    %921 = vmatprep.subr.mxu0 0.0
    %922 = vmatpush2.msra.mxu0 0.0
    %923 = vmatprep.subr.mxu0 0.0
    %924 = vmatpush2.msra.mxu0 0.0
    %925 = vmatprep.subr.mxu0 0.0
    %926 = vmatpush2.msra.mxu0 0.0
    %927 = vmatprep.subr.mxu0 0.0
    %928 = vmatpush2.msra.mxu0 0.0
    %929 = vmatprep.subr.mxu0 0.0
    %930 = vmatpush2.msra.mxu0 0.0
    %931 = vmatprep.subr.mxu0 0.0
    %932 = vmatpush2.msra.mxu0 0.0
    %933 = vmatprep.subr.mxu0 0.0
    %934 = vmatpush2.msra.mxu0 0.0
    %935 = vmatprep.subr.mxu0 0.0
    %936 = vmatpush2.msra.mxu0 0.0
    %937 = vmatprep.mubr.f32.mxu0 0.0
    %938 = vmatmul.mubr.f32.gmra.mxu0 %v871
    %v939 = vpop.f32.mrf.mxu0
    %v940 = vadd.f32 0.0, %v939
    %v941 = vpop.f32.mrf.mxu0
    %942 = vdwg.mxu0
    %v943 = vadd.f32 %v867, %v940
    %v944 = vmax.f32 %v943, 0.0
    %945 = vmatprep.subr.mxu0 0.0
    %946 = vmatpush1.msra.mxu0 0.0
    %947 = vmatprep.subr.mxu0 0.0
    %948 = vmatpush1.msra.mxu0 0.0
    %949 = vmatprep.subr.mxu0 0.0
    %950 = vmatpush1.msra.mxu0 0.0
    %951 = vmatprep.subr.mxu0 0.0
    %952 = vmatpush1.msra.mxu0 0.0
    %953 = vmatprep.subr.mxu0 0.0
    %954 = vmatpush1.msra.mxu0 0.0
    %955 = vmatprep.subr.mxu0 0.0
    %956 = vmatpush1.msra.mxu0 0.0
    %957 = vmatprep.subr.mxu0 0.0
    %958 = vmatpush1.msra.mxu0 0.0
    %959 = vmatprep.subr.mxu0 0.0
    %960 = vmatpush1.msra.mxu0 0.0
    %961 = vmatprep.subr.mxu0 0.0
    %962 = vmatpush1.msra.mxu0 %v645
    %963 = vmatprep.subr.mxu0 0.0
    %964 = vmatpush1.msra.mxu0 %v644
    %965 = vmatprep.subr.mxu0 0.0
    %966 = vmatpush1.msra.mxu0 %v643
    %967 = vmatprep.subr.mxu0 0.0
    %968 = vmatpush1.msra.mxu0 %v642
    %969 = vmatprep.subr.mxu0 0.0
    %970 = vmatpush1.msra.mxu0 %v641
    %971 = vmatprep.subr.mxu0 0.0
    %972 = vmatpush1.msra.mxu0 %v640
    %973 = vmatprep.subr.mxu0 0.0
    %974 = vmatpush1.msra.mxu0 %v639
    %975 = vmatprep.subr.mxu0 0.0
    %976 = vmatpush1.msra.mxu0 %v638
    %977 = vmatprep.subr.mxu0 0.0
    %978 = vmatpush2.msra.mxu0 0.0
    %979 = vmatprep.subr.mxu0 0.0
    %980 = vmatpush2.msra.mxu0 0.0
    %981 = vmatprep.subr.mxu0 0.0
    %982 = vmatpush2.msra.mxu0 0.0
    %983 = vmatprep.subr.mxu0 0.0
    %984 = vmatpush2.msra.mxu0 0.0
    %985 = vmatprep.subr.mxu0 0.0
    %986 = vmatpush2.msra.mxu0 0.0
    %987 = vmatprep.subr.mxu0 0.0
    %988 = vmatpush2.msra.mxu0 0.0
    %989 = vmatprep.subr.mxu0 0.0
    %990 = vmatpush2.msra.mxu0 0.0
    %991 = vmatprep.subr.mxu0 0.0
    %992 = vmatpush2.msra.mxu0 0.0
    %993 = vmatprep.subr.mxu0 0.0
    %994 = vmatpush2.msra.mxu0 0.0
    %995 = vmatprep.subr.mxu0 0.0
    %996 = vmatpush2.msra.mxu0 0.0
    %997 = vmatprep.subr.mxu0 0.0
    %998 = vmatpush2.msra.mxu0 0.0
    %999 = vmatprep.subr.mxu0 0.0
    %1000 = vmatpush2.msra.mxu0 0.0
    %1001 = vmatprep.subr.mxu0 0.0
    %1002 = vmatpush2.msra.mxu0 0.0
    %1003 = vmatprep.subr.mxu0 0.0
    %1004 = vmatpush2.msra.mxu0 0.0
    %1005 = vmatprep.subr.mxu0 0.0
    %1006 = vmatpush2.msra.mxu0 0.0
    %1007 = vmatprep.subr.mxu0 0.0
    %1008 = vmatpush2.msra.mxu0 0.0
    %1009 = vmatprep.mubr.f32.mxu0 0.0
    %1010 = vmatmul.mubr.f32.gmra.mxu0 %v871
    %v1011 = vpop.f32.mrf.mxu0
    %v1012 = vadd.f32 %v652, %v1011
    %v1013 = vpop.f32.mrf.mxu0
    %1014 = vdwg.mxu0
    %s1015 = scalar_lea.vmem [#allocation5], 128
    %v1016 = vld [vmem:[%s1015] sm:$0xff]
    %v1017 = vld [vmem:[%s1015 + $0x8] sm:$0xff]
    %v1018 = vld [vmem:[%s1015 + $0x10] sm:$0xff]
    %v1019 = vld [vmem:[%s1015 + $0x18] sm:$0xff]
    %v1020 = vld [vmem:[%s1015 + $0x20] sm:$0xff]
    %v1021 = vld [vmem:[%s1015 + $0x28] sm:$0xff]
    %v1022 = vld [vmem:[%s1015 + $0x30] sm:$0xff]
    %v1023 = vld [vmem:[%s1015 + $0x38] sm:$0xff]
    %v1025 = vsel %vm245, %v724, 0
    %1027 = vmatprep.subr.mxu0 0.0
    %1028 = vmatpush1.msra.mxu0 0.0
    %1029 = vmatprep.subr.mxu0 0.0
    %1030 = vmatpush1.msra.mxu0 0.0
    %1031 = vmatprep.subr.mxu0 0.0
    %1032 = vmatpush1.msra.mxu0 0.0
    %1033 = vmatprep.subr.mxu0 0.0
    %1034 = vmatpush1.msra.mxu0 0.0
    %1035 = vmatprep.subr.mxu0 0.0
    %1036 = vmatpush1.msra.mxu0 0.0
    %1037 = vmatprep.subr.mxu0 0.0
    %1038 = vmatpush1.msra.mxu0 0.0
    %1039 = vmatprep.subr.mxu0 0.0
    %1040 = vmatpush1.msra.mxu0 0.0
    %1041 = vmatprep.subr.mxu0 0.0
    %1042 = vmatpush1.msra.mxu0 0.0
    %1043 = vmatprep.subr.mxu0 0.0
    %1044 = vmatpush1.msra.mxu0 %v1023
    %1045 = vmatprep.subr.mxu0 0.0
    %1046 = vmatpush1.msra.mxu0 %v1022
    %1047 = vmatprep.subr.mxu0 0.0
    %1048 = vmatpush1.msra.mxu0 %v1021
    %1049 = vmatprep.subr.mxu0 0.0
    %1050 = vmatpush1.msra.mxu0 %v1020
    %1051 = vmatprep.subr.mxu0 0.0
    %1052 = vmatpush1.msra.mxu0 %v1019
    %1053 = vmatprep.subr.mxu0 0.0
    %1054 = vmatpush1.msra.mxu0 %v1018
    %1055 = vmatprep.subr.mxu0 0.0
    %1056 = vmatpush1.msra.mxu0 %v1017
    %1057 = vmatprep.subr.mxu0 0.0
    %1058 = vmatpush1.msra.mxu0 %v1016
    %1059 = vmatprep.subr.mxu0 0.0
    %1060 = vmatpush2.msra.mxu0 0.0
    %1061 = vmatprep.subr.mxu0 0.0
    %1062 = vmatpush2.msra.mxu0 0.0
    %1063 = vmatprep.subr.mxu0 0.0
    %1064 = vmatpush2.msra.mxu0 0.0
    %1065 = vmatprep.subr.mxu0 0.0
    %1066 = vmatpush2.msra.mxu0 0.0
    %1067 = vmatprep.subr.mxu0 0.0
    %1068 = vmatpush2.msra.mxu0 0.0
    %1069 = vmatprep.subr.mxu0 0.0
    %1070 = vmatpush2.msra.mxu0 0.0
    %1071 = vmatprep.subr.mxu0 0.0
    %1072 = vmatpush2.msra.mxu0 0.0
    %1073 = vmatprep.subr.mxu0 0.0
    %1074 = vmatpush2.msra.mxu0 0.0
    %1075 = vmatprep.subr.mxu0 0.0
    %1076 = vmatpush2.msra.mxu0 0.0
    %1077 = vmatprep.subr.mxu0 0.0
    %1078 = vmatpush2.msra.mxu0 0.0
    %1079 = vmatprep.subr.mxu0 0.0
    %1080 = vmatpush2.msra.mxu0 0.0
    %1081 = vmatprep.subr.mxu0 0.0
    %1082 = vmatpush2.msra.mxu0 0.0
    %1083 = vmatprep.subr.mxu0 0.0
    %1084 = vmatpush2.msra.mxu0 0.0
    %1085 = vmatprep.subr.mxu0 0.0
    %1086 = vmatpush2.msra.mxu0 0.0
    %1087 = vmatprep.subr.mxu0 0.0
    %1088 = vmatpush2.msra.mxu0 0.0
    %1089 = vmatprep.subr.mxu0 0.0
    %1090 = vmatpush2.msra.mxu0 0.0
    %1091 = vmatprep.mubr.f32.mxu0 0.0
    %1092 = vmatmul.mubr.f32.gmra.mxu0 %v1025
    %v1093 = vpop.f32.mrf.mxu0
    %v1094 = vadd.f32 0.0, %v1093
    %v1095 = vpop.f32.mrf.mxu0
    %1096 = vdwg.mxu0
    %v1097 = vadd.f32 %v1012, %v1094
    %v1098 = vmax.f32 %v1097, 0.0
    %v1100 = vsel %vm245, %v799, 0
    %1102 = vmatprep.subr.mxu0 0.0
    %1103 = vmatpush1.msra.mxu0 0.0
    %1104 = vmatprep.subr.mxu0 0.0
    %1105 = vmatpush1.msra.mxu0 0.0
    %1106 = vmatprep.subr.mxu0 0.0
    %1107 = vmatpush1.msra.mxu0 0.0
    %1108 = vmatprep.subr.mxu0 0.0
    %1109 = vmatpush1.msra.mxu0 0.0
    %1110 = vmatprep.subr.mxu0 0.0
    %1111 = vmatpush1.msra.mxu0 0.0
    %1112 = vmatprep.subr.mxu0 0.0
    %1113 = vmatpush1.msra.mxu0 0.0
    %1114 = vmatprep.subr.mxu0 0.0
    %1115 = vmatpush1.msra.mxu0 0.0
    %1116 = vmatprep.subr.mxu0 0.0
    %1117 = vmatpush1.msra.mxu0 0.0
    %1118 = vmatprep.subr.mxu0 0.0
    %1119 = vmatpush1.msra.mxu0 %v244
    %1120 = vmatprep.subr.mxu0 0.0
    %1121 = vmatpush1.msra.mxu0 %v243
    %1122 = vmatprep.subr.mxu0 0.0
    %1123 = vmatpush1.msra.mxu0 %v242
    %1124 = vmatprep.subr.mxu0 0.0
    %1125 = vmatpush1.msra.mxu0 %v241
    %1126 = vmatprep.subr.mxu0 0.0
    %1127 = vmatpush1.msra.mxu0 %v240
    %1128 = vmatprep.subr.mxu0 0.0
    %1129 = vmatpush1.msra.mxu0 %v239
    %1130 = vmatprep.subr.mxu0 0.0
    %1131 = vmatpush1.msra.mxu0 %v238
    %1132 = vmatprep.subr.mxu0 0.0
    %1133 = vmatpush1.msra.mxu0 %v237
    %1134 = vmatprep.subr.mxu0 0.0
    %1135 = vmatpush2.msra.mxu0 0.0
    %1136 = vmatprep.subr.mxu0 0.0
    %1137 = vmatpush2.msra.mxu0 0.0
    %1138 = vmatprep.subr.mxu0 0.0
    %1139 = vmatpush2.msra.mxu0 0.0
    %1140 = vmatprep.subr.mxu0 0.0
    %1141 = vmatpush2.msra.mxu0 0.0
    %1142 = vmatprep.subr.mxu0 0.0
    %1143 = vmatpush2.msra.mxu0 0.0
    %1144 = vmatprep.subr.mxu0 0.0
    %1145 = vmatpush2.msra.mxu0 0.0
    %1146 = vmatprep.subr.mxu0 0.0
    %1147 = vmatpush2.msra.mxu0 0.0
    %1148 = vmatprep.subr.mxu0 0.0
    %1149 = vmatpush2.msra.mxu0 0.0
    %1150 = vmatprep.subr.mxu0 0.0
    %1151 = vmatpush2.msra.mxu0 0.0
    %1152 = vmatprep.subr.mxu0 0.0
    %1153 = vmatpush2.msra.mxu0 0.0
    %1154 = vmatprep.subr.mxu0 0.0
    %1155 = vmatpush2.msra.mxu0 0.0
    %1156 = vmatprep.subr.mxu0 0.0
    %1157 = vmatpush2.msra.mxu0 0.0
    %1158 = vmatprep.subr.mxu0 0.0
    %1159 = vmatpush2.msra.mxu0 0.0
    %1160 = vmatprep.subr.mxu0 0.0
    %1161 = vmatpush2.msra.mxu0 0.0
    %1162 = vmatprep.subr.mxu0 0.0
    %1163 = vmatpush2.msra.mxu0 0.0
    %1164 = vmatprep.subr.mxu0 0.0
    %1165 = vmatpush2.msra.mxu0 0.0
    %1166 = vmatprep.mubr.f32.mxu0 0.0
    %1167 = vmatmul.mubr.f32.gmra.mxu0 %v1100
    %v1168 = vpop.f32.mrf.mxu0
    %v1169 = vadd.f32 0.0, %v1168
    %v1170 = vpop.f32.mrf.mxu0
    %1171 = vdwg.mxu0
    %v1172 = vadd.f32 %v232, %v1169
    %v1173 = vmax.f32 %v1172, 0.0
    %1174 = vmatprep.subr.mxu0 0.0
    %1175 = vmatpush1.msra.mxu0 0.0
    %1176 = vmatprep.subr.mxu0 0.0
    %1177 = vmatpush1.msra.mxu0 0.0
    %1178 = vmatprep.subr.mxu0 0.0
    %1179 = vmatpush1.msra.mxu0 0.0
    %1180 = vmatprep.subr.mxu0 0.0
    %1181 = vmatpush1.msra.mxu0 0.0
    %1182 = vmatprep.subr.mxu0 0.0
    %1183 = vmatpush1.msra.mxu0 0.0
    %1184 = vmatprep.subr.mxu0 0.0
    %1185 = vmatpush1.msra.mxu0 0.0
    %1186 = vmatprep.subr.mxu0 0.0
    %1187 = vmatpush1.msra.mxu0 0.0
    %1188 = vmatprep.subr.mxu0 0.0
    %1189 = vmatpush1.msra.mxu0 0.0
    %1190 = vmatprep.subr.mxu0 0.0
    %1191 = vmatpush1.msra.mxu0 %v328
    %1192 = vmatprep.subr.mxu0 0.0
    %1193 = vmatpush1.msra.mxu0 %v327
    %1194 = vmatprep.subr.mxu0 0.0
    %1195 = vmatpush1.msra.mxu0 %v326
    %1196 = vmatprep.subr.mxu0 0.0
    %1197 = vmatpush1.msra.mxu0 %v325
    %1198 = vmatprep.subr.mxu0 0.0
    %1199 = vmatpush1.msra.mxu0 %v324
    %1200 = vmatprep.subr.mxu0 0.0
    %1201 = vmatpush1.msra.mxu0 %v323
    %1202 = vmatprep.subr.mxu0 0.0
    %1203 = vmatpush1.msra.mxu0 %v322
    %1204 = vmatprep.subr.mxu0 0.0
    %1205 = vmatpush1.msra.mxu0 %v321
    %1206 = vmatprep.subr.mxu0 0.0
    %1207 = vmatpush2.msra.mxu0 0.0
    %1208 = vmatprep.subr.mxu0 0.0
    %1209 = vmatpush2.msra.mxu0 0.0
    %1210 = vmatprep.subr.mxu0 0.0
    %1211 = vmatpush2.msra.mxu0 0.0
    %1212 = vmatprep.subr.mxu0 0.0
    %1213 = vmatpush2.msra.mxu0 0.0
    %1214 = vmatprep.subr.mxu0 0.0
    %1215 = vmatpush2.msra.mxu0 0.0
    %1216 = vmatprep.subr.mxu0 0.0
    %1217 = vmatpush2.msra.mxu0 0.0
    %1218 = vmatprep.subr.mxu0 0.0
    %1219 = vmatpush2.msra.mxu0 0.0
    %1220 = vmatprep.subr.mxu0 0.0
    %1221 = vmatpush2.msra.mxu0 0.0
    %1222 = vmatprep.subr.mxu0 0.0
    %1223 = vmatpush2.msra.mxu0 0.0
    %1224 = vmatprep.subr.mxu0 0.0
    %1225 = vmatpush2.msra.mxu0 0.0
    %1226 = vmatprep.subr.mxu0 0.0
    %1227 = vmatpush2.msra.mxu0 0.0
    %1228 = vmatprep.subr.mxu0 0.0
    %1229 = vmatpush2.msra.mxu0 0.0
    %1230 = vmatprep.subr.mxu0 0.0
    %1231 = vmatpush2.msra.mxu0 0.0
    %1232 = vmatprep.subr.mxu0 0.0
    %1233 = vmatpush2.msra.mxu0 0.0
    %1234 = vmatprep.subr.mxu0 0.0
    %1235 = vmatpush2.msra.mxu0 0.0
    %1236 = vmatprep.subr.mxu0 0.0
    %1237 = vmatpush2.msra.mxu0 0.0
    %1238 = vmatprep.mubr.f32.mxu0 0.0
    %1239 = vmatmul.mubr.f32.gmra.mxu0 %v1100
    %v1240 = vpop.f32.mrf.mxu0
    %v1241 = vadd.f32 %v335, %v1240
    %v1242 = vpop.f32.mrf.mxu0
    %1243 = vdwg.mxu0
    %v1245 = vsel %vm245, %v944, 0
    %1247 = vmatprep.subr.mxu0 0.0
    %1248 = vmatpush1.msra.mxu0 0.0
    %1249 = vmatprep.subr.mxu0 0.0
    %1250 = vmatpush1.msra.mxu0 0.0
    %1251 = vmatprep.subr.mxu0 0.0
    %1252 = vmatpush1.msra.mxu0 0.0
    %1253 = vmatprep.subr.mxu0 0.0
    %1254 = vmatpush1.msra.mxu0 0.0
    %1255 = vmatprep.subr.mxu0 0.0
    %1256 = vmatpush1.msra.mxu0 0.0
    %1257 = vmatprep.subr.mxu0 0.0
    %1258 = vmatpush1.msra.mxu0 0.0
    %1259 = vmatprep.subr.mxu0 0.0
    %1260 = vmatpush1.msra.mxu0 0.0
    %1261 = vmatprep.subr.mxu0 0.0
    %1262 = vmatpush1.msra.mxu0 0.0
    %1263 = vmatprep.subr.mxu0 0.0
    %1264 = vmatpush1.msra.mxu0 %v561
    %1265 = vmatprep.subr.mxu0 0.0
    %1266 = vmatpush1.msra.mxu0 %v560
    %1267 = vmatprep.subr.mxu0 0.0
    %1268 = vmatpush1.msra.mxu0 %v559
    %1269 = vmatprep.subr.mxu0 0.0
    %1270 = vmatpush1.msra.mxu0 %v558
    %1271 = vmatprep.subr.mxu0 0.0
    %1272 = vmatpush1.msra.mxu0 %v557
    %1273 = vmatprep.subr.mxu0 0.0
    %1274 = vmatpush1.msra.mxu0 %v556
    %1275 = vmatprep.subr.mxu0 0.0
    %1276 = vmatpush1.msra.mxu0 %v555
    %1277 = vmatprep.subr.mxu0 0.0
    %1278 = vmatpush1.msra.mxu0 %v554
    %1279 = vmatprep.subr.mxu0 0.0
    %1280 = vmatpush2.msra.mxu0 0.0
    %1281 = vmatprep.subr.mxu0 0.0
    %1282 = vmatpush2.msra.mxu0 0.0
    %1283 = vmatprep.subr.mxu0 0.0
    %1284 = vmatpush2.msra.mxu0 0.0
    %1285 = vmatprep.subr.mxu0 0.0
    %1286 = vmatpush2.msra.mxu0 0.0
    %1287 = vmatprep.subr.mxu0 0.0
    %1288 = vmatpush2.msra.mxu0 0.0
    %1289 = vmatprep.subr.mxu0 0.0
    %1290 = vmatpush2.msra.mxu0 0.0
    %1291 = vmatprep.subr.mxu0 0.0
    %1292 = vmatpush2.msra.mxu0 0.0
    %1293 = vmatprep.subr.mxu0 0.0
    %1294 = vmatpush2.msra.mxu0 0.0
    %1295 = vmatprep.subr.mxu0 0.0
    %1296 = vmatpush2.msra.mxu0 0.0
    %1297 = vmatprep.subr.mxu0 0.0
    %1298 = vmatpush2.msra.mxu0 0.0
    %1299 = vmatprep.subr.mxu0 0.0
    %1300 = vmatpush2.msra.mxu0 0.0
    %1301 = vmatprep.subr.mxu0 0.0
    %1302 = vmatpush2.msra.mxu0 0.0
    %1303 = vmatprep.subr.mxu0 0.0
    %1304 = vmatpush2.msra.mxu0 0.0
    %1305 = vmatprep.subr.mxu0 0.0
    %1306 = vmatpush2.msra.mxu0 0.0
    %1307 = vmatprep.subr.mxu0 0.0
    %1308 = vmatpush2.msra.mxu0 0.0
    %1309 = vmatprep.subr.mxu0 0.0
    %1310 = vmatpush2.msra.mxu0 0.0
    %1311 = vmatprep.mubr.f32.mxu0 0.0
    %1312 = vmatmul.mubr.f32.gmra.mxu0 %v1245
    %v1313 = vpop.f32.mrf.mxu0
    %v1314 = vadd.f32 0.0, %v1313
    %v1315 = vpop.f32.mrf.mxu0
    %1316 = vdwg.mxu0
    %v1317 = vadd.f32 %v1241, %v1314
    %v1318 = vmax.f32 %v1317, 0.0
    %1319 = vmatprep.subr.mxu0 0.0
    %1320 = vmatpush1.msra.mxu0 0.0
    %1321 = vmatprep.subr.mxu0 0.0
    %1322 = vmatpush1.msra.mxu0 0.0
    %1323 = vmatprep.subr.mxu0 0.0
    %1324 = vmatpush1.msra.mxu0 0.0
    %1325 = vmatprep.subr.mxu0 0.0
    %1326 = vmatpush1.msra.mxu0 0.0
    %1327 = vmatprep.subr.mxu0 0.0
    %1328 = vmatpush1.msra.mxu0 0.0
    %1329 = vmatprep.subr.mxu0 0.0
    %1330 = vmatpush1.msra.mxu0 0.0
    %1331 = vmatprep.subr.mxu0 0.0
    %1332 = vmatpush1.msra.mxu0 0.0
    %1333 = vmatprep.subr.mxu0 0.0
    %1334 = vmatpush1.msra.mxu0 0.0
    %1335 = vmatprep.subr.mxu0 0.0
    %1336 = vmatpush1.msra.mxu0 %v645
    %1337 = vmatprep.subr.mxu0 0.0
    %1338 = vmatpush1.msra.mxu0 %v644
    %1339 = vmatprep.subr.mxu0 0.0
    %1340 = vmatpush1.msra.mxu0 %v643
    %1341 = vmatprep.subr.mxu0 0.0
    %1342 = vmatpush1.msra.mxu0 %v642
    %1343 = vmatprep.subr.mxu0 0.0
    %1344 = vmatpush1.msra.mxu0 %v641
    %1345 = vmatprep.subr.mxu0 0.0
    %1346 = vmatpush1.msra.mxu0 %v640
    %1347 = vmatprep.subr.mxu0 0.0
    %1348 = vmatpush1.msra.mxu0 %v639
    %1349 = vmatprep.subr.mxu0 0.0
    %1350 = vmatpush1.msra.mxu0 %v638
    %1351 = vmatprep.subr.mxu0 0.0
    %1352 = vmatpush2.msra.mxu0 0.0
    %1353 = vmatprep.subr.mxu0 0.0
    %1354 = vmatpush2.msra.mxu0 0.0
    %1355 = vmatprep.subr.mxu0 0.0
    %1356 = vmatpush2.msra.mxu0 0.0
    %1357 = vmatprep.subr.mxu0 0.0
    %1358 = vmatpush2.msra.mxu0 0.0
    %1359 = vmatprep.subr.mxu0 0.0
    %1360 = vmatpush2.msra.mxu0 0.0
    %1361 = vmatprep.subr.mxu0 0.0
    %1362 = vmatpush2.msra.mxu0 0.0
    %1363 = vmatprep.subr.mxu0 0.0
    %1364 = vmatpush2.msra.mxu0 0.0
    %1365 = vmatprep.subr.mxu0 0.0
    %1366 = vmatpush2.msra.mxu0 0.0
    %1367 = vmatprep.subr.mxu0 0.0
    %1368 = vmatpush2.msra.mxu0 0.0
    %1369 = vmatprep.subr.mxu0 0.0
    %1370 = vmatpush2.msra.mxu0 0.0
    %1371 = vmatprep.subr.mxu0 0.0
    %1372 = vmatpush2.msra.mxu0 0.0
    %1373 = vmatprep.subr.mxu0 0.0
    %1374 = vmatpush2.msra.mxu0 0.0
    %1375 = vmatprep.subr.mxu0 0.0
    %1376 = vmatpush2.msra.mxu0 0.0
    %1377 = vmatprep.subr.mxu0 0.0
    %1378 = vmatpush2.msra.mxu0 0.0
    %1379 = vmatprep.subr.mxu0 0.0
    %1380 = vmatpush2.msra.mxu0 0.0
    %1381 = vmatprep.subr.mxu0 0.0
    %1382 = vmatpush2.msra.mxu0 0.0
    %1383 = vmatprep.mubr.f32.mxu0 0.0
    %1384 = vmatmul.mubr.f32.gmra.mxu0 %v1245
    %v1385 = vpop.f32.mrf.mxu0
    %v1386 = vadd.f32 %v652, %v1385
    %v1387 = vpop.f32.mrf.mxu0
    %1388 = vdwg.mxu0
    %v1390 = vsel %vm245, %v1098, 0
    %1392 = vmatprep.subr.mxu0 0.0
    %1393 = vmatpush1.msra.mxu0 0.0
    %1394 = vmatprep.subr.mxu0 0.0
    %1395 = vmatpush1.msra.mxu0 0.0
    %1396 = vmatprep.subr.mxu0 0.0
    %1397 = vmatpush1.msra.mxu0 0.0
    %1398 = vmatprep.subr.mxu0 0.0
    %1399 = vmatpush1.msra.mxu0 0.0
    %1400 = vmatprep.subr.mxu0 0.0
    %1401 = vmatpush1.msra.mxu0 0.0
    %1402 = vmatprep.subr.mxu0 0.0
    %1403 = vmatpush1.msra.mxu0 0.0
    %1404 = vmatprep.subr.mxu0 0.0
    %1405 = vmatpush1.msra.mxu0 0.0
    %1406 = vmatprep.subr.mxu0 0.0
    %1407 = vmatpush1.msra.mxu0 0.0
    %1408 = vmatprep.subr.mxu0 0.0
    %1409 = vmatpush1.msra.mxu0 %v1023
    %1410 = vmatprep.subr.mxu0 0.0
    %1411 = vmatpush1.msra.mxu0 %v1022
    %1412 = vmatprep.subr.mxu0 0.0
    %1413 = vmatpush1.msra.mxu0 %v1021
    %1414 = vmatprep.subr.mxu0 0.0
    %1415 = vmatpush1.msra.mxu0 %v1020
    %1416 = vmatprep.subr.mxu0 0.0
    %1417 = vmatpush1.msra.mxu0 %v1019
    %1418 = vmatprep.subr.mxu0 0.0
    %1419 = vmatpush1.msra.mxu0 %v1018
    %1420 = vmatprep.subr.mxu0 0.0
    %1421 = vmatpush1.msra.mxu0 %v1017
    %1422 = vmatprep.subr.mxu0 0.0
    %1423 = vmatpush1.msra.mxu0 %v1016
    %1424 = vmatprep.subr.mxu0 0.0
    %1425 = vmatpush2.msra.mxu0 0.0
    %1426 = vmatprep.subr.mxu0 0.0
    %1427 = vmatpush2.msra.mxu0 0.0
    %1428 = vmatprep.subr.mxu0 0.0
    %1429 = vmatpush2.msra.mxu0 0.0
    %1430 = vmatprep.subr.mxu0 0.0
    %1431 = vmatpush2.msra.mxu0 0.0
    %1432 = vmatprep.subr.mxu0 0.0
    %1433 = vmatpush2.msra.mxu0 0.0
    %1434 = vmatprep.subr.mxu0 0.0
    %1435 = vmatpush2.msra.mxu0 0.0
    %1436 = vmatprep.subr.mxu0 0.0
    %1437 = vmatpush2.msra.mxu0 0.0
    %1438 = vmatprep.subr.mxu0 0.0
    %1439 = vmatpush2.msra.mxu0 0.0
    %1440 = vmatprep.subr.mxu0 0.0
    %1441 = vmatpush2.msra.mxu0 0.0
    %1442 = vmatprep.subr.mxu0 0.0
    %1443 = vmatpush2.msra.mxu0 0.0
    %1444 = vmatprep.subr.mxu0 0.0
    %1445 = vmatpush2.msra.mxu0 0.0
    %1446 = vmatprep.subr.mxu0 0.0
    %1447 = vmatpush2.msra.mxu0 0.0
    %1448 = vmatprep.subr.mxu0 0.0
    %1449 = vmatpush2.msra.mxu0 0.0
    %1450 = vmatprep.subr.mxu0 0.0
    %1451 = vmatpush2.msra.mxu0 0.0
    %1452 = vmatprep.subr.mxu0 0.0
    %1453 = vmatpush2.msra.mxu0 0.0
    %1454 = vmatprep.subr.mxu0 0.0
    %1455 = vmatpush2.msra.mxu0 0.0
    %1456 = vmatprep.mubr.f32.mxu0 0.0
    %1457 = vmatmul.mubr.f32.gmra.mxu0 %v1390
    %v1458 = vpop.f32.mrf.mxu0
    %v1459 = vadd.f32 0.0, %v1458
    %v1460 = vpop.f32.mrf.mxu0
    %1461 = vdwg.mxu0
    %v1462 = vadd.f32 %v1386, %v1459
    %v1463 = vmax.f32 %v1462, 0.0
    %v1465 = vsel %vm245, %v1173, 0
    %1467 = vmatprep.subr.mxu0 0.0
    %1468 = vmatpush1.msra.mxu0 0.0
    %1469 = vmatprep.subr.mxu0 0.0
    %1470 = vmatpush1.msra.mxu0 0.0
    %1471 = vmatprep.subr.mxu0 0.0
    %1472 = vmatpush1.msra.mxu0 0.0
    %1473 = vmatprep.subr.mxu0 0.0
    %1474 = vmatpush1.msra.mxu0 0.0
    %1475 = vmatprep.subr.mxu0 0.0
    %1476 = vmatpush1.msra.mxu0 0.0
    %1477 = vmatprep.subr.mxu0 0.0
    %1478 = vmatpush1.msra.mxu0 0.0
    %1479 = vmatprep.subr.mxu0 0.0
    %1480 = vmatpush1.msra.mxu0 0.0
    %1481 = vmatprep.subr.mxu0 0.0
    %1482 = vmatpush1.msra.mxu0 0.0
    %1483 = vmatprep.subr.mxu0 0.0
    %1484 = vmatpush1.msra.mxu0 %v244
    %1485 = vmatprep.subr.mxu0 0.0
    %1486 = vmatpush1.msra.mxu0 %v243
    %1487 = vmatprep.subr.mxu0 0.0
    %1488 = vmatpush1.msra.mxu0 %v242
    %1489 = vmatprep.subr.mxu0 0.0
    %1490 = vmatpush1.msra.mxu0 %v241
    %1491 = vmatprep.subr.mxu0 0.0
    %1492 = vmatpush1.msra.mxu0 %v240
    %1493 = vmatprep.subr.mxu0 0.0
    %1494 = vmatpush1.msra.mxu0 %v239
    %1495 = vmatprep.subr.mxu0 0.0
    %1496 = vmatpush1.msra.mxu0 %v238
    %1497 = vmatprep.subr.mxu0 0.0
    %1498 = vmatpush1.msra.mxu0 %v237
    %1499 = vmatprep.subr.mxu0 0.0
    %1500 = vmatpush2.msra.mxu0 0.0
    %1501 = vmatprep.subr.mxu0 0.0
    %1502 = vmatpush2.msra.mxu0 0.0
    %1503 = vmatprep.subr.mxu0 0.0
    %1504 = vmatpush2.msra.mxu0 0.0
    %1505 = vmatprep.subr.mxu0 0.0
    %1506 = vmatpush2.msra.mxu0 0.0
    %1507 = vmatprep.subr.mxu0 0.0
    %1508 = vmatpush2.msra.mxu0 0.0
    %1509 = vmatprep.subr.mxu0 0.0
    %1510 = vmatpush2.msra.mxu0 0.0
    %1511 = vmatprep.subr.mxu0 0.0
    %1512 = vmatpush2.msra.mxu0 0.0
    %1513 = vmatprep.subr.mxu0 0.0
    %1514 = vmatpush2.msra.mxu0 0.0
    %1515 = vmatprep.subr.mxu0 0.0
    %1516 = vmatpush2.msra.mxu0 0.0
    %1517 = vmatprep.subr.mxu0 0.0
    %1518 = vmatpush2.msra.mxu0 0.0
    %1519 = vmatprep.subr.mxu0 0.0
    %1520 = vmatpush2.msra.mxu0 0.0
    %1521 = vmatprep.subr.mxu0 0.0
    %1522 = vmatpush2.msra.mxu0 0.0
    %1523 = vmatprep.subr.mxu0 0.0
    %1524 = vmatpush2.msra.mxu0 0.0
    %1525 = vmatprep.subr.mxu0 0.0
    %1526 = vmatpush2.msra.mxu0 0.0
    %1527 = vmatprep.subr.mxu0 0.0
    %1528 = vmatpush2.msra.mxu0 0.0
    %1529 = vmatprep.subr.mxu0 0.0
    %1530 = vmatpush2.msra.mxu0 0.0
    %1531 = vmatprep.mubr.f32.mxu0 0.0
    %1532 = vmatmul.mubr.f32.gmra.mxu0 %v1465
    %v1533 = vpop.f32.mrf.mxu0
    %v1534 = vadd.f32 0.0, %v1533
    %v1535 = vpop.f32.mrf.mxu0
    %1536 = vdwg.mxu0
    %v1537 = vadd.f32 %v233, %v1534
    %v1538 = vmax.f32 %v1537, 0.0
    %1539 = vmatprep.subr.mxu0 0.0
    %1540 = vmatpush1.msra.mxu0 0.0
    %1541 = vmatprep.subr.mxu0 0.0
    %1542 = vmatpush1.msra.mxu0 0.0
    %1543 = vmatprep.subr.mxu0 0.0
    %1544 = vmatpush1.msra.mxu0 0.0
    %1545 = vmatprep.subr.mxu0 0.0
    %1546 = vmatpush1.msra.mxu0 0.0
    %1547 = vmatprep.subr.mxu0 0.0
    %1548 = vmatpush1.msra.mxu0 0.0
    %1549 = vmatprep.subr.mxu0 0.0
    %1550 = vmatpush1.msra.mxu0 0.0
    %1551 = vmatprep.subr.mxu0 0.0
    %1552 = vmatpush1.msra.mxu0 0.0
    %1553 = vmatprep.subr.mxu0 0.0
    %1554 = vmatpush1.msra.mxu0 0.0
    %1555 = vmatprep.subr.mxu0 0.0
    %1556 = vmatpush1.msra.mxu0 %v328
    %1557 = vmatprep.subr.mxu0 0.0
    %1558 = vmatpush1.msra.mxu0 %v327
    %1559 = vmatprep.subr.mxu0 0.0
    %1560 = vmatpush1.msra.mxu0 %v326
    %1561 = vmatprep.subr.mxu0 0.0
    %1562 = vmatpush1.msra.mxu0 %v325
    %1563 = vmatprep.subr.mxu0 0.0
    %1564 = vmatpush1.msra.mxu0 %v324
    %1565 = vmatprep.subr.mxu0 0.0
    %1566 = vmatpush1.msra.mxu0 %v323
    %1567 = vmatprep.subr.mxu0 0.0
    %1568 = vmatpush1.msra.mxu0 %v322
    %1569 = vmatprep.subr.mxu0 0.0
    %1570 = vmatpush1.msra.mxu0 %v321
    %1571 = vmatprep.subr.mxu0 0.0
    %1572 = vmatpush2.msra.mxu0 0.0
    %1573 = vmatprep.subr.mxu0 0.0
    %1574 = vmatpush2.msra.mxu0 0.0
    %1575 = vmatprep.subr.mxu0 0.0
    %1576 = vmatpush2.msra.mxu0 0.0
    %1577 = vmatprep.subr.mxu0 0.0
    %1578 = vmatpush2.msra.mxu0 0.0
    %1579 = vmatprep.subr.mxu0 0.0
    %1580 = vmatpush2.msra.mxu0 0.0
    %1581 = vmatprep.subr.mxu0 0.0
    %1582 = vmatpush2.msra.mxu0 0.0
    %1583 = vmatprep.subr.mxu0 0.0
    %1584 = vmatpush2.msra.mxu0 0.0
    %1585 = vmatprep.subr.mxu0 0.0
    %1586 = vmatpush2.msra.mxu0 0.0
    %1587 = vmatprep.subr.mxu0 0.0
    %1588 = vmatpush2.msra.mxu0 0.0
    %1589 = vmatprep.subr.mxu0 0.0
    %1590 = vmatpush2.msra.mxu0 0.0
    %1591 = vmatprep.subr.mxu0 0.0
    %1592 = vmatpush2.msra.mxu0 0.0
    %1593 = vmatprep.subr.mxu0 0.0
    %1594 = vmatpush2.msra.mxu0 0.0
    %1595 = vmatprep.subr.mxu0 0.0
    %1596 = vmatpush2.msra.mxu0 0.0
    %1597 = vmatprep.subr.mxu0 0.0
    %1598 = vmatpush2.msra.mxu0 0.0
    %1599 = vmatprep.subr.mxu0 0.0
    %1600 = vmatpush2.msra.mxu0 0.0
    %1601 = vmatprep.subr.mxu0 0.0
    %1602 = vmatpush2.msra.mxu0 0.0
    %1603 = vmatprep.mubr.f32.mxu0 0.0
    %1604 = vmatmul.mubr.f32.gmra.mxu0 %v1465
    %v1605 = vpop.f32.mrf.mxu0
    %v1606 = vadd.f32 %v335, %v1605
    %v1607 = vpop.f32.mrf.mxu0
    %1608 = vdwg.mxu0
    %v1610 = vsel %vm245, %v1318, 0
    %1612 = vmatprep.subr.mxu0 0.0
    %1613 = vmatpush1.msra.mxu0 0.0
    %1614 = vmatprep.subr.mxu0 0.0
    %1615 = vmatpush1.msra.mxu0 0.0
    %1616 = vmatprep.subr.mxu0 0.0
    %1617 = vmatpush1.msra.mxu0 0.0
    %1618 = vmatprep.subr.mxu0 0.0
    %1619 = vmatpush1.msra.mxu0 0.0
    %1620 = vmatprep.subr.mxu0 0.0
    %1621 = vmatpush1.msra.mxu0 0.0
    %1622 = vmatprep.subr.mxu0 0.0
    %1623 = vmatpush1.msra.mxu0 0.0
    %1624 = vmatprep.subr.mxu0 0.0
    %1625 = vmatpush1.msra.mxu0 0.0
    %1626 = vmatprep.subr.mxu0 0.0
    %1627 = vmatpush1.msra.mxu0 0.0
    %1628 = vmatprep.subr.mxu0 0.0
    %1629 = vmatpush1.msra.mxu0 %v561
    %1630 = vmatprep.subr.mxu0 0.0
    %1631 = vmatpush1.msra.mxu0 %v560
    %1632 = vmatprep.subr.mxu0 0.0
    %1633 = vmatpush1.msra.mxu0 %v559
    %1634 = vmatprep.subr.mxu0 0.0
    %1635 = vmatpush1.msra.mxu0 %v558
    %1636 = vmatprep.subr.mxu0 0.0
    %1637 = vmatpush1.msra.mxu0 %v557
    %1638 = vmatprep.subr.mxu0 0.0
    %1639 = vmatpush1.msra.mxu0 %v556
    %1640 = vmatprep.subr.mxu0 0.0
    %1641 = vmatpush1.msra.mxu0 %v555
    %1642 = vmatprep.subr.mxu0 0.0
    %1643 = vmatpush1.msra.mxu0 %v554
    %1644 = vmatprep.subr.mxu0 0.0
    %1645 = vmatpush2.msra.mxu0 0.0
    %1646 = vmatprep.subr.mxu0 0.0
    %1647 = vmatpush2.msra.mxu0 0.0
    %1648 = vmatprep.subr.mxu0 0.0
    %1649 = vmatpush2.msra.mxu0 0.0
    %1650 = vmatprep.subr.mxu0 0.0
    %1651 = vmatpush2.msra.mxu0 0.0
    %1652 = vmatprep.subr.mxu0 0.0
    %1653 = vmatpush2.msra.mxu0 0.0
    %1654 = vmatprep.subr.mxu0 0.0
    %1655 = vmatpush2.msra.mxu0 0.0
    %1656 = vmatprep.subr.mxu0 0.0
    %1657 = vmatpush2.msra.mxu0 0.0
    %1658 = vmatprep.subr.mxu0 0.0
    %1659 = vmatpush2.msra.mxu0 0.0
    %1660 = vmatprep.subr.mxu0 0.0
    %1661 = vmatpush2.msra.mxu0 0.0
    %1662 = vmatprep.subr.mxu0 0.0
    %1663 = vmatpush2.msra.mxu0 0.0
    %1664 = vmatprep.subr.mxu0 0.0
    %1665 = vmatpush2.msra.mxu0 0.0
    %1666 = vmatprep.subr.mxu0 0.0
    %1667 = vmatpush2.msra.mxu0 0.0
    %1668 = vmatprep.subr.mxu0 0.0
    %1669 = vmatpush2.msra.mxu0 0.0
    %1670 = vmatprep.subr.mxu0 0.0
    %1671 = vmatpush2.msra.mxu0 0.0
    %1672 = vmatprep.subr.mxu0 0.0
    %1673 = vmatpush2.msra.mxu0 0.0
    %1674 = vmatprep.subr.mxu0 0.0
    %1675 = vmatpush2.msra.mxu0 0.0
    %1676 = vmatprep.mubr.f32.mxu0 0.0
    %1677 = vmatmul.mubr.f32.gmra.mxu0 %v1610
    %v1678 = vpop.f32.mrf.mxu0
    %v1679 = vadd.f32 0.0, %v1678
    %v1680 = vpop.f32.mrf.mxu0
    %1681 = vdwg.mxu0
    %v1682 = vadd.f32 %v1606, %v1679
    %v1683 = vmax.f32 %v1682, 0.0
    %1684 = vmatprep.subr.mxu0 0.0
    %1685 = vmatpush1.msra.mxu0 0.0
    %1686 = vmatprep.subr.mxu0 0.0
    %1687 = vmatpush1.msra.mxu0 0.0
    %1688 = vmatprep.subr.mxu0 0.0
    %1689 = vmatpush1.msra.mxu0 0.0
    %1690 = vmatprep.subr.mxu0 0.0
    %1691 = vmatpush1.msra.mxu0 0.0
    %1692 = vmatprep.subr.mxu0 0.0
    %1693 = vmatpush1.msra.mxu0 0.0
    %1694 = vmatprep.subr.mxu0 0.0
    %1695 = vmatpush1.msra.mxu0 0.0
    %1696 = vmatprep.subr.mxu0 0.0
    %1697 = vmatpush1.msra.mxu0 0.0
    %1698 = vmatprep.subr.mxu0 0.0
    %1699 = vmatpush1.msra.mxu0 0.0
    %1700 = vmatprep.subr.mxu0 0.0
    %1701 = vmatpush1.msra.mxu0 %v645
    %1702 = vmatprep.subr.mxu0 0.0
    %1703 = vmatpush1.msra.mxu0 %v644
    %1704 = vmatprep.subr.mxu0 0.0
    %1705 = vmatpush1.msra.mxu0 %v643
    %1706 = vmatprep.subr.mxu0 0.0
    %1707 = vmatpush1.msra.mxu0 %v642
    %1708 = vmatprep.subr.mxu0 0.0
    %1709 = vmatpush1.msra.mxu0 %v641
    %1710 = vmatprep.subr.mxu0 0.0
    %1711 = vmatpush1.msra.mxu0 %v640
    %1712 = vmatprep.subr.mxu0 0.0
    %1713 = vmatpush1.msra.mxu0 %v639
    %1714 = vmatprep.subr.mxu0 0.0
    %1715 = vmatpush1.msra.mxu0 %v638
    %1716 = vmatprep.subr.mxu0 0.0
    %1717 = vmatpush2.msra.mxu0 0.0
    %1718 = vmatprep.subr.mxu0 0.0
    %1719 = vmatpush2.msra.mxu0 0.0
    %1720 = vmatprep.subr.mxu0 0.0
    %1721 = vmatpush2.msra.mxu0 0.0
    %1722 = vmatprep.subr.mxu0 0.0
    %1723 = vmatpush2.msra.mxu0 0.0
    %1724 = vmatprep.subr.mxu0 0.0
    %1725 = vmatpush2.msra.mxu0 0.0
    %1726 = vmatprep.subr.mxu0 0.0
    %1727 = vmatpush2.msra.mxu0 0.0
    %1728 = vmatprep.subr.mxu0 0.0
    %1729 = vmatpush2.msra.mxu0 0.0
    %1730 = vmatprep.subr.mxu0 0.0
    %1731 = vmatpush2.msra.mxu0 0.0
    %1732 = vmatprep.subr.mxu0 0.0
    %1733 = vmatpush2.msra.mxu0 0.0
    %1734 = vmatprep.subr.mxu0 0.0
    %1735 = vmatpush2.msra.mxu0 0.0
    %1736 = vmatprep.subr.mxu0 0.0
    %1737 = vmatpush2.msra.mxu0 0.0
    %1738 = vmatprep.subr.mxu0 0.0
    %1739 = vmatpush2.msra.mxu0 0.0
    %1740 = vmatprep.subr.mxu0 0.0
    %1741 = vmatpush2.msra.mxu0 0.0
    %1742 = vmatprep.subr.mxu0 0.0
    %1743 = vmatpush2.msra.mxu0 0.0
    %1744 = vmatprep.subr.mxu0 0.0
    %1745 = vmatpush2.msra.mxu0 0.0
    %1746 = vmatprep.subr.mxu0 0.0
    %1747 = vmatpush2.msra.mxu0 0.0
    %1748 = vmatprep.mubr.f32.mxu0 0.0
    %1749 = vmatmul.mubr.f32.gmra.mxu0 %v1610
    %v1750 = vpop.f32.mrf.mxu0
    %v1751 = vadd.f32 %v652, %v1750
    %v1752 = vpop.f32.mrf.mxu0
    %1753 = vdwg.mxu0
    %v1755 = vsel %vm245, %v1463, 0
    %1757 = vmatprep.subr.mxu0 0.0
    %1758 = vmatpush1.msra.mxu0 0.0
    %1759 = vmatprep.subr.mxu0 0.0
    %1760 = vmatpush1.msra.mxu0 0.0
    %1761 = vmatprep.subr.mxu0 0.0
    %1762 = vmatpush1.msra.mxu0 0.0
    %1763 = vmatprep.subr.mxu0 0.0
    %1764 = vmatpush1.msra.mxu0 0.0
    %1765 = vmatprep.subr.mxu0 0.0
    %1766 = vmatpush1.msra.mxu0 0.0
    %1767 = vmatprep.subr.mxu0 0.0
    %1768 = vmatpush1.msra.mxu0 0.0
    %1769 = vmatprep.subr.mxu0 0.0
    %1770 = vmatpush1.msra.mxu0 0.0
    %1771 = vmatprep.subr.mxu0 0.0
    %1772 = vmatpush1.msra.mxu0 0.0
    %1773 = vmatprep.subr.mxu0 0.0
    %1774 = vmatpush1.msra.mxu0 %v1023
    %1775 = vmatprep.subr.mxu0 0.0
    %1776 = vmatpush1.msra.mxu0 %v1022
    %1777 = vmatprep.subr.mxu0 0.0
    %1778 = vmatpush1.msra.mxu0 %v1021
    %1779 = vmatprep.subr.mxu0 0.0
    %1780 = vmatpush1.msra.mxu0 %v1020
    %1781 = vmatprep.subr.mxu0 0.0
    %1782 = vmatpush1.msra.mxu0 %v1019
    %1783 = vmatprep.subr.mxu0 0.0
    %1784 = vmatpush1.msra.mxu0 %v1018
    %1785 = vmatprep.subr.mxu0 0.0
    %1786 = vmatpush1.msra.mxu0 %v1017
    %1787 = vmatprep.subr.mxu0 0.0
    %1788 = vmatpush1.msra.mxu0 %v1016
    %1789 = vmatprep.subr.mxu0 0.0
    %1790 = vmatpush2.msra.mxu0 0.0
    %1791 = vmatprep.subr.mxu0 0.0
    %1792 = vmatpush2.msra.mxu0 0.0
    %1793 = vmatprep.subr.mxu0 0.0
    %1794 = vmatpush2.msra.mxu0 0.0
    %1795 = vmatprep.subr.mxu0 0.0
    %1796 = vmatpush2.msra.mxu0 0.0
    %1797 = vmatprep.subr.mxu0 0.0
    %1798 = vmatpush2.msra.mxu0 0.0
    %1799 = vmatprep.subr.mxu0 0.0
    %1800 = vmatpush2.msra.mxu0 0.0
    %1801 = vmatprep.subr.mxu0 0.0
    %1802 = vmatpush2.msra.mxu0 0.0
    %1803 = vmatprep.subr.mxu0 0.0
    %1804 = vmatpush2.msra.mxu0 0.0
    %1805 = vmatprep.subr.mxu0 0.0
    %1806 = vmatpush2.msra.mxu0 0.0
    %1807 = vmatprep.subr.mxu0 0.0
    %1808 = vmatpush2.msra.mxu0 0.0
    %1809 = vmatprep.subr.mxu0 0.0
    %1810 = vmatpush2.msra.mxu0 0.0
    %1811 = vmatprep.subr.mxu0 0.0
    %1812 = vmatpush2.msra.mxu0 0.0
    %1813 = vmatprep.subr.mxu0 0.0
    %1814 = vmatpush2.msra.mxu0 0.0
    %1815 = vmatprep.subr.mxu0 0.0
    %1816 = vmatpush2.msra.mxu0 0.0
    %1817 = vmatprep.subr.mxu0 0.0
    %1818 = vmatpush2.msra.mxu0 0.0
    %1819 = vmatprep.subr.mxu0 0.0
    %1820 = vmatpush2.msra.mxu0 0.0
    %1821 = vmatprep.mubr.f32.mxu0 0.0
    %1822 = vmatmul.mubr.f32.gmra.mxu0 %v1755
    %v1823 = vpop.f32.mrf.mxu0
    %v1824 = vadd.f32 0.0, %v1823
    %v1825 = vpop.f32.mrf.mxu0
    %1826 = vdwg.mxu0
    %v1827 = vadd.f32 %v1751, %v1824
    %v1828 = vmax.f32 %v1827, 0.0
    %v1830 = vsel %vm245, %v1538, 0
    %1832 = vmatprep.subr.mxu0 0.0
    %1833 = vmatpush1.msra.mxu0 0.0
    %1834 = vmatprep.subr.mxu0 0.0
    %1835 = vmatpush1.msra.mxu0 0.0
    %1836 = vmatprep.subr.mxu0 0.0
    %1837 = vmatpush1.msra.mxu0 0.0
    %1838 = vmatprep.subr.mxu0 0.0
    %1839 = vmatpush1.msra.mxu0 0.0
    %1840 = vmatprep.subr.mxu0 0.0
    %1841 = vmatpush1.msra.mxu0 0.0
    %1842 = vmatprep.subr.mxu0 0.0
    %1843 = vmatpush1.msra.mxu0 0.0
    %1844 = vmatprep.subr.mxu0 0.0
    %1845 = vmatpush1.msra.mxu0 0.0
    %1846 = vmatprep.subr.mxu0 0.0
    %1847 = vmatpush1.msra.mxu0 0.0
    %1848 = vmatprep.subr.mxu0 0.0
    %1849 = vmatpush1.msra.mxu0 %v244
    %1850 = vmatprep.subr.mxu0 0.0
    %1851 = vmatpush1.msra.mxu0 %v243
    %1852 = vmatprep.subr.mxu0 0.0
    %1853 = vmatpush1.msra.mxu0 %v242
    %1854 = vmatprep.subr.mxu0 0.0
    %1855 = vmatpush1.msra.mxu0 %v241
    %1856 = vmatprep.subr.mxu0 0.0
    %1857 = vmatpush1.msra.mxu0 %v240
    %1858 = vmatprep.subr.mxu0 0.0
    %1859 = vmatpush1.msra.mxu0 %v239
    %1860 = vmatprep.subr.mxu0 0.0
    %1861 = vmatpush1.msra.mxu0 %v238
    %1862 = vmatprep.subr.mxu0 0.0
    %1863 = vmatpush1.msra.mxu0 %v237
    %1864 = vmatprep.subr.mxu0 0.0
    %1865 = vmatpush2.msra.mxu0 0.0
    %1866 = vmatprep.subr.mxu0 0.0
    %1867 = vmatpush2.msra.mxu0 0.0
    %1868 = vmatprep.subr.mxu0 0.0
    %1869 = vmatpush2.msra.mxu0 0.0
    %1870 = vmatprep.subr.mxu0 0.0
    %1871 = vmatpush2.msra.mxu0 0.0
    %1872 = vmatprep.subr.mxu0 0.0
    %1873 = vmatpush2.msra.mxu0 0.0
    %1874 = vmatprep.subr.mxu0 0.0
    %1875 = vmatpush2.msra.mxu0 0.0
    %1876 = vmatprep.subr.mxu0 0.0
    %1877 = vmatpush2.msra.mxu0 0.0
    %1878 = vmatprep.subr.mxu0 0.0
    %1879 = vmatpush2.msra.mxu0 0.0
    %1880 = vmatprep.subr.mxu0 0.0
    %1881 = vmatpush2.msra.mxu0 0.0
    %1882 = vmatprep.subr.mxu0 0.0
    %1883 = vmatpush2.msra.mxu0 0.0
    %1884 = vmatprep.subr.mxu0 0.0
    %1885 = vmatpush2.msra.mxu0 0.0
    %1886 = vmatprep.subr.mxu0 0.0
    %1887 = vmatpush2.msra.mxu0 0.0
    %1888 = vmatprep.subr.mxu0 0.0
    %1889 = vmatpush2.msra.mxu0 0.0
    %1890 = vmatprep.subr.mxu0 0.0
    %1891 = vmatpush2.msra.mxu0 0.0
    %1892 = vmatprep.subr.mxu0 0.0
    %1893 = vmatpush2.msra.mxu0 0.0
    %1894 = vmatprep.subr.mxu0 0.0
    %1895 = vmatpush2.msra.mxu0 0.0
    %1896 = vmatprep.mubr.f32.mxu0 0.0
    %1897 = vmatmul.mubr.f32.gmra.mxu0 %v1830
    %v1898 = vpop.f32.mrf.mxu0
    %v1899 = vadd.f32 0.0, %v1898
    %v1900 = vpop.f32.mrf.mxu0
    %1901 = vdwg.mxu0
    %v1902 = vadd.f32 %v234, %v1899
    %v1903 = vmax.f32 %v1902, 0.0
    %1904 = vmatprep.subr.mxu0 0.0
    %1905 = vmatpush1.msra.mxu0 0.0
    %1906 = vmatprep.subr.mxu0 0.0
    %1907 = vmatpush1.msra.mxu0 0.0
    %1908 = vmatprep.subr.mxu0 0.0
    %1909 = vmatpush1.msra.mxu0 0.0
    %1910 = vmatprep.subr.mxu0 0.0
    %1911 = vmatpush1.msra.mxu0 0.0
    %1912 = vmatprep.subr.mxu0 0.0
    %1913 = vmatpush1.msra.mxu0 0.0
    %1914 = vmatprep.subr.mxu0 0.0
    %1915 = vmatpush1.msra.mxu0 0.0
    %1916 = vmatprep.subr.mxu0 0.0
    %1917 = vmatpush1.msra.mxu0 0.0
    %1918 = vmatprep.subr.mxu0 0.0
    %1919 = vmatpush1.msra.mxu0 0.0
    %1920 = vmatprep.subr.mxu0 0.0
    %1921 = vmatpush1.msra.mxu0 %v328
    %1922 = vmatprep.subr.mxu0 0.0
    %1923 = vmatpush1.msra.mxu0 %v327
    %1924 = vmatprep.subr.mxu0 0.0
    %1925 = vmatpush1.msra.mxu0 %v326
    %1926 = vmatprep.subr.mxu0 0.0
    %1927 = vmatpush1.msra.mxu0 %v325
    %1928 = vmatprep.subr.mxu0 0.0
    %1929 = vmatpush1.msra.mxu0 %v324
    %1930 = vmatprep.subr.mxu0 0.0
    %1931 = vmatpush1.msra.mxu0 %v323
    %1932 = vmatprep.subr.mxu0 0.0
    %1933 = vmatpush1.msra.mxu0 %v322
    %1934 = vmatprep.subr.mxu0 0.0
    %1935 = vmatpush1.msra.mxu0 %v321
    %1936 = vmatprep.subr.mxu0 0.0
    %1937 = vmatpush2.msra.mxu0 0.0
    %1938 = vmatprep.subr.mxu0 0.0
    %1939 = vmatpush2.msra.mxu0 0.0
    %1940 = vmatprep.subr.mxu0 0.0
    %1941 = vmatpush2.msra.mxu0 0.0
    %1942 = vmatprep.subr.mxu0 0.0
    %1943 = vmatpush2.msra.mxu0 0.0
    %1944 = vmatprep.subr.mxu0 0.0
    %1945 = vmatpush2.msra.mxu0 0.0
    %1946 = vmatprep.subr.mxu0 0.0
    %1947 = vmatpush2.msra.mxu0 0.0
    %1948 = vmatprep.subr.mxu0 0.0
    %1949 = vmatpush2.msra.mxu0 0.0
    %1950 = vmatprep.subr.mxu0 0.0
    %1951 = vmatpush2.msra.mxu0 0.0
    %1952 = vmatprep.subr.mxu0 0.0
    %1953 = vmatpush2.msra.mxu0 0.0
    %1954 = vmatprep.subr.mxu0 0.0
    %1955 = vmatpush2.msra.mxu0 0.0
    %1956 = vmatprep.subr.mxu0 0.0
    %1957 = vmatpush2.msra.mxu0 0.0
    %1958 = vmatprep.subr.mxu0 0.0
    %1959 = vmatpush2.msra.mxu0 0.0
    %1960 = vmatprep.subr.mxu0 0.0
    %1961 = vmatpush2.msra.mxu0 0.0
    %1962 = vmatprep.subr.mxu0 0.0
    %1963 = vmatpush2.msra.mxu0 0.0
    %1964 = vmatprep.subr.mxu0 0.0
    %1965 = vmatpush2.msra.mxu0 0.0
    %1966 = vmatprep.subr.mxu0 0.0
    %1967 = vmatpush2.msra.mxu0 0.0
    %1968 = vmatprep.mubr.f32.mxu0 0.0
    %1969 = vmatmul.mubr.f32.gmra.mxu0 %v1830
    %v1970 = vpop.f32.mrf.mxu0
    %v1971 = vadd.f32 %v335, %v1970
    %v1972 = vpop.f32.mrf.mxu0
    %1973 = vdwg.mxu0
    %v1975 = vsel %vm245, %v1683, 0
    %1977 = vmatprep.subr.mxu0 0.0
    %1978 = vmatpush1.msra.mxu0 0.0
    %1979 = vmatprep.subr.mxu0 0.0
    %1980 = vmatpush1.msra.mxu0 0.0
    %1981 = vmatprep.subr.mxu0 0.0
    %1982 = vmatpush1.msra.mxu0 0.0
    %1983 = vmatprep.subr.mxu0 0.0
    %1984 = vmatpush1.msra.mxu0 0.0
    %1985 = vmatprep.subr.mxu0 0.0
    %1986 = vmatpush1.msra.mxu0 0.0
    %1987 = vmatprep.subr.mxu0 0.0
    %1988 = vmatpush1.msra.mxu0 0.0
    %1989 = vmatprep.subr.mxu0 0.0
    %1990 = vmatpush1.msra.mxu0 0.0
    %1991 = vmatprep.subr.mxu0 0.0
    %1992 = vmatpush1.msra.mxu0 0.0
    %1993 = vmatprep.subr.mxu0 0.0
    %1994 = vmatpush1.msra.mxu0 %v561
    %1995 = vmatprep.subr.mxu0 0.0
    %1996 = vmatpush1.msra.mxu0 %v560
    %1997 = vmatprep.subr.mxu0 0.0
    %1998 = vmatpush1.msra.mxu0 %v559
    %1999 = vmatprep.subr.mxu0 0.0
    %2000 = vmatpush1.msra.mxu0 %v558
    %2001 = vmatprep.subr.mxu0 0.0
    %2002 = vmatpush1.msra.mxu0 %v557
    %2003 = vmatprep.subr.mxu0 0.0
    %2004 = vmatpush1.msra.mxu0 %v556
    %2005 = vmatprep.subr.mxu0 0.0
    %2006 = vmatpush1.msra.mxu0 %v555
    %2007 = vmatprep.subr.mxu0 0.0
    %2008 = vmatpush1.msra.mxu0 %v554
    %2009 = vmatprep.subr.mxu0 0.0
    %2010 = vmatpush2.msra.mxu0 0.0
    %2011 = vmatprep.subr.mxu0 0.0
    %2012 = vmatpush2.msra.mxu0 0.0
    %2013 = vmatprep.subr.mxu0 0.0
    %2014 = vmatpush2.msra.mxu0 0.0
    %2015 = vmatprep.subr.mxu0 0.0
    %2016 = vmatpush2.msra.mxu0 0.0
    %2017 = vmatprep.subr.mxu0 0.0
    %2018 = vmatpush2.msra.mxu0 0.0
    %2019 = vmatprep.subr.mxu0 0.0
    %2020 = vmatpush2.msra.mxu0 0.0
    %2021 = vmatprep.subr.mxu0 0.0
    %2022 = vmatpush2.msra.mxu0 0.0
    %2023 = vmatprep.subr.mxu0 0.0
    %2024 = vmatpush2.msra.mxu0 0.0
    %2025 = vmatprep.subr.mxu0 0.0
    %2026 = vmatpush2.msra.mxu0 0.0
    %2027 = vmatprep.subr.mxu0 0.0
    %2028 = vmatpush2.msra.mxu0 0.0
    %2029 = vmatprep.subr.mxu0 0.0
    %2030 = vmatpush2.msra.mxu0 0.0
    %2031 = vmatprep.subr.mxu0 0.0
    %2032 = vmatpush2.msra.mxu0 0.0
    %2033 = vmatprep.subr.mxu0 0.0
    %2034 = vmatpush2.msra.mxu0 0.0
    %2035 = vmatprep.subr.mxu0 0.0
    %2036 = vmatpush2.msra.mxu0 0.0
    %2037 = vmatprep.subr.mxu0 0.0
    %2038 = vmatpush2.msra.mxu0 0.0
    %2039 = vmatprep.subr.mxu0 0.0
    %2040 = vmatpush2.msra.mxu0 0.0
    %2041 = vmatprep.mubr.f32.mxu0 0.0
    %2042 = vmatmul.mubr.f32.gmra.mxu0 %v1975
    %v2043 = vpop.f32.mrf.mxu0
    %v2044 = vadd.f32 0.0, %v2043
    %v2045 = vpop.f32.mrf.mxu0
    %2046 = vdwg.mxu0
    %v2047 = vadd.f32 %v1971, %v2044
    %v2048 = vmax.f32 %v2047, 0.0
    %2049 = vmatprep.subr.mxu0 0.0
    %2050 = vmatpush1.msra.mxu0 0.0
    %2051 = vmatprep.subr.mxu0 0.0
    %2052 = vmatpush1.msra.mxu0 0.0
    %2053 = vmatprep.subr.mxu0 0.0
    %2054 = vmatpush1.msra.mxu0 0.0
    %2055 = vmatprep.subr.mxu0 0.0
    %2056 = vmatpush1.msra.mxu0 0.0
    %2057 = vmatprep.subr.mxu0 0.0
    %2058 = vmatpush1.msra.mxu0 0.0
    %2059 = vmatprep.subr.mxu0 0.0
    %2060 = vmatpush1.msra.mxu0 0.0
    %2061 = vmatprep.subr.mxu0 0.0
    %2062 = vmatpush1.msra.mxu0 0.0
    %2063 = vmatprep.subr.mxu0 0.0
    %2064 = vmatpush1.msra.mxu0 0.0
    %2065 = vmatprep.subr.mxu0 0.0
    %2066 = vmatpush1.msra.mxu0 %v645
    %2067 = vmatprep.subr.mxu0 0.0
    %2068 = vmatpush1.msra.mxu0 %v644
    %2069 = vmatprep.subr.mxu0 0.0
    %2070 = vmatpush1.msra.mxu0 %v643
    %2071 = vmatprep.subr.mxu0 0.0
    %2072 = vmatpush1.msra.mxu0 %v642
    %2073 = vmatprep.subr.mxu0 0.0
    %2074 = vmatpush1.msra.mxu0 %v641
    %2075 = vmatprep.subr.mxu0 0.0
    %2076 = vmatpush1.msra.mxu0 %v640
    %2077 = vmatprep.subr.mxu0 0.0
    %2078 = vmatpush1.msra.mxu0 %v639
    %2079 = vmatprep.subr.mxu0 0.0
    %2080 = vmatpush1.msra.mxu0 %v638
    %2081 = vmatprep.subr.mxu0 0.0
    %2082 = vmatpush2.msra.mxu0 0.0
    %2083 = vmatprep.subr.mxu0 0.0
    %2084 = vmatpush2.msra.mxu0 0.0
    %2085 = vmatprep.subr.mxu0 0.0
    %2086 = vmatpush2.msra.mxu0 0.0
    %2087 = vmatprep.subr.mxu0 0.0
    %2088 = vmatpush2.msra.mxu0 0.0
    %2089 = vmatprep.subr.mxu0 0.0
    %2090 = vmatpush2.msra.mxu0 0.0
    %2091 = vmatprep.subr.mxu0 0.0
    %2092 = vmatpush2.msra.mxu0 0.0
    %2093 = vmatprep.subr.mxu0 0.0
    %2094 = vmatpush2.msra.mxu0 0.0
    %2095 = vmatprep.subr.mxu0 0.0
    %2096 = vmatpush2.msra.mxu0 0.0
    %2097 = vmatprep.subr.mxu0 0.0
    %2098 = vmatpush2.msra.mxu0 0.0
    %2099 = vmatprep.subr.mxu0 0.0
    %2100 = vmatpush2.msra.mxu0 0.0
    %2101 = vmatprep.subr.mxu0 0.0
    %2102 = vmatpush2.msra.mxu0 0.0
    %2103 = vmatprep.subr.mxu0 0.0
    %2104 = vmatpush2.msra.mxu0 0.0
    %2105 = vmatprep.subr.mxu0 0.0
    %2106 = vmatpush2.msra.mxu0 0.0
    %2107 = vmatprep.subr.mxu0 0.0
    %2108 = vmatpush2.msra.mxu0 0.0
    %2109 = vmatprep.subr.mxu0 0.0
    %2110 = vmatpush2.msra.mxu0 0.0
    %2111 = vmatprep.subr.mxu0 0.0
    %2112 = vmatpush2.msra.mxu0 0.0
    %2113 = vmatprep.mubr.f32.mxu0 0.0
    %2114 = vmatmul.mubr.f32.gmra.mxu0 %v1975
    %v2115 = vpop.f32.mrf.mxu0
    %v2116 = vadd.f32 %v652, %v2115
    %v2117 = vpop.f32.mrf.mxu0
    %2118 = vdwg.mxu0
    %v2120 = vsel %vm245, %v1828, 0
    %2122 = vmatprep.subr.mxu0 0.0
    %2123 = vmatpush1.msra.mxu0 0.0
    %2124 = vmatprep.subr.mxu0 0.0
    %2125 = vmatpush1.msra.mxu0 0.0
    %2126 = vmatprep.subr.mxu0 0.0
    %2127 = vmatpush1.msra.mxu0 0.0
    %2128 = vmatprep.subr.mxu0 0.0
    %2129 = vmatpush1.msra.mxu0 0.0
    %2130 = vmatprep.subr.mxu0 0.0
    %2131 = vmatpush1.msra.mxu0 0.0
    %2132 = vmatprep.subr.mxu0 0.0
    %2133 = vmatpush1.msra.mxu0 0.0
    %2134 = vmatprep.subr.mxu0 0.0
    %2135 = vmatpush1.msra.mxu0 0.0
    %2136 = vmatprep.subr.mxu0 0.0
    %2137 = vmatpush1.msra.mxu0 0.0
    %2138 = vmatprep.subr.mxu0 0.0
    %2139 = vmatpush1.msra.mxu0 %v1023
    %2140 = vmatprep.subr.mxu0 0.0
    %2141 = vmatpush1.msra.mxu0 %v1022
    %2142 = vmatprep.subr.mxu0 0.0
    %2143 = vmatpush1.msra.mxu0 %v1021
    %2144 = vmatprep.subr.mxu0 0.0
    %2145 = vmatpush1.msra.mxu0 %v1020
    %2146 = vmatprep.subr.mxu0 0.0
    %2147 = vmatpush1.msra.mxu0 %v1019
    %2148 = vmatprep.subr.mxu0 0.0
    %2149 = vmatpush1.msra.mxu0 %v1018
    %2150 = vmatprep.subr.mxu0 0.0
    %2151 = vmatpush1.msra.mxu0 %v1017
    %2152 = vmatprep.subr.mxu0 0.0
    %2153 = vmatpush1.msra.mxu0 %v1016
    %2154 = vmatprep.subr.mxu0 0.0
    %2155 = vmatpush2.msra.mxu0 0.0
    %2156 = vmatprep.subr.mxu0 0.0
    %2157 = vmatpush2.msra.mxu0 0.0
    %2158 = vmatprep.subr.mxu0 0.0
    %2159 = vmatpush2.msra.mxu0 0.0
    %2160 = vmatprep.subr.mxu0 0.0
    %2161 = vmatpush2.msra.mxu0 0.0
    %2162 = vmatprep.subr.mxu0 0.0
    %2163 = vmatpush2.msra.mxu0 0.0
    %2164 = vmatprep.subr.mxu0 0.0
    %2165 = vmatpush2.msra.mxu0 0.0
    %2166 = vmatprep.subr.mxu0 0.0
    %2167 = vmatpush2.msra.mxu0 0.0
    %2168 = vmatprep.subr.mxu0 0.0
    %2169 = vmatpush2.msra.mxu0 0.0
    %2170 = vmatprep.subr.mxu0 0.0
    %2171 = vmatpush2.msra.mxu0 0.0
    %2172 = vmatprep.subr.mxu0 0.0
    %2173 = vmatpush2.msra.mxu0 0.0
    %2174 = vmatprep.subr.mxu0 0.0
    %2175 = vmatpush2.msra.mxu0 0.0
    %2176 = vmatprep.subr.mxu0 0.0
    %2177 = vmatpush2.msra.mxu0 0.0
    %2178 = vmatprep.subr.mxu0 0.0
    %2179 = vmatpush2.msra.mxu0 0.0
    %2180 = vmatprep.subr.mxu0 0.0
    %2181 = vmatpush2.msra.mxu0 0.0
    %2182 = vmatprep.subr.mxu0 0.0
    %2183 = vmatpush2.msra.mxu0 0.0
    %2184 = vmatprep.subr.mxu0 0.0
    %2185 = vmatpush2.msra.mxu0 0.0
    %2186 = vmatprep.mubr.f32.mxu0 0.0
    %2187 = vmatmul.mubr.f32.gmra.mxu0 %v2120
    %v2188 = vpop.f32.mrf.mxu0
    %v2189 = vadd.f32 0.0, %v2188
    %v2190 = vpop.f32.mrf.mxu0
    %2191 = vdwg.mxu0
    %v2192 = vadd.f32 %v2116, %v2189
    %v2193 = vmax.f32 %v2192, 0.0
    %v2195 = vsel %vm245, %v1903, 0
    %2197 = vmatprep.subr.mxu0 0.0
    %2198 = vmatpush1.msra.mxu0 0.0
    %2199 = vmatprep.subr.mxu0 0.0
    %2200 = vmatpush1.msra.mxu0 0.0
    %2201 = vmatprep.subr.mxu0 0.0
    %2202 = vmatpush1.msra.mxu0 0.0
    %2203 = vmatprep.subr.mxu0 0.0
    %2204 = vmatpush1.msra.mxu0 0.0
    %2205 = vmatprep.subr.mxu0 0.0
    %2206 = vmatpush1.msra.mxu0 0.0
    %2207 = vmatprep.subr.mxu0 0.0
    %2208 = vmatpush1.msra.mxu0 0.0
    %2209 = vmatprep.subr.mxu0 0.0
    %2210 = vmatpush1.msra.mxu0 0.0
    %2211 = vmatprep.subr.mxu0 0.0
    %2212 = vmatpush1.msra.mxu0 0.0
    %2213 = vmatprep.subr.mxu0 0.0
    %2214 = vmatpush1.msra.mxu0 %v244
    %2215 = vmatprep.subr.mxu0 0.0
    %2216 = vmatpush1.msra.mxu0 %v243
    %2217 = vmatprep.subr.mxu0 0.0
    %2218 = vmatpush1.msra.mxu0 %v242
    %2219 = vmatprep.subr.mxu0 0.0
    %2220 = vmatpush1.msra.mxu0 %v241
    %2221 = vmatprep.subr.mxu0 0.0
    %2222 = vmatpush1.msra.mxu0 %v240
    %2223 = vmatprep.subr.mxu0 0.0
    %2224 = vmatpush1.msra.mxu0 %v239
    %2225 = vmatprep.subr.mxu0 0.0
    %2226 = vmatpush1.msra.mxu0 %v238
    %2227 = vmatprep.subr.mxu0 0.0
    %2228 = vmatpush1.msra.mxu0 %v237
    %2229 = vmatprep.subr.mxu0 0.0
    %2230 = vmatpush2.msra.mxu0 0.0
    %2231 = vmatprep.subr.mxu0 0.0
    %2232 = vmatpush2.msra.mxu0 0.0
    %2233 = vmatprep.subr.mxu0 0.0
    %2234 = vmatpush2.msra.mxu0 0.0
    %2235 = vmatprep.subr.mxu0 0.0
    %2236 = vmatpush2.msra.mxu0 0.0
    %2237 = vmatprep.subr.mxu0 0.0
    %2238 = vmatpush2.msra.mxu0 0.0
    %2239 = vmatprep.subr.mxu0 0.0
    %2240 = vmatpush2.msra.mxu0 0.0
    %2241 = vmatprep.subr.mxu0 0.0
    %2242 = vmatpush2.msra.mxu0 0.0
    %2243 = vmatprep.subr.mxu0 0.0
    %2244 = vmatpush2.msra.mxu0 0.0
    %2245 = vmatprep.subr.mxu0 0.0
    %2246 = vmatpush2.msra.mxu0 0.0
    %2247 = vmatprep.subr.mxu0 0.0
    %2248 = vmatpush2.msra.mxu0 0.0
    %2249 = vmatprep.subr.mxu0 0.0
    %2250 = vmatpush2.msra.mxu0 0.0
    %2251 = vmatprep.subr.mxu0 0.0
    %2252 = vmatpush2.msra.mxu0 0.0
    %2253 = vmatprep.subr.mxu0 0.0
    %2254 = vmatpush2.msra.mxu0 0.0
    %2255 = vmatprep.subr.mxu0 0.0
    %2256 = vmatpush2.msra.mxu0 0.0
    %2257 = vmatprep.subr.mxu0 0.0
    %2258 = vmatpush2.msra.mxu0 0.0
    %2259 = vmatprep.subr.mxu0 0.0
    %2260 = vmatpush2.msra.mxu0 0.0
    %2261 = vmatprep.mubr.f32.mxu0 0.0
    %2262 = vmatmul.mubr.f32.gmra.mxu0 %v2195
    %v2263 = vpop.f32.mrf.mxu0
    %v2264 = vadd.f32 0.0, %v2263
    %v2265 = vpop.f32.mrf.mxu0
    %2266 = vdwg.mxu0
    %v2267 = vadd.f32 %v235, %v2264
    %v2268 = vmax.f32 %v2267, 0.0
    %2269 = vmatprep.subr.mxu0 0.0
    %2270 = vmatpush1.msra.mxu0 0.0
    %2271 = vmatprep.subr.mxu0 0.0
    %2272 = vmatpush1.msra.mxu0 0.0
    %2273 = vmatprep.subr.mxu0 0.0
    %2274 = vmatpush1.msra.mxu0 0.0
    %2275 = vmatprep.subr.mxu0 0.0
    %2276 = vmatpush1.msra.mxu0 0.0
    %2277 = vmatprep.subr.mxu0 0.0
    %2278 = vmatpush1.msra.mxu0 0.0
    %2279 = vmatprep.subr.mxu0 0.0
    %2280 = vmatpush1.msra.mxu0 0.0
    %2281 = vmatprep.subr.mxu0 0.0
    %2282 = vmatpush1.msra.mxu0 0.0
    %2283 = vmatprep.subr.mxu0 0.0
    %2284 = vmatpush1.msra.mxu0 0.0
    %2285 = vmatprep.subr.mxu0 0.0
    %2286 = vmatpush1.msra.mxu0 %v328
    %2287 = vmatprep.subr.mxu0 0.0
    %2288 = vmatpush1.msra.mxu0 %v327
    %2289 = vmatprep.subr.mxu0 0.0
    %2290 = vmatpush1.msra.mxu0 %v326
    %2291 = vmatprep.subr.mxu0 0.0
    %2292 = vmatpush1.msra.mxu0 %v325
    %2293 = vmatprep.subr.mxu0 0.0
    %2294 = vmatpush1.msra.mxu0 %v324
    %2295 = vmatprep.subr.mxu0 0.0
    %2296 = vmatpush1.msra.mxu0 %v323
    %2297 = vmatprep.subr.mxu0 0.0
    %2298 = vmatpush1.msra.mxu0 %v322
    %2299 = vmatprep.subr.mxu0 0.0
    %2300 = vmatpush1.msra.mxu0 %v321
    %2301 = vmatprep.subr.mxu0 0.0
    %2302 = vmatpush2.msra.mxu0 0.0
    %2303 = vmatprep.subr.mxu0 0.0
    %2304 = vmatpush2.msra.mxu0 0.0
    %2305 = vmatprep.subr.mxu0 0.0
    %2306 = vmatpush2.msra.mxu0 0.0
    %2307 = vmatprep.subr.mxu0 0.0
    %2308 = vmatpush2.msra.mxu0 0.0
    %2309 = vmatprep.subr.mxu0 0.0
    %2310 = vmatpush2.msra.mxu0 0.0
    %2311 = vmatprep.subr.mxu0 0.0
    %2312 = vmatpush2.msra.mxu0 0.0
    %2313 = vmatprep.subr.mxu0 0.0
    %2314 = vmatpush2.msra.mxu0 0.0
    %2315 = vmatprep.subr.mxu0 0.0
    %2316 = vmatpush2.msra.mxu0 0.0
    %2317 = vmatprep.subr.mxu0 0.0
    %2318 = vmatpush2.msra.mxu0 0.0
    %2319 = vmatprep.subr.mxu0 0.0
    %2320 = vmatpush2.msra.mxu0 0.0
    %2321 = vmatprep.subr.mxu0 0.0
    %2322 = vmatpush2.msra.mxu0 0.0
    %2323 = vmatprep.subr.mxu0 0.0
    %2324 = vmatpush2.msra.mxu0 0.0
    %2325 = vmatprep.subr.mxu0 0.0
    %2326 = vmatpush2.msra.mxu0 0.0
    %2327 = vmatprep.subr.mxu0 0.0
    %2328 = vmatpush2.msra.mxu0 0.0
    %2329 = vmatprep.subr.mxu0 0.0
    %2330 = vmatpush2.msra.mxu0 0.0
    %2331 = vmatprep.subr.mxu0 0.0
    %2332 = vmatpush2.msra.mxu0 0.0
    %2333 = vmatprep.mubr.f32.mxu0 0.0
    %2334 = vmatmul.mubr.f32.gmra.mxu0 %v2195
    %v2335 = vpop.f32.mrf.mxu0
    %v2336 = vadd.f32 %v335, %v2335
    %v2337 = vpop.f32.mrf.mxu0
    %2338 = vdwg.mxu0
    %v2340 = vsel %vm245, %v2048, 0
    %2342 = vmatprep.subr.mxu0 0.0
    %2343 = vmatpush1.msra.mxu0 0.0
    %2344 = vmatprep.subr.mxu0 0.0
    %2345 = vmatpush1.msra.mxu0 0.0
    %2346 = vmatprep.subr.mxu0 0.0
    %2347 = vmatpush1.msra.mxu0 0.0
    %2348 = vmatprep.subr.mxu0 0.0
    %2349 = vmatpush1.msra.mxu0 0.0
    %2350 = vmatprep.subr.mxu0 0.0
    %2351 = vmatpush1.msra.mxu0 0.0
    %2352 = vmatprep.subr.mxu0 0.0
    %2353 = vmatpush1.msra.mxu0 0.0
    %2354 = vmatprep.subr.mxu0 0.0
    %2355 = vmatpush1.msra.mxu0 0.0
    %2356 = vmatprep.subr.mxu0 0.0
    %2357 = vmatpush1.msra.mxu0 0.0
    %2358 = vmatprep.subr.mxu0 0.0
    %2359 = vmatpush1.msra.mxu0 %v561
    %2360 = vmatprep.subr.mxu0 0.0
    %2361 = vmatpush1.msra.mxu0 %v560
    %2362 = vmatprep.subr.mxu0 0.0
    %2363 = vmatpush1.msra.mxu0 %v559
    %2364 = vmatprep.subr.mxu0 0.0
    %2365 = vmatpush1.msra.mxu0 %v558
    %2366 = vmatprep.subr.mxu0 0.0
    %2367 = vmatpush1.msra.mxu0 %v557
    %2368 = vmatprep.subr.mxu0 0.0
    %2369 = vmatpush1.msra.mxu0 %v556
    %2370 = vmatprep.subr.mxu0 0.0
    %2371 = vmatpush1.msra.mxu0 %v555
    %2372 = vmatprep.subr.mxu0 0.0
    %2373 = vmatpush1.msra.mxu0 %v554
    %2374 = vmatprep.subr.mxu0 0.0
    %2375 = vmatpush2.msra.mxu0 0.0
    %2376 = vmatprep.subr.mxu0 0.0
    %2377 = vmatpush2.msra.mxu0 0.0
    %2378 = vmatprep.subr.mxu0 0.0
    %2379 = vmatpush2.msra.mxu0 0.0
    %2380 = vmatprep.subr.mxu0 0.0
    %2381 = vmatpush2.msra.mxu0 0.0
    %2382 = vmatprep.subr.mxu0 0.0
    %2383 = vmatpush2.msra.mxu0 0.0
    %2384 = vmatprep.subr.mxu0 0.0
    %2385 = vmatpush2.msra.mxu0 0.0
    %2386 = vmatprep.subr.mxu0 0.0
    %2387 = vmatpush2.msra.mxu0 0.0
    %2388 = vmatprep.subr.mxu0 0.0
    %2389 = vmatpush2.msra.mxu0 0.0
    %2390 = vmatprep.subr.mxu0 0.0
    %2391 = vmatpush2.msra.mxu0 0.0
    %2392 = vmatprep.subr.mxu0 0.0
    %2393 = vmatpush2.msra.mxu0 0.0
    %2394 = vmatprep.subr.mxu0 0.0
    %2395 = vmatpush2.msra.mxu0 0.0
    %2396 = vmatprep.subr.mxu0 0.0
    %2397 = vmatpush2.msra.mxu0 0.0
    %2398 = vmatprep.subr.mxu0 0.0
    %2399 = vmatpush2.msra.mxu0 0.0
    %2400 = vmatprep.subr.mxu0 0.0
    %2401 = vmatpush2.msra.mxu0 0.0
    %2402 = vmatprep.subr.mxu0 0.0
    %2403 = vmatpush2.msra.mxu0 0.0
    %2404 = vmatprep.subr.mxu0 0.0
    %2405 = vmatpush2.msra.mxu0 0.0
    %2406 = vmatprep.mubr.f32.mxu0 0.0
    %2407 = vmatmul.mubr.f32.gmra.mxu0 %v2340
    %v2408 = vpop.f32.mrf.mxu0
    %v2409 = vadd.f32 0.0, %v2408
    %v2410 = vpop.f32.mrf.mxu0
    %2411 = vdwg.mxu0
    %v2412 = vadd.f32 %v2336, %v2409
    %v2413 = vmax.f32 %v2412, 0.0
    %2414 = vmatprep.subr.mxu0 0.0
    %2415 = vmatpush1.msra.mxu0 0.0
    %2416 = vmatprep.subr.mxu0 0.0
    %2417 = vmatpush1.msra.mxu0 0.0
    %2418 = vmatprep.subr.mxu0 0.0
    %2419 = vmatpush1.msra.mxu0 0.0
    %2420 = vmatprep.subr.mxu0 0.0
    %2421 = vmatpush1.msra.mxu0 0.0
    %2422 = vmatprep.subr.mxu0 0.0
    %2423 = vmatpush1.msra.mxu0 0.0
    %2424 = vmatprep.subr.mxu0 0.0
    %2425 = vmatpush1.msra.mxu0 0.0
    %2426 = vmatprep.subr.mxu0 0.0
    %2427 = vmatpush1.msra.mxu0 0.0
    %2428 = vmatprep.subr.mxu0 0.0
    %2429 = vmatpush1.msra.mxu0 0.0
    %2430 = vmatprep.subr.mxu0 0.0
    %2431 = vmatpush1.msra.mxu0 %v645
    %2432 = vmatprep.subr.mxu0 0.0
    %2433 = vmatpush1.msra.mxu0 %v644
    %2434 = vmatprep.subr.mxu0 0.0
    %2435 = vmatpush1.msra.mxu0 %v643
    %2436 = vmatprep.subr.mxu0 0.0
    %2437 = vmatpush1.msra.mxu0 %v642
    %2438 = vmatprep.subr.mxu0 0.0
    %2439 = vmatpush1.msra.mxu0 %v641
    %2440 = vmatprep.subr.mxu0 0.0
    %2441 = vmatpush1.msra.mxu0 %v640
    %2442 = vmatprep.subr.mxu0 0.0
    %2443 = vmatpush1.msra.mxu0 %v639
    %2444 = vmatprep.subr.mxu0 0.0
    %2445 = vmatpush1.msra.mxu0 %v638
    %2446 = vmatprep.subr.mxu0 0.0
    %2447 = vmatpush2.msra.mxu0 0.0
    %2448 = vmatprep.subr.mxu0 0.0
    %2449 = vmatpush2.msra.mxu0 0.0
    %2450 = vmatprep.subr.mxu0 0.0
    %2451 = vmatpush2.msra.mxu0 0.0
    %2452 = vmatprep.subr.mxu0 0.0
    %2453 = vmatpush2.msra.mxu0 0.0
    %2454 = vmatprep.subr.mxu0 0.0
    %2455 = vmatpush2.msra.mxu0 0.0
    %2456 = vmatprep.subr.mxu0 0.0
    %2457 = vmatpush2.msra.mxu0 0.0
    %2458 = vmatprep.subr.mxu0 0.0
    %2459 = vmatpush2.msra.mxu0 0.0
    %2460 = vmatprep.subr.mxu0 0.0
    %2461 = vmatpush2.msra.mxu0 0.0
    %2462 = vmatprep.subr.mxu0 0.0
    %2463 = vmatpush2.msra.mxu0 0.0
    %2464 = vmatprep.subr.mxu0 0.0
    %2465 = vmatpush2.msra.mxu0 0.0
    %2466 = vmatprep.subr.mxu0 0.0
    %2467 = vmatpush2.msra.mxu0 0.0
    %2468 = vmatprep.subr.mxu0 0.0
    %2469 = vmatpush2.msra.mxu0 0.0
    %2470 = vmatprep.subr.mxu0 0.0
    %2471 = vmatpush2.msra.mxu0 0.0
    %2472 = vmatprep.subr.mxu0 0.0
    %2473 = vmatpush2.msra.mxu0 0.0
    %2474 = vmatprep.subr.mxu0 0.0
    %2475 = vmatpush2.msra.mxu0 0.0
    %2476 = vmatprep.subr.mxu0 0.0
    %2477 = vmatpush2.msra.mxu0 0.0
    %2478 = vmatprep.mubr.f32.mxu0 0.0
    %2479 = vmatmul.mubr.f32.gmra.mxu0 %v2340
    %v2480 = vpop.f32.mrf.mxu0
    %v2481 = vadd.f32 %v652, %v2480
    %v2482 = vpop.f32.mrf.mxu0
    %2483 = vdwg.mxu0
    %v2485 = vsel %vm245, %v2193, 0
    %2487 = vmatprep.subr.mxu0 0.0
    %2488 = vmatpush1.msra.mxu0 0.0
    %2489 = vmatprep.subr.mxu0 0.0
    %2490 = vmatpush1.msra.mxu0 0.0
    %2491 = vmatprep.subr.mxu0 0.0
    %2492 = vmatpush1.msra.mxu0 0.0
    %2493 = vmatprep.subr.mxu0 0.0
    %2494 = vmatpush1.msra.mxu0 0.0
    %2495 = vmatprep.subr.mxu0 0.0
    %2496 = vmatpush1.msra.mxu0 0.0
    %2497 = vmatprep.subr.mxu0 0.0
    %2498 = vmatpush1.msra.mxu0 0.0
    %2499 = vmatprep.subr.mxu0 0.0
    %2500 = vmatpush1.msra.mxu0 0.0
    %2501 = vmatprep.subr.mxu0 0.0
    %2502 = vmatpush1.msra.mxu0 0.0
    %2503 = vmatprep.subr.mxu0 0.0
    %2504 = vmatpush1.msra.mxu0 %v1023
    %2505 = vmatprep.subr.mxu0 0.0
    %2506 = vmatpush1.msra.mxu0 %v1022
    %2507 = vmatprep.subr.mxu0 0.0
    %2508 = vmatpush1.msra.mxu0 %v1021
    %2509 = vmatprep.subr.mxu0 0.0
    %2510 = vmatpush1.msra.mxu0 %v1020
    %2511 = vmatprep.subr.mxu0 0.0
    %2512 = vmatpush1.msra.mxu0 %v1019
    %2513 = vmatprep.subr.mxu0 0.0
    %2514 = vmatpush1.msra.mxu0 %v1018
    %2515 = vmatprep.subr.mxu0 0.0
    %2516 = vmatpush1.msra.mxu0 %v1017
    %2517 = vmatprep.subr.mxu0 0.0
    %2518 = vmatpush1.msra.mxu0 %v1016
    %2519 = vmatprep.subr.mxu0 0.0
    %2520 = vmatpush2.msra.mxu0 0.0
    %2521 = vmatprep.subr.mxu0 0.0
    %2522 = vmatpush2.msra.mxu0 0.0
    %2523 = vmatprep.subr.mxu0 0.0
    %2524 = vmatpush2.msra.mxu0 0.0
    %2525 = vmatprep.subr.mxu0 0.0
    %2526 = vmatpush2.msra.mxu0 0.0
    %2527 = vmatprep.subr.mxu0 0.0
    %2528 = vmatpush2.msra.mxu0 0.0
    %2529 = vmatprep.subr.mxu0 0.0
    %2530 = vmatpush2.msra.mxu0 0.0
    %2531 = vmatprep.subr.mxu0 0.0
    %2532 = vmatpush2.msra.mxu0 0.0
    %2533 = vmatprep.subr.mxu0 0.0
    %2534 = vmatpush2.msra.mxu0 0.0
    %2535 = vmatprep.subr.mxu0 0.0
    %2536 = vmatpush2.msra.mxu0 0.0
    %2537 = vmatprep.subr.mxu0 0.0
    %2538 = vmatpush2.msra.mxu0 0.0
    %2539 = vmatprep.subr.mxu0 0.0
    %2540 = vmatpush2.msra.mxu0 0.0
    %2541 = vmatprep.subr.mxu0 0.0
    %2542 = vmatpush2.msra.mxu0 0.0
    %2543 = vmatprep.subr.mxu0 0.0
    %2544 = vmatpush2.msra.mxu0 0.0
    %2545 = vmatprep.subr.mxu0 0.0
    %2546 = vmatpush2.msra.mxu0 0.0
    %2547 = vmatprep.subr.mxu0 0.0
    %2548 = vmatpush2.msra.mxu0 0.0
    %2549 = vmatprep.subr.mxu0 0.0
    %2550 = vmatpush2.msra.mxu0 0.0
    %2551 = vmatprep.mubr.f32.mxu0 0.0
    %2552 = vmatmul.mubr.f32.gmra.mxu0 %v2485
    %v2553 = vpop.f32.mrf.mxu0
    %v2554 = vadd.f32 0.0, %v2553
    %v2555 = vpop.f32.mrf.mxu0
    %2556 = vdwg.mxu0
    %v2557 = vadd.f32 %v2481, %v2554
    %v2558 = vmax.f32 %v2557, 0.0
    %v2560 = vsel %vm245, %v2268, 0
    %2562 = vmatprep.subr.mxu0 0.0
    %2563 = vmatpush1.msra.mxu0 0.0
    %2564 = vmatprep.subr.mxu0 0.0
    %2565 = vmatpush1.msra.mxu0 0.0
    %2566 = vmatprep.subr.mxu0 0.0
    %2567 = vmatpush1.msra.mxu0 0.0
    %2568 = vmatprep.subr.mxu0 0.0
    %2569 = vmatpush1.msra.mxu0 0.0
    %2570 = vmatprep.subr.mxu0 0.0
    %2571 = vmatpush1.msra.mxu0 0.0
    %2572 = vmatprep.subr.mxu0 0.0
    %2573 = vmatpush1.msra.mxu0 0.0
    %2574 = vmatprep.subr.mxu0 0.0
    %2575 = vmatpush1.msra.mxu0 0.0
    %2576 = vmatprep.subr.mxu0 0.0
    %2577 = vmatpush1.msra.mxu0 0.0
    %2578 = vmatprep.subr.mxu0 0.0
    %2579 = vmatpush1.msra.mxu0 %v328
    %2580 = vmatprep.subr.mxu0 0.0
    %2581 = vmatpush1.msra.mxu0 %v327
    %2582 = vmatprep.subr.mxu0 0.0
    %2583 = vmatpush1.msra.mxu0 %v326
    %2584 = vmatprep.subr.mxu0 0.0
    %2585 = vmatpush1.msra.mxu0 %v325
    %2586 = vmatprep.subr.mxu0 0.0
    %2587 = vmatpush1.msra.mxu0 %v324
    %2588 = vmatprep.subr.mxu0 0.0
    %2589 = vmatpush1.msra.mxu0 %v323
    %2590 = vmatprep.subr.mxu0 0.0
    %2591 = vmatpush1.msra.mxu0 %v322
    %2592 = vmatprep.subr.mxu0 0.0
    %2593 = vmatpush1.msra.mxu0 %v321
    %2594 = vmatprep.subr.mxu0 0.0
    %2595 = vmatpush2.msra.mxu0 0.0
    %2596 = vmatprep.subr.mxu0 0.0
    %2597 = vmatpush2.msra.mxu0 0.0
    %2598 = vmatprep.subr.mxu0 0.0
    %2599 = vmatpush2.msra.mxu0 0.0
    %2600 = vmatprep.subr.mxu0 0.0
    %2601 = vmatpush2.msra.mxu0 0.0
    %2602 = vmatprep.subr.mxu0 0.0
    %2603 = vmatpush2.msra.mxu0 0.0
    %2604 = vmatprep.subr.mxu0 0.0
    %2605 = vmatpush2.msra.mxu0 0.0
    %2606 = vmatprep.subr.mxu0 0.0
    %2607 = vmatpush2.msra.mxu0 0.0
    %2608 = vmatprep.subr.mxu0 0.0
    %2609 = vmatpush2.msra.mxu0 0.0
    %2610 = vmatprep.subr.mxu0 0.0
    %2611 = vmatpush2.msra.mxu0 0.0
    %2612 = vmatprep.subr.mxu0 0.0
    %2613 = vmatpush2.msra.mxu0 0.0
    %2614 = vmatprep.subr.mxu0 0.0
    %2615 = vmatpush2.msra.mxu0 0.0
    %2616 = vmatprep.subr.mxu0 0.0
    %2617 = vmatpush2.msra.mxu0 0.0
    %2618 = vmatprep.subr.mxu0 0.0
    %2619 = vmatpush2.msra.mxu0 0.0
    %2620 = vmatprep.subr.mxu0 0.0
    %2621 = vmatpush2.msra.mxu0 0.0
    %2622 = vmatprep.subr.mxu0 0.0
    %2623 = vmatpush2.msra.mxu0 0.0
    %2624 = vmatprep.subr.mxu0 0.0
    %2625 = vmatpush2.msra.mxu0 0.0
    %2626 = vmatprep.mubr.f32.mxu0 0.0
    %2627 = vmatmul.mubr.f32.gmra.mxu0 %v2560
    %v2628 = vpop.f32.mrf.mxu0
    %v2629 = vadd.f32 %v335, %v2628
    %v2630 = vpop.f32.mrf.mxu0
    %2631 = vdwg.mxu0
    %v2633 = vsel %vm245, %v2413, 0
    %2635 = vmatprep.subr.mxu0 0.0
    %2636 = vmatpush1.msra.mxu0 0.0
    %2637 = vmatprep.subr.mxu0 0.0
    %2638 = vmatpush1.msra.mxu0 0.0
    %2639 = vmatprep.subr.mxu0 0.0
    %2640 = vmatpush1.msra.mxu0 0.0
    %2641 = vmatprep.subr.mxu0 0.0
    %2642 = vmatpush1.msra.mxu0 0.0
    %2643 = vmatprep.subr.mxu0 0.0
    %2644 = vmatpush1.msra.mxu0 0.0
    %2645 = vmatprep.subr.mxu0 0.0
    %2646 = vmatpush1.msra.mxu0 0.0
    %2647 = vmatprep.subr.mxu0 0.0
    %2648 = vmatpush1.msra.mxu0 0.0
    %2649 = vmatprep.subr.mxu0 0.0
    %2650 = vmatpush1.msra.mxu0 0.0
    %2651 = vmatprep.subr.mxu0 0.0
    %2652 = vmatpush1.msra.mxu0 %v561
    %2653 = vmatprep.subr.mxu0 0.0
    %2654 = vmatpush1.msra.mxu0 %v560
    %2655 = vmatprep.subr.mxu0 0.0
    %2656 = vmatpush1.msra.mxu0 %v559
    %2657 = vmatprep.subr.mxu0 0.0
    %2658 = vmatpush1.msra.mxu0 %v558
    %2659 = vmatprep.subr.mxu0 0.0
    %2660 = vmatpush1.msra.mxu0 %v557
    %2661 = vmatprep.subr.mxu0 0.0
    %2662 = vmatpush1.msra.mxu0 %v556
    %2663 = vmatprep.subr.mxu0 0.0
    %2664 = vmatpush1.msra.mxu0 %v555
    %2665 = vmatprep.subr.mxu0 0.0
    %2666 = vmatpush1.msra.mxu0 %v554
    %2667 = vmatprep.subr.mxu0 0.0
    %2668 = vmatpush2.msra.mxu0 0.0
    %2669 = vmatprep.subr.mxu0 0.0
    %2670 = vmatpush2.msra.mxu0 0.0
    %2671 = vmatprep.subr.mxu0 0.0
    %2672 = vmatpush2.msra.mxu0 0.0
    %2673 = vmatprep.subr.mxu0 0.0
    %2674 = vmatpush2.msra.mxu0 0.0
    %2675 = vmatprep.subr.mxu0 0.0
    %2676 = vmatpush2.msra.mxu0 0.0
    %2677 = vmatprep.subr.mxu0 0.0
    %2678 = vmatpush2.msra.mxu0 0.0
    %2679 = vmatprep.subr.mxu0 0.0
    %2680 = vmatpush2.msra.mxu0 0.0
    %2681 = vmatprep.subr.mxu0 0.0
    %2682 = vmatpush2.msra.mxu0 0.0
    %2683 = vmatprep.subr.mxu0 0.0
    %2684 = vmatpush2.msra.mxu0 0.0
    %2685 = vmatprep.subr.mxu0 0.0
    %2686 = vmatpush2.msra.mxu0 0.0
    %2687 = vmatprep.subr.mxu0 0.0
    %2688 = vmatpush2.msra.mxu0 0.0
    %2689 = vmatprep.subr.mxu0 0.0
    %2690 = vmatpush2.msra.mxu0 0.0
    %2691 = vmatprep.subr.mxu0 0.0
    %2692 = vmatpush2.msra.mxu0 0.0
    %2693 = vmatprep.subr.mxu0 0.0
    %2694 = vmatpush2.msra.mxu0 0.0
    %2695 = vmatprep.subr.mxu0 0.0
    %2696 = vmatpush2.msra.mxu0 0.0
    %2697 = vmatprep.subr.mxu0 0.0
    %2698 = vmatpush2.msra.mxu0 0.0
    %2699 = vmatprep.mubr.f32.mxu0 0.0
    %2700 = vmatmul.mubr.f32.gmra.mxu0 %v2633
    %v2701 = vpop.f32.mrf.mxu0
    %v2702 = vadd.f32 0.0, %v2701
    %v2703 = vpop.f32.mrf.mxu0
    %2704 = vdwg.mxu0
    %v2705 = vadd.f32 %v2629, %v2702
    %v2706 = vmax.f32 %v2705, 0.0
    %2707 = vmatprep.subr.mxu0 0.0
    %2708 = vmatpush1.msra.mxu0 0.0
    %2709 = vmatprep.subr.mxu0 0.0
    %2710 = vmatpush1.msra.mxu0 0.0
    %2711 = vmatprep.subr.mxu0 0.0
    %2712 = vmatpush1.msra.mxu0 0.0
    %2713 = vmatprep.subr.mxu0 0.0
    %2714 = vmatpush1.msra.mxu0 0.0
    %2715 = vmatprep.subr.mxu0 0.0
    %2716 = vmatpush1.msra.mxu0 0.0
    %2717 = vmatprep.subr.mxu0 0.0
    %2718 = vmatpush1.msra.mxu0 0.0
    %2719 = vmatprep.subr.mxu0 0.0
    %2720 = vmatpush1.msra.mxu0 0.0
    %2721 = vmatprep.subr.mxu0 0.0
    %2722 = vmatpush1.msra.mxu0 0.0
    %2723 = vmatprep.subr.mxu0 0.0
    %2724 = vmatpush1.msra.mxu0 %v645
    %2725 = vmatprep.subr.mxu0 0.0
    %2726 = vmatpush1.msra.mxu0 %v644
    %2727 = vmatprep.subr.mxu0 0.0
    %2728 = vmatpush1.msra.mxu0 %v643
    %2729 = vmatprep.subr.mxu0 0.0
    %2730 = vmatpush1.msra.mxu0 %v642
    %2731 = vmatprep.subr.mxu0 0.0
    %2732 = vmatpush1.msra.mxu0 %v641
    %2733 = vmatprep.subr.mxu0 0.0
    %2734 = vmatpush1.msra.mxu0 %v640
    %2735 = vmatprep.subr.mxu0 0.0
    %2736 = vmatpush1.msra.mxu0 %v639
    %2737 = vmatprep.subr.mxu0 0.0
    %2738 = vmatpush1.msra.mxu0 %v638
    %2739 = vmatprep.subr.mxu0 0.0
    %2740 = vmatpush2.msra.mxu0 0.0
    %2741 = vmatprep.subr.mxu0 0.0
    %2742 = vmatpush2.msra.mxu0 0.0
    %2743 = vmatprep.subr.mxu0 0.0
    %2744 = vmatpush2.msra.mxu0 0.0
    %2745 = vmatprep.subr.mxu0 0.0
    %2746 = vmatpush2.msra.mxu0 0.0
    %2747 = vmatprep.subr.mxu0 0.0
    %2748 = vmatpush2.msra.mxu0 0.0
    %2749 = vmatprep.subr.mxu0 0.0
    %2750 = vmatpush2.msra.mxu0 0.0
    %2751 = vmatprep.subr.mxu0 0.0
    %2752 = vmatpush2.msra.mxu0 0.0
    %2753 = vmatprep.subr.mxu0 0.0
    %2754 = vmatpush2.msra.mxu0 0.0
    %2755 = vmatprep.subr.mxu0 0.0
    %2756 = vmatpush2.msra.mxu0 0.0
    %2757 = vmatprep.subr.mxu0 0.0
    %2758 = vmatpush2.msra.mxu0 0.0
    %2759 = vmatprep.subr.mxu0 0.0
    %2760 = vmatpush2.msra.mxu0 0.0
    %2761 = vmatprep.subr.mxu0 0.0
    %2762 = vmatpush2.msra.mxu0 0.0
    %2763 = vmatprep.subr.mxu0 0.0
    %2764 = vmatpush2.msra.mxu0 0.0
    %2765 = vmatprep.subr.mxu0 0.0
    %2766 = vmatpush2.msra.mxu0 0.0
    %2767 = vmatprep.subr.mxu0 0.0
    %2768 = vmatpush2.msra.mxu0 0.0
    %2769 = vmatprep.subr.mxu0 0.0
    %2770 = vmatpush2.msra.mxu0 0.0
    %2771 = vmatprep.mubr.f32.mxu0 0.0
    %2772 = vmatmul.mubr.f32.gmra.mxu0 %v2633
    %v2773 = vpop.f32.mrf.mxu0
    %v2774 = vadd.f32 %v652, %v2773
    %v2775 = vpop.f32.mrf.mxu0
    %2776 = vdwg.mxu0
    %v2778 = vsel %vm245, %v2558, 0
    %2780 = vmatprep.subr.mxu0 0.0
    %2781 = vmatpush1.msra.mxu0 0.0
    %2782 = vmatprep.subr.mxu0 0.0
    %2783 = vmatpush1.msra.mxu0 0.0
    %2784 = vmatprep.subr.mxu0 0.0
    %2785 = vmatpush1.msra.mxu0 0.0
    %2786 = vmatprep.subr.mxu0 0.0
    %2787 = vmatpush1.msra.mxu0 0.0
    %2788 = vmatprep.subr.mxu0 0.0
    %2789 = vmatpush1.msra.mxu0 0.0
    %2790 = vmatprep.subr.mxu0 0.0
    %2791 = vmatpush1.msra.mxu0 0.0
    %2792 = vmatprep.subr.mxu0 0.0
    %2793 = vmatpush1.msra.mxu0 0.0
    %2794 = vmatprep.subr.mxu0 0.0
    %2795 = vmatpush1.msra.mxu0 0.0
    %2796 = vmatprep.subr.mxu0 0.0
    %2797 = vmatpush1.msra.mxu0 %v1023
    %2798 = vmatprep.subr.mxu0 0.0
    %2799 = vmatpush1.msra.mxu0 %v1022
    %2800 = vmatprep.subr.mxu0 0.0
    %2801 = vmatpush1.msra.mxu0 %v1021
    %2802 = vmatprep.subr.mxu0 0.0
    %2803 = vmatpush1.msra.mxu0 %v1020
    %2804 = vmatprep.subr.mxu0 0.0
    %2805 = vmatpush1.msra.mxu0 %v1019
    %2806 = vmatprep.subr.mxu0 0.0
    %2807 = vmatpush1.msra.mxu0 %v1018
    %2808 = vmatprep.subr.mxu0 0.0
    %2809 = vmatpush1.msra.mxu0 %v1017
    %2810 = vmatprep.subr.mxu0 0.0
    %2811 = vmatpush1.msra.mxu0 %v1016
    %2812 = vmatprep.subr.mxu0 0.0
    %2813 = vmatpush2.msra.mxu0 0.0
    %2814 = vmatprep.subr.mxu0 0.0
    %2815 = vmatpush2.msra.mxu0 0.0
    %2816 = vmatprep.subr.mxu0 0.0
    %2817 = vmatpush2.msra.mxu0 0.0
    %2818 = vmatprep.subr.mxu0 0.0
    %2819 = vmatpush2.msra.mxu0 0.0
    %2820 = vmatprep.subr.mxu0 0.0
    %2821 = vmatpush2.msra.mxu0 0.0
    %2822 = vmatprep.subr.mxu0 0.0
    %2823 = vmatpush2.msra.mxu0 0.0
    %2824 = vmatprep.subr.mxu0 0.0
    %2825 = vmatpush2.msra.mxu0 0.0
    %2826 = vmatprep.subr.mxu0 0.0
    %2827 = vmatpush2.msra.mxu0 0.0
    %2828 = vmatprep.subr.mxu0 0.0
    %2829 = vmatpush2.msra.mxu0 0.0
    %2830 = vmatprep.subr.mxu0 0.0
    %2831 = vmatpush2.msra.mxu0 0.0
    %2832 = vmatprep.subr.mxu0 0.0
    %2833 = vmatpush2.msra.mxu0 0.0
    %2834 = vmatprep.subr.mxu0 0.0
    %2835 = vmatpush2.msra.mxu0 0.0
    %2836 = vmatprep.subr.mxu0 0.0
    %2837 = vmatpush2.msra.mxu0 0.0
    %2838 = vmatprep.subr.mxu0 0.0
    %2839 = vmatpush2.msra.mxu0 0.0
    %2840 = vmatprep.subr.mxu0 0.0
    %2841 = vmatpush2.msra.mxu0 0.0
    %2842 = vmatprep.subr.mxu0 0.0
    %2843 = vmatpush2.msra.mxu0 0.0
    %2844 = vmatprep.mubr.f32.mxu0 0.0
    %2845 = vmatmul.mubr.f32.gmra.mxu0 %v2778
    %v2846 = vpop.f32.mrf.mxu0
    %v2847 = vadd.f32 0.0, %v2846
    %v2848 = vpop.f32.mrf.mxu0
    %2849 = vdwg.mxu0
    %v2850 = vadd.f32 %v2774, %v2847
    %v2851 = vmax.f32 %v2850, 0.0
    %v2853 = vsel %vm245, %v2706, 0
    %2855 = vmatprep.subr.mxu0 0.0
    %2856 = vmatpush1.msra.mxu0 0.0
    %2857 = vmatprep.subr.mxu0 0.0
    %2858 = vmatpush1.msra.mxu0 0.0
    %2859 = vmatprep.subr.mxu0 0.0
    %2860 = vmatpush1.msra.mxu0 0.0
    %2861 = vmatprep.subr.mxu0 0.0
    %2862 = vmatpush1.msra.mxu0 0.0
    %2863 = vmatprep.subr.mxu0 0.0
    %2864 = vmatpush1.msra.mxu0 0.0
    %2865 = vmatprep.subr.mxu0 0.0
    %2866 = vmatpush1.msra.mxu0 0.0
    %2867 = vmatprep.subr.mxu0 0.0
    %2868 = vmatpush1.msra.mxu0 0.0
    %2869 = vmatprep.subr.mxu0 0.0
    %2870 = vmatpush1.msra.mxu0 0.0
    %2871 = vmatprep.subr.mxu0 0.0
    %2872 = vmatpush1.msra.mxu0 %v645
    %2873 = vmatprep.subr.mxu0 0.0
    %2874 = vmatpush1.msra.mxu0 %v644
    %2875 = vmatprep.subr.mxu0 0.0
    %2876 = vmatpush1.msra.mxu0 %v643
    %2877 = vmatprep.subr.mxu0 0.0
    %2878 = vmatpush1.msra.mxu0 %v642
    %2879 = vmatprep.subr.mxu0 0.0
    %2880 = vmatpush1.msra.mxu0 %v641
    %2881 = vmatprep.subr.mxu0 0.0
    %2882 = vmatpush1.msra.mxu0 %v640
    %2883 = vmatprep.subr.mxu0 0.0
    %2884 = vmatpush1.msra.mxu0 %v639
    %2885 = vmatprep.subr.mxu0 0.0
    %2886 = vmatpush1.msra.mxu0 %v638
    %2887 = vmatprep.subr.mxu0 0.0
    %2888 = vmatpush2.msra.mxu0 0.0
    %2889 = vmatprep.subr.mxu0 0.0
    %2890 = vmatpush2.msra.mxu0 0.0
    %2891 = vmatprep.subr.mxu0 0.0
    %2892 = vmatpush2.msra.mxu0 0.0
    %2893 = vmatprep.subr.mxu0 0.0
    %2894 = vmatpush2.msra.mxu0 0.0
    %2895 = vmatprep.subr.mxu0 0.0
    %2896 = vmatpush2.msra.mxu0 0.0
    %2897 = vmatprep.subr.mxu0 0.0
    %2898 = vmatpush2.msra.mxu0 0.0
    %2899 = vmatprep.subr.mxu0 0.0
    %2900 = vmatpush2.msra.mxu0 0.0
    %2901 = vmatprep.subr.mxu0 0.0
    %2902 = vmatpush2.msra.mxu0 0.0
    %2903 = vmatprep.subr.mxu0 0.0
    %2904 = vmatpush2.msra.mxu0 0.0
    %2905 = vmatprep.subr.mxu0 0.0
    %2906 = vmatpush2.msra.mxu0 0.0
    %2907 = vmatprep.subr.mxu0 0.0
    %2908 = vmatpush2.msra.mxu0 0.0
    %2909 = vmatprep.subr.mxu0 0.0
    %2910 = vmatpush2.msra.mxu0 0.0
    %2911 = vmatprep.subr.mxu0 0.0
    %2912 = vmatpush2.msra.mxu0 0.0
    %2913 = vmatprep.subr.mxu0 0.0
    %2914 = vmatpush2.msra.mxu0 0.0
    %2915 = vmatprep.subr.mxu0 0.0
    %2916 = vmatpush2.msra.mxu0 0.0
    %2917 = vmatprep.subr.mxu0 0.0
    %2918 = vmatpush2.msra.mxu0 0.0
    %2919 = vmatprep.mubr.f32.mxu0 0.0
    %2920 = vmatmul.mubr.f32.gmra.mxu0 %v2853
    %v2921 = vpop.f32.mrf.mxu0
    %v2922 = vadd.f32 %v652, %v2921
    %v2923 = vpop.f32.mrf.mxu0
    %2924 = vdwg.mxu0
    %v2926 = vsel %vm245, %v2851, 0
    %2928 = vmatprep.subr.mxu0 0.0
    %2929 = vmatpush1.msra.mxu0 0.0
    %2930 = vmatprep.subr.mxu0 0.0
    %2931 = vmatpush1.msra.mxu0 0.0
    %2932 = vmatprep.subr.mxu0 0.0
    %2933 = vmatpush1.msra.mxu0 0.0
    %2934 = vmatprep.subr.mxu0 0.0
    %2935 = vmatpush1.msra.mxu0 0.0
    %2936 = vmatprep.subr.mxu0 0.0
    %2937 = vmatpush1.msra.mxu0 0.0
    %2938 = vmatprep.subr.mxu0 0.0
    %2939 = vmatpush1.msra.mxu0 0.0
    %2940 = vmatprep.subr.mxu0 0.0
    %2941 = vmatpush1.msra.mxu0 0.0
    %2942 = vmatprep.subr.mxu0 0.0
    %2943 = vmatpush1.msra.mxu0 0.0
    %2944 = vmatprep.subr.mxu0 0.0
    %2945 = vmatpush1.msra.mxu0 %v1023
    %2946 = vmatprep.subr.mxu0 0.0
    %2947 = vmatpush1.msra.mxu0 %v1022
    %2948 = vmatprep.subr.mxu0 0.0
    %2949 = vmatpush1.msra.mxu0 %v1021
    %2950 = vmatprep.subr.mxu0 0.0
    %2951 = vmatpush1.msra.mxu0 %v1020
    %2952 = vmatprep.subr.mxu0 0.0
    %2953 = vmatpush1.msra.mxu0 %v1019
    %2954 = vmatprep.subr.mxu0 0.0
    %2955 = vmatpush1.msra.mxu0 %v1018
    %2956 = vmatprep.subr.mxu0 0.0
    %2957 = vmatpush1.msra.mxu0 %v1017
    %2958 = vmatprep.subr.mxu0 0.0
    %2959 = vmatpush1.msra.mxu0 %v1016
    %2960 = vmatprep.subr.mxu0 0.0
    %2961 = vmatpush2.msra.mxu0 0.0
    %2962 = vmatprep.subr.mxu0 0.0
    %2963 = vmatpush2.msra.mxu0 0.0
    %2964 = vmatprep.subr.mxu0 0.0
    %2965 = vmatpush2.msra.mxu0 0.0
    %2966 = vmatprep.subr.mxu0 0.0
    %2967 = vmatpush2.msra.mxu0 0.0
    %2968 = vmatprep.subr.mxu0 0.0
    %2969 = vmatpush2.msra.mxu0 0.0
    %2970 = vmatprep.subr.mxu0 0.0
    %2971 = vmatpush2.msra.mxu0 0.0
    %2972 = vmatprep.subr.mxu0 0.0
    %2973 = vmatpush2.msra.mxu0 0.0
    %2974 = vmatprep.subr.mxu0 0.0
    %2975 = vmatpush2.msra.mxu0 0.0
    %2976 = vmatprep.subr.mxu0 0.0
    %2977 = vmatpush2.msra.mxu0 0.0
    %2978 = vmatprep.subr.mxu0 0.0
    %2979 = vmatpush2.msra.mxu0 0.0
    %2980 = vmatprep.subr.mxu0 0.0
    %2981 = vmatpush2.msra.mxu0 0.0
    %2982 = vmatprep.subr.mxu0 0.0
    %2983 = vmatpush2.msra.mxu0 0.0
    %2984 = vmatprep.subr.mxu0 0.0
    %2985 = vmatpush2.msra.mxu0 0.0
    %2986 = vmatprep.subr.mxu0 0.0
    %2987 = vmatpush2.msra.mxu0 0.0
    %2988 = vmatprep.subr.mxu0 0.0
    %2989 = vmatpush2.msra.mxu0 0.0
    %2990 = vmatprep.subr.mxu0 0.0
    %2991 = vmatpush2.msra.mxu0 0.0
    %2992 = vmatprep.mubr.f32.mxu0 0.0
    %2993 = vmatmul.mubr.f32.gmra.mxu0 %v2926
    %v2994 = vpop.f32.mrf.mxu0
    %v2995 = vadd.f32 0.0, %v2994
    %v2996 = vpop.f32.mrf.mxu0
    %2997 = vdwg.mxu0
    %v2998 = vadd.f32 %v2922, %v2995
    %v2999 = vmax.f32 %v2998, 0.0
    %v3000 = vld [vmem:[%s5] sm:$0x1]
    %v3002 = vlaneseq
    %v3003 = vshrl.u32 %v3002, 7
    %v3004 = vsub.s32 0, %v3003
    %v3005 = vrot.slane %v3000, %v3004
    %v3007 = vmul.f32 %v2999, %v3005
    %vm3008 = vcmask 517120
    %v3009 = vsel %vm3008, %v3007, 0.0
    %3010 = vadd.xlane.f32.xlu0 %v3009
    %v3011 = vpop.xlane.xlu0 %3010
    %v3012 = vld [vmem:[#allocation2] sm:$0x1]
    %v3014 = vlaneseq
    %v3015 = vshrl.u32 %v3014, 7
    %v3016 = vsub.s32 0, %v3015
    %v3017 = vrot.slane %v3012, %v3016
    %v3019 = vadd.f32 %v3011, %v3017
    %vm3020 = vcmask 1024
    %3021 = vst.msk [vmem:[%s7] sm:$0x3] %vm3020, %v3019
    // Predicated region
    $region38: #{rnn_forward.1} parent=1 // pred_check
      _
    $region39: #{rnn_forward.1} parent=1 // pred_check_branch
      %3023 = sbr.rel (0) target = $region41
    $region40: #{rnn_forward.1} parent=1 // pred_region
      _
    $region41: #{rnn_forward.1} parent=1 // pred_fallthru
      _
    // Predicated region
    $region42: #{rnn_forward.1} parent=1 // pred_check
      _
    $region43: #{rnn_forward.1} parent=1 // pred_check_branch
      %3025 = sbr.rel (0) target = $region45
    $region44: #{rnn_forward.1} parent=1 // pred_region
      _
    $region45: #{rnn_forward.1} parent=1 // pred_fallthru
      _
    %3026 = vsyncpa [#allocation4], 1
    %3027 = vsyncpa [#allocation6], 1

</llo_original>
